<compile_context>
chip_gen: v7x
topology: tpu7x:2x2x1
jax: 0.10.0
libtpu: 0.0.40
codegen_flags: <defaults>
</compile_context>

<pallas_src>
import jax
import jax.numpy as jnp
import numpy as np
from jax.experimental import pallas as pl
from jax.experimental.pallas import tpu as pltpu

# ----------------------------- model dims -----------------------------------
B = 2            # batch
N_NODES = 5      # graph "node" axis (reduced by mean)
G_DIM = 32       # graph embedding dim
T_X = 8          # question length
T_Y = 8          # program length
V_IN = 20        # input vocab
V_OUT = 16       # output vocab
E_DIM = 32       # token embedding dim
H_DIM = 32       # GRU hidden dim
E_IN = E_DIM + G_DIM   # encoder GRU input dim
LANE = 128             # lane-dense padded output width


# --------------------------- reference GRU math ------------------------------
def _gru_step(x_t, h, wih, whh, bih, bhh):
    """PyTorch-convention GRU cell.  x_t:(B,F) h:(B,H) -> (B,H)."""
    H = h.shape[-1]
    gx = jnp.dot(x_t, wih, preferred_element_type=jnp.float32) + bih
    gh = jnp.dot(h, whh, preferred_element_type=jnp.float32) + bhh
    r = jax.nn.sigmoid(gx[:, :H] + gh[:, :H])
    z = jax.nn.sigmoid(gx[:, H:2 * H] + gh[:, H:2 * H])
    n = jnp.tanh(gx[:, 2 * H:] + r * gh[:, 2 * H:])
    return (1.0 - z) * n + z * h


# ------------------------------ fused kernel ---------------------------------
def _fused_seq2seq_kernel(g_ref, xy_ref, w_ref, b_ref, wo_ref, out_ref):
    f32 = jnp.float32
    H, H2, H3 = H_DIM, 2 * H_DIM, 3 * H_DIM

    # ---- graph embedding: mean over the node axis --------------------------
    g_embd = jnp.mean(g_ref[...], axis=1)                        # (B, G)

    # ---- unpack packed weight / bias slabs (static slices, once) -----------
    w = w_ref[...]                                               # (160, 3H)
    exw = w[0:E_DIM, :]                                          # enc wih (x part)
    egw = w[E_DIM:E_IN, :]                                       # enc wih (g part)
    ewhh = w[E_IN:E_IN + H, :]                                   # enc whh
    dwih = w[E_IN + H:E_IN + H + E_DIM, :]                       # dec wih
    dwhh = w[E_IN + H + E_DIM:E_IN + H + E_DIM + H, :]           # dec whh

    b = b_ref[...]                                               # (4, 3H)
    ebih, ebhh = b[0:1, :], b[1:2, :]
    dbih, dbhh = b[2:3, :], b[3:4, :]

    xy = xy_ref[...]                                             # (Tx*B + Ty*B, E)
    xf = xy[:T_X * B, :]
    yf = xy[T_X * B:, :]

    # ---- hoisted input-side pre-activations (batched over time) ------------
    # r/z hidden-side biases are additive and fold into the hoisted term;
    # the n-gate hidden bias must stay inside r*(gh_n + bhh_n).
    zeroH = jnp.zeros((1, H), f32)
    ebhh_rz = jnp.concatenate([ebhh[:, :H2], zeroH], axis=1)     # (1, 3H)
    dbhh_rz = jnp.concatenate([dbhh[:, :H2], zeroH], axis=1)
    ebhh_n = ebhh[:, H2:]                                        # (1, H)
    dbhh_n = dbhh[:, H2:]

    gg = jnp.dot(g_embd, egw, preferred_element_type=f32) + ebih + ebhh_rz  # (B, 3H)
    ga_e = (jnp.dot(xf, exw, preferred_element_type=f32)
            + jnp.concatenate([gg] * T_X, axis=0))               # (Tx*B, 3H)
    ga_d = (jnp.dot(yf, dwih, preferred_element_type=f32)
            + dbih + dbhh_rz)                                    # (Ty*B, 3H)

    # ---- encoder GRU recurrence (unrolled; ONE fused matmul per step) ------
    h = jnp.zeros((B, H), f32)
    enc_list = []
    for t in range(T_X):
        lo = t * B
        gh = jnp.dot(h, ewhh, preferred_element_type=f32)        # (B, 3H)
        pre = ga_e[lo:lo + B, :]
        rz = jax.nn.sigmoid(pre[:, :H2] + gh[:, :H2])            # (B, 2H)
        r, z = rz[:, :H], rz[:, H:]
        n = jnp.tanh(pre[:, H2:] + r * (gh[:, H2:] + ebhh_n))
        h = (1.0 - z) * n + z * h
        enc_list.append(h)
    enc_flat = jnp.concatenate(enc_list, axis=0)                 # (Tx*B, H), row = t*B+b

    # ---- decoder GRU recurrence (init hidden = final encoder hidden) -------
    dec_list = []
    for t in range(T_Y):
        lo = t * B
        gh = jnp.dot(h, dwhh, preferred_element_type=f32)        # (B, 3H)
        pre = ga_d[lo:lo + B, :]
        rz = jax.nn.sigmoid(pre[:, :H2] + gh[:, :H2])
        r, z = rz[:, :H], rz[:, H:]
        n = jnp.tanh(pre[:, H2:] + r * (gh[:, H2:] + dbhh_n))
        h = (1.0 - z) * n + z * h
        dec_list.append(h)
    dec_flat = jnp.concatenate(dec_list, axis=0)                 # (Ty*B, H), row = t*B+b

    # ---- batched attention: one matmul + block-diagonal (same-batch) mask --
    scores = jax.lax.dot_general(dec_flat, enc_flat, (((1,), (1,)), ((), ())),
                                 preferred_element_type=f32)     # (Ty*B, Tx*B)
    row_b = jax.lax.broadcasted_iota(jnp.int32, scores.shape, 0) % B
    col_b = jax.lax.broadcasted_iota(jnp.int32, scores.shape, 1) % B
    scores = jnp.where(row_b == col_b, scores, -1e30)
    m = jnp.max(scores, axis=-1, keepdims=True)
    e = jnp.exp(scores - m)
    attn = e / jnp.sum(e, axis=-1, keepdims=True)                # cross-batch entries -> 0
    ctx = jnp.dot(attn, enc_flat, preferred_element_type=f32)    # (Ty*B, H)

    # ---- single lane-dense output projection + log-softmax, one store ------
    wo = wo_ref[...]                                             # (2H+1, 128)
    hd_ctx = jnp.concatenate([dec_flat, ctx], axis=1)            # (Ty*B, 2H)
    logits = (jnp.dot(hd_ctx, wo[:H2, :], preferred_element_type=f32)
              + wo[H2:H2 + 1, :])                                # (Ty*B, 128); pad lanes ~ -1e9
    lmax = jnp.max(logits, axis=-1, keepdims=True)
    shifted = logits - lmax
    logz = jnp.log(jnp.sum(jnp.exp(shifted), axis=-1, keepdims=True))
    out_ref[...] = shifted - logz


def _fused_seq2seq_call(g_data, xy_flat, w_gates, b_gates, wo):
    vmem = pl.BlockSpec(memory_space=pltpu.MemorySpace.VMEM)
    return pl.pallas_call(
        _fused_seq2seq_kernel,
        out_shape=jax.ShapeDtypeStruct((T_Y * B, LANE), jnp.float32),
        in_specs=[vmem, vmem, vmem, vmem, vmem],
        out_specs=vmem,
    )(g_data, xy_flat, w_gates, b_gates, wo)


# ------------------------------ full forward ---------------------------------
def seq2seq_gnn_forward(x, y, g_data, params):
    """Mirrors Seq2seqGNN.forward for the pre-trained-embedding flow.

    x: (B, Tx) int32, y: (B, Ty) int32, g_data: (B, N, G) float32
    returns decoder log-prob outputs (B, Ty, V_OUT).
    """
    # TODO(synk): end-to-end GNN (GraphMatcher/GIN) branch not realisable
    # without its submodule definitions; pre-trained g_embd flow implemented.
    # TODO(synk): `input_lengths` packing/masking dropped (fixed T_X here).
    # Embedding-table gathers stay as XLA ops (layout plumbing only); all
    # dense compute is fused into one Pallas kernel.
    x_emb = jnp.take(params["emb_x"], x, axis=0)                 # (B, Tx, E)
    y_emb = jnp.take(params["emb_y"], y, axis=0)                 # (B, Ty, E)
    x_flat = jnp.transpose(x_emb, (1, 0, 2)).reshape(T_X * B, E_DIM)
    y_flat = jnp.transpose(y_emb, (1, 0, 2)).reshape(T_Y * B, E_DIM)
    xy_flat = jnp.concatenate([x_flat, y_flat], axis=0)          # (Tx*B+Ty*B, E)

    # Pack the 11 dense parameter arrays into 3 refs (fewer DMA descriptors).
    w_gates = jnp.concatenate(
        [params["enc_wih"], params["enc_whh"],
         params["dec_wih"], params["dec_whh"]], axis=0)          # (160, 3H)
    b_gates = jnp.concatenate(
        [params["enc_bih"], params["enc_bhh"],
         params["dec_bih"], params["dec_bhh"]], axis=0)          # (4, 3H)
    wout_pad = jnp.zeros((2 * H_DIM, LANE), jnp.float32)
    wout_pad = wout_pad.at[:, :V_OUT].set(params["dec_wout"])
    bout_pad = jnp.full((1, LANE), -1e9, jnp.float32)
    bout_pad = bout_pad.at[:, :V_OUT].set(params["dec_bout"])
    wo = jnp.concatenate([wout_pad, bout_pad], axis=0)           # (2H+1, 128)

    out2d = _fused_seq2seq_call(g_data, xy_flat, w_gates, b_gates, wo)
    # rows are time-major (t*B + b); slice off lane padding and reorder.
    out = out2d[:, :V_OUT].reshape(T_Y, B, V_OUT)
    return jnp.transpose(out, (1, 0, 2))                         # (B, Ty, V)


# ------------------------------ reference ------------------------------------
def reference_forward(x, y, g_data, params):
    g_embd = jnp.mean(g_data, axis=1)
    x_emb = jnp.take(params["emb_x"], x, axis=0)
    enc_in = jnp.concatenate(
        [x_emb, jnp.broadcast_to(g_embd[:, None, :], (B, T_X, G_DIM))], axis=-1)
    enc_in = jnp.transpose(enc_in, (1, 0, 2))

    def enc_step(h, x_t):
        h2 = _gru_step(x_t, h, params["enc_wih"], params["enc_whh"],
                       params["enc_bih"], params["enc_bhh"])
        return h2, h2

    h_last, enc_out = jax.lax.scan(enc_step, jnp.zeros((B, H_DIM)), enc_in)

    y_emb = jnp.transpose(jnp.take(params["emb_y"], y, axis=0), (1, 0, 2))

    def dec_step(h, y_t):
        h2 = _gru_step(y_t, h, params["dec_wih"], params["dec_whh"],
                       params["dec_bih"], params["dec_bhh"])
        scores = jnp.sum(h2[None, :, :] * enc_out, axis=-1)
        attn = jax.nn.softmax(scores, axis=0)
        ctx = jnp.sum(attn[:, :, None] * enc_out, axis=0)
        logits = (h2 @ params["dec_wout"][:H_DIM]
                  + ctx @ params["dec_wout"][H_DIM:] + params["dec_bout"])
        return h2, jax.nn.log_softmax(logits, axis=-1)

    _, dec_out = jax.lax.scan(dec_step, h_last, y_emb)
    return jnp.transpose(dec_out, (1, 0, 2))


# ------------------------------ params / main --------------------------------
def init_params(key):
    ks = jax.random.split(key, 12)
    s = 0.1
    return {
        "emb_x": s * jax.random.normal(ks[0], (V_IN, E_DIM), jnp.float32),
        "emb_y": s * jax.random.normal(ks[1], (V_OUT, E_DIM), jnp.float32),
        "enc_wih": s * jax.random.normal(ks[2], (E_IN, 3 * H_DIM), jnp.float32),
        "enc_whh": s * jax.random.normal(ks[3], (H_DIM, 3 * H_DIM), jnp.float32),
        "enc_bih": s * jax.random.normal(ks[4], (1, 3 * H_DIM), jnp.float32),
        "enc_bhh": s * jax.random.normal(ks[5], (1, 3 * H_DIM), jnp.float32),
        "dec_wih": s * jax.random.normal(ks[6], (E_DIM, 3 * H_DIM), jnp.float32),
        "dec_whh": s * jax.random.normal(ks[7], (H_DIM, 3 * H_DIM), jnp.float32),
        "dec_bih": s * jax.random.normal(ks[8], (1, 3 * H_DIM), jnp.float32),
        "dec_bhh": s * jax.random.normal(ks[9], (1, 3 * H_DIM), jnp.float32),
        "dec_wout": s * jax.random.normal(ks[10], (2 * H_DIM, V_OUT), jnp.float32),
        "dec_bout": s * jax.random.normal(ks[11], (1, V_OUT), jnp.float32),
    }


if __name__ == "__main__":
    key = jax.random.PRNGKey(0)
    k_p, k_x, k_y, k_g = jax.random.split(key, 4)
    params = init_params(k_p)

    x = jax.random.randint(k_x, (B, T_X), 0, V_IN, dtype=jnp.int32)
    y = jax.random.randint(k_y, (B, T_Y), 0, V_OUT, dtype=jnp.int32)
    g_data = jax.random.normal(k_g, (B, N_NODES, G_DIM), jnp.float32)

    out = jax.jit(seq2seq_gnn_forward)(x, y, g_data, params)
    out = jax.block_until_ready(out)

    ref = jax.block_until_ready(reference_forward(x, y, g_data, params))
    np.testing.assert_allclose(np.asarray(out), np.asarray(ref),
                               rtol=1e-4, atol=1e-4)
    print("KERNEL_OK")
</pallas_src>

<mosaic_0001>
module attributes {stable_mosaic.version = 11 : i64} {
  func.func @_fused_seq2seq_kernel(%arg0: memref<2x5x32xf32, #tpu.memory_space<vmem>>, %arg1: memref<32x32xf32, #tpu.memory_space<vmem>>, %arg2: memref<160x96xf32, #tpu.memory_space<vmem>>, %arg3: memref<4x96xf32, #tpu.memory_space<vmem>>, %arg4: memref<65x128xf32, #tpu.memory_space<vmem>>, %arg5: memref<16x128xf32, #tpu.memory_space<vmem>>) attributes {dimension_semantics = [], scalar_prefetch = 0 : i64, scratch_operands = 0 : i64, tpu.core_type = #tpu.core_type<tc>} {
    %c0 = arith.constant 0 : index
    %c0_0 = arith.constant 0 : index
    %c0_1 = arith.constant 0 : index
    %0 = vector.load %arg0[%c0, %c0_0, %c0_1] : memref<2x5x32xf32, #tpu.memory_space<vmem>>, vector<2x5x32xf32>
    %cst = arith.constant dense<0.000000e+00> : vector<2x32xf32>
    %1 = vector.multi_reduction <add>, %0, %cst [1] : vector<2x5x32xf32> to vector<2x32xf32>
    %cst_2 = arith.constant 5.000000e+00 : f32
    %2 = vector.broadcast %cst_2 : f32 to vector<2x32xf32>
    %3 = arith.divf %1, %2 : vector<2x32xf32>
    %c0_3 = arith.constant 0 : index
    %c0_4 = arith.constant 0 : index
    %4 = vector.load %arg2[%c0_3, %c0_4] : memref<160x96xf32, #tpu.memory_space<vmem>>, vector<160x96xf32>
    %5 = vector.extract_strided_slice %4 {offsets = [0, 0], sizes = [32, 96], strides = [1, 1]} : vector<160x96xf32> to vector<32x96xf32>
    %6 = vector.extract_strided_slice %4 {offsets = [32, 0], sizes = [32, 96], strides = [1, 1]} : vector<160x96xf32> to vector<32x96xf32>
    %7 = vector.extract_strided_slice %4 {offsets = [64, 0], sizes = [32, 96], strides = [1, 1]} : vector<160x96xf32> to vector<32x96xf32>
    %8 = vector.extract_strided_slice %4 {offsets = [96, 0], sizes = [32, 96], strides = [1, 1]} : vector<160x96xf32> to vector<32x96xf32>
    %9 = vector.extract_strided_slice %4 {offsets = [128, 0], sizes = [32, 96], strides = [1, 1]} : vector<160x96xf32> to vector<32x96xf32>
    %c0_5 = arith.constant 0 : index
    %c0_6 = arith.constant 0 : index
    %10 = vector.load %arg3[%c0_5, %c0_6] : memref<4x96xf32, #tpu.memory_space<vmem>>, vector<4x96xf32>
    %11 = vector.extract_strided_slice %10 {offsets = [0, 0], sizes = [1, 96], strides = [1, 1]} : vector<4x96xf32> to vector<1x96xf32>
    %12 = vector.extract_strided_slice %10 {offsets = [1, 0], sizes = [1, 96], strides = [1, 1]} : vector<4x96xf32> to vector<1x96xf32>
    %13 = vector.extract_strided_slice %10 {offsets = [2, 0], sizes = [1, 96], strides = [1, 1]} : vector<4x96xf32> to vector<1x96xf32>
    %14 = vector.extract_strided_slice %10 {offsets = [3, 0], sizes = [1, 96], strides = [1, 1]} : vector<4x96xf32> to vector<1x96xf32>
    %c0_7 = arith.constant 0 : index
    %c0_8 = arith.constant 0 : index
    %15 = vector.load %arg1[%c0_7, %c0_8] : memref<32x32xf32, #tpu.memory_space<vmem>>, vector<32x32xf32>
    %16 = vector.extract_strided_slice %15 {offsets = [0, 0], sizes = [16, 32], strides = [1, 1]} : vector<32x32xf32> to vector<16x32xf32>
    %17 = vector.extract_strided_slice %15 {offsets = [16, 0], sizes = [16, 32], strides = [1, 1]} : vector<32x32xf32> to vector<16x32xf32>
    %cst_9 = arith.constant 0.000000e+00 : f32
    %18 = vector.broadcast %cst_9 : f32 to vector<1x32xf32>
    %19 = vector.extract_strided_slice %12 {offsets = [0, 0], sizes = [1, 64], strides = [1, 1]} : vector<1x96xf32> to vector<1x64xf32>
    %20 = tpu.concatenate %19, %18 in 1 : vector<1x64xf32>, vector<1x32xf32> -> vector<1x96xf32>
    %21 = vector.extract_strided_slice %14 {offsets = [0, 0], sizes = [1, 64], strides = [1, 1]} : vector<1x96xf32> to vector<1x64xf32>
    %22 = tpu.concatenate %21, %18 in 1 : vector<1x64xf32>, vector<1x32xf32> -> vector<1x96xf32>
    %23 = vector.extract_strided_slice %12 {offsets = [0, 64], sizes = [1, 32], strides = [1, 1]} : vector<1x96xf32> to vector<1x32xf32>
    %24 = vector.extract_strided_slice %14 {offsets = [0, 64], sizes = [1, 32], strides = [1, 1]} : vector<1x96xf32> to vector<1x32xf32>
    %cst_10 = arith.constant dense<0.000000e+00> : vector<2x96xf32>
    %25 = tpu.matmul %3, %6, %cst_10 {dimension_numbers = #tpu.dot_dimension_numbers<[1], [0], [0], [1], [0, 0, 1, 1], [], []>} : vector<2x32xf32>, vector<32x96xf32>, vector<2x96xf32> -> vector<2x96xf32>
    %26 = vector.broadcast %11 : vector<1x96xf32> to vector<2x96xf32>
    %27 = arith.addf %25, %26 : vector<2x96xf32>
    %28 = vector.broadcast %20 : vector<1x96xf32> to vector<2x96xf32>
    %29 = arith.addf %27, %28 : vector<2x96xf32>
    %cst_11 = arith.constant dense<0.000000e+00> : vector<16x96xf32>
    %30 = tpu.matmul %16, %5, %cst_11 {dimension_numbers = #tpu.dot_dimension_numbers<[1], [0], [0], [1], [0, 0, 1, 1], [], []>} : vector<16x32xf32>, vector<32x96xf32>, vector<16x96xf32> -> vector<16x96xf32>
    %31 = tpu.concatenate %29, %29, %29, %29, %29, %29, %29, %29 in 0 : vector<2x96xf32>, vector<2x96xf32>, vector<2x96xf32>, vector<2x96xf32>, vector<2x96xf32>, vector<2x96xf32>, vector<2x96xf32>, vector<2x96xf32> -> vector<16x96xf32>
    %32 = arith.addf %30, %31 : vector<16x96xf32>
    %cst_12 = arith.constant dense<0.000000e+00> : vector<16x96xf32>
    %33 = tpu.matmul %17, %8, %cst_12 {dimension_numbers = #tpu.dot_dimension_numbers<[1], [0], [0], [1], [0, 0, 1, 1], [], []>} : vector<16x32xf32>, vector<32x96xf32>, vector<16x96xf32> -> vector<16x96xf32>
    %34 = vector.broadcast %13 : vector<1x96xf32> to vector<16x96xf32>
    %35 = arith.addf %33, %34 : vector<16x96xf32>
    %36 = vector.broadcast %22 : vector<1x96xf32> to vector<16x96xf32>
    %37 = arith.addf %35, %36 : vector<16x96xf32>
    %cst_13 = arith.constant 0.000000e+00 : f32
    %38 = vector.broadcast %cst_13 : f32 to vector<2x32xf32>
    %cst_14 = arith.constant dense<0.000000e+00> : vector<2x96xf32>
    %39 = tpu.matmul %38, %7, %cst_14 {dimension_numbers = #tpu.dot_dimension_numbers<[1], [0], [0], [1], [0, 0, 1, 1], [], []>} : vector<2x32xf32>, vector<32x96xf32>, vector<2x96xf32> -> vector<2x96xf32>
    %40 = vector.extract_strided_slice %32 {offsets = [0, 0], sizes = [2, 96], strides = [1, 1]} : vector<16x96xf32> to vector<2x96xf32>
    %41 = vector.extract_strided_slice %40 {offsets = [0, 0], sizes = [2, 64], strides = [1, 1]} : vector<2x96xf32> to vector<2x64xf32>
    %42 = vector.extract_strided_slice %39 {offsets = [0, 0], sizes = [2, 64], strides = [1, 1]} : vector<2x96xf32> to vector<2x64xf32>
    %43 = arith.addf %41, %42 : vector<2x64xf32>
    %44 = arith.negf %43 : vector<2x64xf32>
    %45 = math.exp %44 : vector<2x64xf32>
    %cst_15 = arith.constant 1.000000e+00 : f32
    %46 = vector.broadcast %cst_15 : f32 to vector<2x64xf32>
    %47 = arith.addf %46, %45 : vector<2x64xf32>
    %48 = arith.divf %46, %47 : vector<2x64xf32>
    %49 = vector.extract_strided_slice %48 {offsets = [0, 0], sizes = [2, 32], strides = [1, 1]} : vector<2x64xf32> to vector<2x32xf32>
    %50 = vector.extract_strided_slice %48 {offsets = [0, 32], sizes = [2, 32], strides = [1, 1]} : vector<2x64xf32> to vector<2x32xf32>
    %51 = vector.extract_strided_slice %40 {offsets = [0, 64], sizes = [2, 32], strides = [1, 1]} : vector<2x96xf32> to vector<2x32xf32>
    %52 = vector.extract_strided_slice %39 {offsets = [0, 64], sizes = [2, 32], strides = [1, 1]} : vector<2x96xf32> to vector<2x32xf32>
    %53 = vector.broadcast %23 : vector<1x32xf32> to vector<2x32xf32>
    %54 = arith.addf %52, %53 : vector<2x32xf32>
    %55 = arith.mulf %49, %54 : vector<2x32xf32>
    %56 = arith.addf %51, %55 : vector<2x32xf32>
    %57 = math.tanh %56 : vector<2x32xf32>
    %cst_16 = arith.constant 1.000000e+00 : f32
    %58 = vector.broadcast %cst_16 : f32 to vector<2x32xf32>
    %59 = arith.subf %58, %50 : vector<2x32xf32>
    %60 = arith.mulf %59, %57 : vector<2x32xf32>
    %61 = arith.mulf %50, %38 : vector<2x32xf32>
    %62 = arith.addf %60, %61 : vector<2x32xf32>
    %cst_17 = arith.constant dense<0.000000e+00> : vector<2x96xf32>
    %63 = tpu.matmul %62, %7, %cst_17 {dimension_numbers = #tpu.dot_dimension_numbers<[1], [0], [0], [1], [0, 0, 1, 1], [], []>} : vector<2x32xf32>, vector<32x96xf32>, vector<2x96xf32> -> vector<2x96xf32>
    %64 = vector.extract_strided_slice %32 {offsets = [2, 0], sizes = [2, 96], strides = [1, 1]} : vector<16x96xf32> to vector<2x96xf32>
    %65 = vector.extract_strided_slice %64 {offsets = [0, 0], sizes = [2, 64], strides = [1, 1]} : vector<2x96xf32> to vector<2x64xf32>
    %66 = vector.extract_strided_slice %63 {offsets = [0, 0], sizes = [2, 64], strides = [1, 1]} : vector<2x96xf32> to vector<2x64xf32>
    %67 = arith.addf %65, %66 : vector<2x64xf32>
    %68 = arith.negf %67 : vector<2x64xf32>
    %69 = math.exp %68 : vector<2x64xf32>
    %cst_18 = arith.constant 1.000000e+00 : f32
    %70 = vector.broadcast %cst_18 : f32 to vector<2x64xf32>
    %71 = arith.addf %70, %69 : vector<2x64xf32>
    %72 = arith.divf %70, %71 : vector<2x64xf32>
    %73 = vector.extract_strided_slice %72 {offsets = [0, 0], sizes = [2, 32], strides = [1, 1]} : vector<2x64xf32> to vector<2x32xf32>
    %74 = vector.extract_strided_slice %72 {offsets = [0, 32], sizes = [2, 32], strides = [1, 1]} : vector<2x64xf32> to vector<2x32xf32>
    %75 = vector.extract_strided_slice %64 {offsets = [0, 64], sizes = [2, 32], strides = [1, 1]} : vector<2x96xf32> to vector<2x32xf32>
    %76 = vector.extract_strided_slice %63 {offsets = [0, 64], sizes = [2, 32], strides = [1, 1]} : vector<2x96xf32> to vector<2x32xf32>
    %77 = vector.broadcast %23 : vector<1x32xf32> to vector<2x32xf32>
    %78 = arith.addf %76, %77 : vector<2x32xf32>
    %79 = arith.mulf %73, %78 : vector<2x32xf32>
    %80 = arith.addf %75, %79 : vector<2x32xf32>
    %81 = math.tanh %80 : vector<2x32xf32>
    %cst_19 = arith.constant 1.000000e+00 : f32
    %82 = vector.broadcast %cst_19 : f32 to vector<2x32xf32>
    %83 = arith.subf %82, %74 : vector<2x32xf32>
    %84 = arith.mulf %83, %81 : vector<2x32xf32>
    %85 = arith.mulf %74, %62 : vector<2x32xf32>
    %86 = arith.addf %84, %85 : vector<2x32xf32>
    %cst_20 = arith.constant dense<0.000000e+00> : vector<2x96xf32>
    %87 = tpu.matmul %86, %7, %cst_20 {dimension_numbers = #tpu.dot_dimension_numbers<[1], [0], [0], [1], [0, 0, 1, 1], [], []>} : vector<2x32xf32>, vector<32x96xf32>, vector<2x96xf32> -> vector<2x96xf32>
    %88 = vector.extract_strided_slice %32 {offsets = [4, 0], sizes = [2, 96], strides = [1, 1]} : vector<16x96xf32> to vector<2x96xf32>
    %89 = vector.extract_strided_slice %88 {offsets = [0, 0], sizes = [2, 64], strides = [1, 1]} : vector<2x96xf32> to vector<2x64xf32>
    %90 = vector.extract_strided_slice %87 {offsets = [0, 0], sizes = [2, 64], strides = [1, 1]} : vector<2x96xf32> to vector<2x64xf32>
    %91 = arith.addf %89, %90 : vector<2x64xf32>
    %92 = arith.negf %91 : vector<2x64xf32>
    %93 = math.exp %92 : vector<2x64xf32>
    %cst_21 = arith.constant 1.000000e+00 : f32
    %94 = vector.broadcast %cst_21 : f32 to vector<2x64xf32>
    %95 = arith.addf %94, %93 : vector<2x64xf32>
    %96 = arith.divf %94, %95 : vector<2x64xf32>
    %97 = vector.extract_strided_slice %96 {offsets = [0, 0], sizes = [2, 32], strides = [1, 1]} : vector<2x64xf32> to vector<2x32xf32>
    %98 = vector.extract_strided_slice %96 {offsets = [0, 32], sizes = [2, 32], strides = [1, 1]} : vector<2x64xf32> to vector<2x32xf32>
    %99 = vector.extract_strided_slice %88 {offsets = [0, 64], sizes = [2, 32], strides = [1, 1]} : vector<2x96xf32> to vector<2x32xf32>
    %100 = vector.extract_strided_slice %87 {offsets = [0, 64], sizes = [2, 32], strides = [1, 1]} : vector<2x96xf32> to vector<2x32xf32>
    %101 = vector.broadcast %23 : vector<1x32xf32> to vector<2x32xf32>
    %102 = arith.addf %100, %101 : vector<2x32xf32>
    %103 = arith.mulf %97, %102 : vector<2x32xf32>
    %104 = arith.addf %99, %103 : vector<2x32xf32>
    %105 = math.tanh %104 : vector<2x32xf32>
    %cst_22 = arith.constant 1.000000e+00 : f32
    %106 = vector.broadcast %cst_22 : f32 to vector<2x32xf32>
    %107 = arith.subf %106, %98 : vector<2x32xf32>
    %108 = arith.mulf %107, %105 : vector<2x32xf32>
    %109 = arith.mulf %98, %86 : vector<2x32xf32>
    %110 = arith.addf %108, %109 : vector<2x32xf32>
    %cst_23 = arith.constant dense<0.000000e+00> : vector<2x96xf32>
    %111 = tpu.matmul %110, %7, %cst_23 {dimension_numbers = #tpu.dot_dimension_numbers<[1], [0], [0], [1], [0, 0, 1, 1], [], []>} : vector<2x32xf32>, vector<32x96xf32>, vector<2x96xf32> -> vector<2x96xf32>
    %112 = vector.extract_strided_slice %32 {offsets = [6, 0], sizes = [2, 96], strides = [1, 1]} : vector<16x96xf32> to vector<2x96xf32>
    %113 = vector.extract_strided_slice %112 {offsets = [0, 0], sizes = [2, 64], strides = [1, 1]} : vector<2x96xf32> to vector<2x64xf32>
    %114 = vector.extract_strided_slice %111 {offsets = [0, 0], sizes = [2, 64], strides = [1, 1]} : vector<2x96xf32> to vector<2x64xf32>
    %115 = arith.addf %113, %114 : vector<2x64xf32>
    %116 = arith.negf %115 : vector<2x64xf32>
    %117 = math.exp %116 : vector<2x64xf32>
    %cst_24 = arith.constant 1.000000e+00 : f32
    %118 = vector.broadcast %cst_24 : f32 to vector<2x64xf32>
    %119 = arith.addf %118, %117 : vector<2x64xf32>
    %120 = arith.divf %118, %119 : vector<2x64xf32>
    %121 = vector.extract_strided_slice %120 {offsets = [0, 0], sizes = [2, 32], strides = [1, 1]} : vector<2x64xf32> to vector<2x32xf32>
    %122 = vector.extract_strided_slice %120 {offsets = [0, 32], sizes = [2, 32], strides = [1, 1]} : vector<2x64xf32> to vector<2x32xf32>
    %123 = vector.extract_strided_slice %112 {offsets = [0, 64], sizes = [2, 32], strides = [1, 1]} : vector<2x96xf32> to vector<2x32xf32>
    %124 = vector.extract_strided_slice %111 {offsets = [0, 64], sizes = [2, 32], strides = [1, 1]} : vector<2x96xf32> to vector<2x32xf32>
    %125 = vector.broadcast %23 : vector<1x32xf32> to vector<2x32xf32>
    %126 = arith.addf %124, %125 : vector<2x32xf32>
    %127 = arith.mulf %121, %126 : vector<2x32xf32>
    %128 = arith.addf %123, %127 : vector<2x32xf32>
    %129 = math.tanh %128 : vector<2x32xf32>
    %cst_25 = arith.constant 1.000000e+00 : f32
    %130 = vector.broadcast %cst_25 : f32 to vector<2x32xf32>
    %131 = arith.subf %130, %122 : vector<2x32xf32>
    %132 = arith.mulf %131, %129 : vector<2x32xf32>
    %133 = arith.mulf %122, %110 : vector<2x32xf32>
    %134 = arith.addf %132, %133 : vector<2x32xf32>
    %cst_26 = arith.constant dense<0.000000e+00> : vector<2x96xf32>
    %135 = tpu.matmul %134, %7, %cst_26 {dimension_numbers = #tpu.dot_dimension_numbers<[1], [0], [0], [1], [0, 0, 1, 1], [], []>} : vector<2x32xf32>, vector<32x96xf32>, vector<2x96xf32> -> vector<2x96xf32>
    %136 = vector.extract_strided_slice %32 {offsets = [8, 0], sizes = [2, 96], strides = [1, 1]} : vector<16x96xf32> to vector<2x96xf32>
    %137 = vector.extract_strided_slice %136 {offsets = [0, 0], sizes = [2, 64], strides = [1, 1]} : vector<2x96xf32> to vector<2x64xf32>
    %138 = vector.extract_strided_slice %135 {offsets = [0, 0], sizes = [2, 64], strides = [1, 1]} : vector<2x96xf32> to vector<2x64xf32>
    %139 = arith.addf %137, %138 : vector<2x64xf32>
    %140 = arith.negf %139 : vector<2x64xf32>
    %141 = math.exp %140 : vector<2x64xf32>
    %cst_27 = arith.constant 1.000000e+00 : f32
    %142 = vector.broadcast %cst_27 : f32 to vector<2x64xf32>
    %143 = arith.addf %142, %141 : vector<2x64xf32>
    %144 = arith.divf %142, %143 : vector<2x64xf32>
    %145 = vector.extract_strided_slice %144 {offsets = [0, 0], sizes = [2, 32], strides = [1, 1]} : vector<2x64xf32> to vector<2x32xf32>
    %146 = vector.extract_strided_slice %144 {offsets = [0, 32], sizes = [2, 32], strides = [1, 1]} : vector<2x64xf32> to vector<2x32xf32>
    %147 = vector.extract_strided_slice %136 {offsets = [0, 64], sizes = [2, 32], strides = [1, 1]} : vector<2x96xf32> to vector<2x32xf32>
    %148 = vector.extract_strided_slice %135 {offsets = [0, 64], sizes = [2, 32], strides = [1, 1]} : vector<2x96xf32> to vector<2x32xf32>
    %149 = vector.broadcast %23 : vector<1x32xf32> to vector<2x32xf32>
    %150 = arith.addf %148, %149 : vector<2x32xf32>
    %151 = arith.mulf %145, %150 : vector<2x32xf32>
    %152 = arith.addf %147, %151 : vector<2x32xf32>
    %153 = math.tanh %152 : vector<2x32xf32>
    %cst_28 = arith.constant 1.000000e+00 : f32
    %154 = vector.broadcast %cst_28 : f32 to vector<2x32xf32>
    %155 = arith.subf %154, %146 : vector<2x32xf32>
    %156 = arith.mulf %155, %153 : vector<2x32xf32>
    %157 = arith.mulf %146, %134 : vector<2x32xf32>
    %158 = arith.addf %156, %157 : vector<2x32xf32>
    %cst_29 = arith.constant dense<0.000000e+00> : vector<2x96xf32>
    %159 = tpu.matmul %158, %7, %cst_29 {dimension_numbers = #tpu.dot_dimension_numbers<[1], [0], [0], [1], [0, 0, 1, 1], [], []>} : vector<2x32xf32>, vector<32x96xf32>, vector<2x96xf32> -> vector<2x96xf32>
    %160 = vector.extract_strided_slice %32 {offsets = [10, 0], sizes = [2, 96], strides = [1, 1]} : vector<16x96xf32> to vector<2x96xf32>
    %161 = vector.extract_strided_slice %160 {offsets = [0, 0], sizes = [2, 64], strides = [1, 1]} : vector<2x96xf32> to vector<2x64xf32>
    %162 = vector.extract_strided_slice %159 {offsets = [0, 0], sizes = [2, 64], strides = [1, 1]} : vector<2x96xf32> to vector<2x64xf32>
    %163 = arith.addf %161, %162 : vector<2x64xf32>
    %164 = arith.negf %163 : vector<2x64xf32>
    %165 = math.exp %164 : vector<2x64xf32>
    %cst_30 = arith.constant 1.000000e+00 : f32
    %166 = vector.broadcast %cst_30 : f32 to vector<2x64xf32>
    %167 = arith.addf %166, %165 : vector<2x64xf32>
    %168 = arith.divf %166, %167 : vector<2x64xf32>
    %169 = vector.extract_strided_slice %168 {offsets = [0, 0], sizes = [2, 32], strides = [1, 1]} : vector<2x64xf32> to vector<2x32xf32>
    %170 = vector.extract_strided_slice %168 {offsets = [0, 32], sizes = [2, 32], strides = [1, 1]} : vector<2x64xf32> to vector<2x32xf32>
    %171 = vector.extract_strided_slice %160 {offsets = [0, 64], sizes = [2, 32], strides = [1, 1]} : vector<2x96xf32> to vector<2x32xf32>
    %172 = vector.extract_strided_slice %159 {offsets = [0, 64], sizes = [2, 32], strides = [1, 1]} : vector<2x96xf32> to vector<2x32xf32>
    %173 = vector.broadcast %23 : vector<1x32xf32> to vector<2x32xf32>
    %174 = arith.addf %172, %173 : vector<2x32xf32>
    %175 = arith.mulf %169, %174 : vector<2x32xf32>
    %176 = arith.addf %171, %175 : vector<2x32xf32>
    %177 = math.tanh %176 : vector<2x32xf32>
    %cst_31 = arith.constant 1.000000e+00 : f32
    %178 = vector.broadcast %cst_31 : f32 to vector<2x32xf32>
    %179 = arith.subf %178, %170 : vector<2x32xf32>
    %180 = arith.mulf %179, %177 : vector<2x32xf32>
    %181 = arith.mulf %170, %158 : vector<2x32xf32>
    %182 = arith.addf %180, %181 : vector<2x32xf32>
    %cst_32 = arith.constant dense<0.000000e+00> : vector<2x96xf32>
    %183 = tpu.matmul %182, %7, %cst_32 {dimension_numbers = #tpu.dot_dimension_numbers<[1], [0], [0], [1], [0, 0, 1, 1], [], []>} : vector<2x32xf32>, vector<32x96xf32>, vector<2x96xf32> -> vector<2x96xf32>
    %184 = vector.extract_strided_slice %32 {offsets = [12, 0], sizes = [2, 96], strides = [1, 1]} : vector<16x96xf32> to vector<2x96xf32>
    %185 = vector.extract_strided_slice %184 {offsets = [0, 0], sizes = [2, 64], strides = [1, 1]} : vector<2x96xf32> to vector<2x64xf32>
    %186 = vector.extract_strided_slice %183 {offsets = [0, 0], sizes = [2, 64], strides = [1, 1]} : vector<2x96xf32> to vector<2x64xf32>
    %187 = arith.addf %185, %186 : vector<2x64xf32>
    %188 = arith.negf %187 : vector<2x64xf32>
    %189 = math.exp %188 : vector<2x64xf32>
    %cst_33 = arith.constant 1.000000e+00 : f32
    %190 = vector.broadcast %cst_33 : f32 to vector<2x64xf32>
    %191 = arith.addf %190, %189 : vector<2x64xf32>
    %192 = arith.divf %190, %191 : vector<2x64xf32>
    %193 = vector.extract_strided_slice %192 {offsets = [0, 0], sizes = [2, 32], strides = [1, 1]} : vector<2x64xf32> to vector<2x32xf32>
    %194 = vector.extract_strided_slice %192 {offsets = [0, 32], sizes = [2, 32], strides = [1, 1]} : vector<2x64xf32> to vector<2x32xf32>
    %195 = vector.extract_strided_slice %184 {offsets = [0, 64], sizes = [2, 32], strides = [1, 1]} : vector<2x96xf32> to vector<2x32xf32>
    %196 = vector.extract_strided_slice %183 {offsets = [0, 64], sizes = [2, 32], strides = [1, 1]} : vector<2x96xf32> to vector<2x32xf32>
    %197 = vector.broadcast %23 : vector<1x32xf32> to vector<2x32xf32>
    %198 = arith.addf %196, %197 : vector<2x32xf32>
    %199 = arith.mulf %193, %198 : vector<2x32xf32>
    %200 = arith.addf %195, %199 : vector<2x32xf32>
    %201 = math.tanh %200 : vector<2x32xf32>
    %cst_34 = arith.constant 1.000000e+00 : f32
    %202 = vector.broadcast %cst_34 : f32 to vector<2x32xf32>
    %203 = arith.subf %202, %194 : vector<2x32xf32>
    %204 = arith.mulf %203, %201 : vector<2x32xf32>
    %205 = arith.mulf %194, %182 : vector<2x32xf32>
    %206 = arith.addf %204, %205 : vector<2x32xf32>
    %cst_35 = arith.constant dense<0.000000e+00> : vector<2x96xf32>
    %207 = tpu.matmul %206, %7, %cst_35 {dimension_numbers = #tpu.dot_dimension_numbers<[1], [0], [0], [1], [0, 0, 1, 1], [], []>} : vector<2x32xf32>, vector<32x96xf32>, vector<2x96xf32> -> vector<2x96xf32>
    %208 = vector.extract_strided_slice %32 {offsets = [14, 0], sizes = [2, 96], strides = [1, 1]} : vector<16x96xf32> to vector<2x96xf32>
    %209 = vector.extract_strided_slice %208 {offsets = [0, 0], sizes = [2, 64], strides = [1, 1]} : vector<2x96xf32> to vector<2x64xf32>
    %210 = vector.extract_strided_slice %207 {offsets = [0, 0], sizes = [2, 64], strides = [1, 1]} : vector<2x96xf32> to vector<2x64xf32>
    %211 = arith.addf %209, %210 : vector<2x64xf32>
    %212 = arith.negf %211 : vector<2x64xf32>
    %213 = math.exp %212 : vector<2x64xf32>
    %cst_36 = arith.constant 1.000000e+00 : f32
    %214 = vector.broadcast %cst_36 : f32 to vector<2x64xf32>
    %215 = arith.addf %214, %213 : vector<2x64xf32>
    %216 = arith.divf %214, %215 : vector<2x64xf32>
    %217 = vector.extract_strided_slice %216 {offsets = [0, 0], sizes = [2, 32], strides = [1, 1]} : vector<2x64xf32> to vector<2x32xf32>
    %218 = vector.extract_strided_slice %216 {offsets = [0, 32], sizes = [2, 32], strides = [1, 1]} : vector<2x64xf32> to vector<2x32xf32>
    %219 = vector.extract_strided_slice %208 {offsets = [0, 64], sizes = [2, 32], strides = [1, 1]} : vector<2x96xf32> to vector<2x32xf32>
    %220 = vector.extract_strided_slice %207 {offsets = [0, 64], sizes = [2, 32], strides = [1, 1]} : vector<2x96xf32> to vector<2x32xf32>
    %221 = vector.broadcast %23 : vector<1x32xf32> to vector<2x32xf32>
    %222 = arith.addf %220, %221 : vector<2x32xf32>
    %223 = arith.mulf %217, %222 : vector<2x32xf32>
    %224 = arith.addf %219, %223 : vector<2x32xf32>
    %225 = math.tanh %224 : vector<2x32xf32>
    %cst_37 = arith.constant 1.000000e+00 : f32
    %226 = vector.broadcast %cst_37 : f32 to vector<2x32xf32>
    %227 = arith.subf %226, %218 : vector<2x32xf32>
    %228 = arith.mulf %227, %225 : vector<2x32xf32>
    %229 = arith.mulf %218, %206 : vector<2x32xf32>
    %230 = arith.addf %228, %229 : vector<2x32xf32>
    %231 = tpu.concatenate %62, %86, %110, %134, %158, %182, %206, %230 in 0 : vector<2x32xf32>, vector<2x32xf32>, vector<2x32xf32>, vector<2x32xf32>, vector<2x32xf32>, vector<2x32xf32>, vector<2x32xf32>, vector<2x32xf32> -> vector<16x32xf32>
    %cst_38 = arith.constant dense<0.000000e+00> : vector<2x96xf32>
    %232 = tpu.matmul %230, %9, %cst_38 {dimension_numbers = #tpu.dot_dimension_numbers<[1], [0], [0], [1], [0, 0, 1, 1], [], []>} : vector<2x32xf32>, vector<32x96xf32>, vector<2x96xf32> -> vector<2x96xf32>
    %233 = vector.extract_strided_slice %37 {offsets = [0, 0], sizes = [2, 96], strides = [1, 1]} : vector<16x96xf32> to vector<2x96xf32>
    %234 = vector.extract_strided_slice %233 {offsets = [0, 0], sizes = [2, 64], strides = [1, 1]} : vector<2x96xf32> to vector<2x64xf32>
    %235 = vector.extract_strided_slice %232 {offsets = [0, 0], sizes = [2, 64], strides = [1, 1]} : vector<2x96xf32> to vector<2x64xf32>
    %236 = arith.addf %234, %235 : vector<2x64xf32>
    %237 = arith.negf %236 : vector<2x64xf32>
    %238 = math.exp %237 : vector<2x64xf32>
    %cst_39 = arith.constant 1.000000e+00 : f32
    %239 = vector.broadcast %cst_39 : f32 to vector<2x64xf32>
    %240 = arith.addf %239, %238 : vector<2x64xf32>
    %241 = arith.divf %239, %240 : vector<2x64xf32>
    %242 = vector.extract_strided_slice %241 {offsets = [0, 0], sizes = [2, 32], strides = [1, 1]} : vector<2x64xf32> to vector<2x32xf32>
    %243 = vector.extract_strided_slice %241 {offsets = [0, 32], sizes = [2, 32], strides = [1, 1]} : vector<2x64xf32> to vector<2x32xf32>
    %244 = vector.extract_strided_slice %233 {offsets = [0, 64], sizes = [2, 32], strides = [1, 1]} : vector<2x96xf32> to vector<2x32xf32>
    %245 = vector.extract_strided_slice %232 {offsets = [0, 64], sizes = [2, 32], strides = [1, 1]} : vector<2x96xf32> to vector<2x32xf32>
    %246 = vector.broadcast %24 : vector<1x32xf32> to vector<2x32xf32>
    %247 = arith.addf %245, %246 : vector<2x32xf32>
    %248 = arith.mulf %242, %247 : vector<2x32xf32>
    %249 = arith.addf %244, %248 : vector<2x32xf32>
    %250 = math.tanh %249 : vector<2x32xf32>
    %cst_40 = arith.constant 1.000000e+00 : f32
    %251 = vector.broadcast %cst_40 : f32 to vector<2x32xf32>
    %252 = arith.subf %251, %243 : vector<2x32xf32>
    %253 = arith.mulf %252, %250 : vector<2x32xf32>
    %254 = arith.mulf %243, %230 : vector<2x32xf32>
    %255 = arith.addf %253, %254 : vector<2x32xf32>
    %cst_41 = arith.constant dense<0.000000e+00> : vector<2x96xf32>
    %256 = tpu.matmul %255, %9, %cst_41 {dimension_numbers = #tpu.dot_dimension_numbers<[1], [0], [0], [1], [0, 0, 1, 1], [], []>} : vector<2x32xf32>, vector<32x96xf32>, vector<2x96xf32> -> vector<2x96xf32>
    %257 = vector.extract_strided_slice %37 {offsets = [2, 0], sizes = [2, 96], strides = [1, 1]} : vector<16x96xf32> to vector<2x96xf32>
    %258 = vector.extract_strided_slice %257 {offsets = [0, 0], sizes = [2, 64], strides = [1, 1]} : vector<2x96xf32> to vector<2x64xf32>
    %259 = vector.extract_strided_slice %256 {offsets = [0, 0], sizes = [2, 64], strides = [1, 1]} : vector<2x96xf32> to vector<2x64xf32>
    %260 = arith.addf %258, %259 : vector<2x64xf32>
    %261 = arith.negf %260 : vector<2x64xf32>
    %262 = math.exp %261 : vector<2x64xf32>
    %cst_42 = arith.constant 1.000000e+00 : f32
    %263 = vector.broadcast %cst_42 : f32 to vector<2x64xf32>
    %264 = arith.addf %263, %262 : vector<2x64xf32>
    %265 = arith.divf %263, %264 : vector<2x64xf32>
    %266 = vector.extract_strided_slice %265 {offsets = [0, 0], sizes = [2, 32], strides = [1, 1]} : vector<2x64xf32> to vector<2x32xf32>
    %267 = vector.extract_strided_slice %265 {offsets = [0, 32], sizes = [2, 32], strides = [1, 1]} : vector<2x64xf32> to vector<2x32xf32>
    %268 = vector.extract_strided_slice %257 {offsets = [0, 64], sizes = [2, 32], strides = [1, 1]} : vector<2x96xf32> to vector<2x32xf32>
    %269 = vector.extract_strided_slice %256 {offsets = [0, 64], sizes = [2, 32], strides = [1, 1]} : vector<2x96xf32> to vector<2x32xf32>
    %270 = vector.broadcast %24 : vector<1x32xf32> to vector<2x32xf32>
    %271 = arith.addf %269, %270 : vector<2x32xf32>
    %272 = arith.mulf %266, %271 : vector<2x32xf32>
    %273 = arith.addf %268, %272 : vector<2x32xf32>
    %274 = math.tanh %273 : vector<2x32xf32>
    %cst_43 = arith.constant 1.000000e+00 : f32
    %275 = vector.broadcast %cst_43 : f32 to vector<2x32xf32>
    %276 = arith.subf %275, %267 : vector<2x32xf32>
    %277 = arith.mulf %276, %274 : vector<2x32xf32>
    %278 = arith.mulf %267, %255 : vector<2x32xf32>
    %279 = arith.addf %277, %278 : vector<2x32xf32>
    %cst_44 = arith.constant dense<0.000000e+00> : vector<2x96xf32>
    %280 = tpu.matmul %279, %9, %cst_44 {dimension_numbers = #tpu.dot_dimension_numbers<[1], [0], [0], [1], [0, 0, 1, 1], [], []>} : vector<2x32xf32>, vector<32x96xf32>, vector<2x96xf32> -> vector<2x96xf32>
    %281 = vector.extract_strided_slice %37 {offsets = [4, 0], sizes = [2, 96], strides = [1, 1]} : vector<16x96xf32> to vector<2x96xf32>
    %282 = vector.extract_strided_slice %281 {offsets = [0, 0], sizes = [2, 64], strides = [1, 1]} : vector<2x96xf32> to vector<2x64xf32>
    %283 = vector.extract_strided_slice %280 {offsets = [0, 0], sizes = [2, 64], strides = [1, 1]} : vector<2x96xf32> to vector<2x64xf32>
    %284 = arith.addf %282, %283 : vector<2x64xf32>
    %285 = arith.negf %284 : vector<2x64xf32>
    %286 = math.exp %285 : vector<2x64xf32>
    %cst_45 = arith.constant 1.000000e+00 : f32
    %287 = vector.broadcast %cst_45 : f32 to vector<2x64xf32>
    %288 = arith.addf %287, %286 : vector<2x64xf32>
    %289 = arith.divf %287, %288 : vector<2x64xf32>
    %290 = vector.extract_strided_slice %289 {offsets = [0, 0], sizes = [2, 32], strides = [1, 1]} : vector<2x64xf32> to vector<2x32xf32>
    %291 = vector.extract_strided_slice %289 {offsets = [0, 32], sizes = [2, 32], strides = [1, 1]} : vector<2x64xf32> to vector<2x32xf32>
    %292 = vector.extract_strided_slice %281 {offsets = [0, 64], sizes = [2, 32], strides = [1, 1]} : vector<2x96xf32> to vector<2x32xf32>
    %293 = vector.extract_strided_slice %280 {offsets = [0, 64], sizes = [2, 32], strides = [1, 1]} : vector<2x96xf32> to vector<2x32xf32>
    %294 = vector.broadcast %24 : vector<1x32xf32> to vector<2x32xf32>
    %295 = arith.addf %293, %294 : vector<2x32xf32>
    %296 = arith.mulf %290, %295 : vector<2x32xf32>
    %297 = arith.addf %292, %296 : vector<2x32xf32>
    %298 = math.tanh %297 : vector<2x32xf32>
    %cst_46 = arith.constant 1.000000e+00 : f32
    %299 = vector.broadcast %cst_46 : f32 to vector<2x32xf32>
    %300 = arith.subf %299, %291 : vector<2x32xf32>
    %301 = arith.mulf %300, %298 : vector<2x32xf32>
    %302 = arith.mulf %291, %279 : vector<2x32xf32>
    %303 = arith.addf %301, %302 : vector<2x32xf32>
    %cst_47 = arith.constant dense<0.000000e+00> : vector<2x96xf32>
    %304 = tpu.matmul %303, %9, %cst_47 {dimension_numbers = #tpu.dot_dimension_numbers<[1], [0], [0], [1], [0, 0, 1, 1], [], []>} : vector<2x32xf32>, vector<32x96xf32>, vector<2x96xf32> -> vector<2x96xf32>
    %305 = vector.extract_strided_slice %37 {offsets = [6, 0], sizes = [2, 96], strides = [1, 1]} : vector<16x96xf32> to vector<2x96xf32>
    %306 = vector.extract_strided_slice %305 {offsets = [0, 0], sizes = [2, 64], strides = [1, 1]} : vector<2x96xf32> to vector<2x64xf32>
    %307 = vector.extract_strided_slice %304 {offsets = [0, 0], sizes = [2, 64], strides = [1, 1]} : vector<2x96xf32> to vector<2x64xf32>
    %308 = arith.addf %306, %307 : vector<2x64xf32>
    %309 = arith.negf %308 : vector<2x64xf32>
    %310 = math.exp %309 : vector<2x64xf32>
    %cst_48 = arith.constant 1.000000e+00 : f32
    %311 = vector.broadcast %cst_48 : f32 to vector<2x64xf32>
    %312 = arith.addf %311, %310 : vector<2x64xf32>
    %313 = arith.divf %311, %312 : vector<2x64xf32>
    %314 = vector.extract_strided_slice %313 {offsets = [0, 0], sizes = [2, 32], strides = [1, 1]} : vector<2x64xf32> to vector<2x32xf32>
    %315 = vector.extract_strided_slice %313 {offsets = [0, 32], sizes = [2, 32], strides = [1, 1]} : vector<2x64xf32> to vector<2x32xf32>
    %316 = vector.extract_strided_slice %305 {offsets = [0, 64], sizes = [2, 32], strides = [1, 1]} : vector<2x96xf32> to vector<2x32xf32>
    %317 = vector.extract_strided_slice %304 {offsets = [0, 64], sizes = [2, 32], strides = [1, 1]} : vector<2x96xf32> to vector<2x32xf32>
    %318 = vector.broadcast %24 : vector<1x32xf32> to vector<2x32xf32>
    %319 = arith.addf %317, %318 : vector<2x32xf32>
    %320 = arith.mulf %314, %319 : vector<2x32xf32>
    %321 = arith.addf %316, %320 : vector<2x32xf32>
    %322 = math.tanh %321 : vector<2x32xf32>
    %cst_49 = arith.constant 1.000000e+00 : f32
    %323 = vector.broadcast %cst_49 : f32 to vector<2x32xf32>
    %324 = arith.subf %323, %315 : vector<2x32xf32>
    %325 = arith.mulf %324, %322 : vector<2x32xf32>
    %326 = arith.mulf %315, %303 : vector<2x32xf32>
    %327 = arith.addf %325, %326 : vector<2x32xf32>
    %cst_50 = arith.constant dense<0.000000e+00> : vector<2x96xf32>
    %328 = tpu.matmul %327, %9, %cst_50 {dimension_numbers = #tpu.dot_dimension_numbers<[1], [0], [0], [1], [0, 0, 1, 1], [], []>} : vector<2x32xf32>, vector<32x96xf32>, vector<2x96xf32> -> vector<2x96xf32>
    %329 = vector.extract_strided_slice %37 {offsets = [8, 0], sizes = [2, 96], strides = [1, 1]} : vector<16x96xf32> to vector<2x96xf32>
    %330 = vector.extract_strided_slice %329 {offsets = [0, 0], sizes = [2, 64], strides = [1, 1]} : vector<2x96xf32> to vector<2x64xf32>
    %331 = vector.extract_strided_slice %328 {offsets = [0, 0], sizes = [2, 64], strides = [1, 1]} : vector<2x96xf32> to vector<2x64xf32>
    %332 = arith.addf %330, %331 : vector<2x64xf32>
    %333 = arith.negf %332 : vector<2x64xf32>
    %334 = math.exp %333 : vector<2x64xf32>
    %cst_51 = arith.constant 1.000000e+00 : f32
    %335 = vector.broadcast %cst_51 : f32 to vector<2x64xf32>
    %336 = arith.addf %335, %334 : vector<2x64xf32>
    %337 = arith.divf %335, %336 : vector<2x64xf32>
    %338 = vector.extract_strided_slice %337 {offsets = [0, 0], sizes = [2, 32], strides = [1, 1]} : vector<2x64xf32> to vector<2x32xf32>
    %339 = vector.extract_strided_slice %337 {offsets = [0, 32], sizes = [2, 32], strides = [1, 1]} : vector<2x64xf32> to vector<2x32xf32>
    %340 = vector.extract_strided_slice %329 {offsets = [0, 64], sizes = [2, 32], strides = [1, 1]} : vector<2x96xf32> to vector<2x32xf32>
    %341 = vector.extract_strided_slice %328 {offsets = [0, 64], sizes = [2, 32], strides = [1, 1]} : vector<2x96xf32> to vector<2x32xf32>
    %342 = vector.broadcast %24 : vector<1x32xf32> to vector<2x32xf32>
    %343 = arith.addf %341, %342 : vector<2x32xf32>
    %344 = arith.mulf %338, %343 : vector<2x32xf32>
    %345 = arith.addf %340, %344 : vector<2x32xf32>
    %346 = math.tanh %345 : vector<2x32xf32>
    %cst_52 = arith.constant 1.000000e+00 : f32
    %347 = vector.broadcast %cst_52 : f32 to vector<2x32xf32>
    %348 = arith.subf %347, %339 : vector<2x32xf32>
    %349 = arith.mulf %348, %346 : vector<2x32xf32>
    %350 = arith.mulf %339, %327 : vector<2x32xf32>
    %351 = arith.addf %349, %350 : vector<2x32xf32>
    %cst_53 = arith.constant dense<0.000000e+00> : vector<2x96xf32>
    %352 = tpu.matmul %351, %9, %cst_53 {dimension_numbers = #tpu.dot_dimension_numbers<[1], [0], [0], [1], [0, 0, 1, 1], [], []>} : vector<2x32xf32>, vector<32x96xf32>, vector<2x96xf32> -> vector<2x96xf32>
    %353 = vector.extract_strided_slice %37 {offsets = [10, 0], sizes = [2, 96], strides = [1, 1]} : vector<16x96xf32> to vector<2x96xf32>
    %354 = vector.extract_strided_slice %353 {offsets = [0, 0], sizes = [2, 64], strides = [1, 1]} : vector<2x96xf32> to vector<2x64xf32>
    %355 = vector.extract_strided_slice %352 {offsets = [0, 0], sizes = [2, 64], strides = [1, 1]} : vector<2x96xf32> to vector<2x64xf32>
    %356 = arith.addf %354, %355 : vector<2x64xf32>
    %357 = arith.negf %356 : vector<2x64xf32>
    %358 = math.exp %357 : vector<2x64xf32>
    %cst_54 = arith.constant 1.000000e+00 : f32
    %359 = vector.broadcast %cst_54 : f32 to vector<2x64xf32>
    %360 = arith.addf %359, %358 : vector<2x64xf32>
    %361 = arith.divf %359, %360 : vector<2x64xf32>
    %362 = vector.extract_strided_slice %361 {offsets = [0, 0], sizes = [2, 32], strides = [1, 1]} : vector<2x64xf32> to vector<2x32xf32>
    %363 = vector.extract_strided_slice %361 {offsets = [0, 32], sizes = [2, 32], strides = [1, 1]} : vector<2x64xf32> to vector<2x32xf32>
    %364 = vector.extract_strided_slice %353 {offsets = [0, 64], sizes = [2, 32], strides = [1, 1]} : vector<2x96xf32> to vector<2x32xf32>
    %365 = vector.extract_strided_slice %352 {offsets = [0, 64], sizes = [2, 32], strides = [1, 1]} : vector<2x96xf32> to vector<2x32xf32>
    %366 = vector.broadcast %24 : vector<1x32xf32> to vector<2x32xf32>
    %367 = arith.addf %365, %366 : vector<2x32xf32>
    %368 = arith.mulf %362, %367 : vector<2x32xf32>
    %369 = arith.addf %364, %368 : vector<2x32xf32>
    %370 = math.tanh %369 : vector<2x32xf32>
    %cst_55 = arith.constant 1.000000e+00 : f32
    %371 = vector.broadcast %cst_55 : f32 to vector<2x32xf32>
    %372 = arith.subf %371, %363 : vector<2x32xf32>
    %373 = arith.mulf %372, %370 : vector<2x32xf32>
    %374 = arith.mulf %363, %351 : vector<2x32xf32>
    %375 = arith.addf %373, %374 : vector<2x32xf32>
    %cst_56 = arith.constant dense<0.000000e+00> : vector<2x96xf32>
    %376 = tpu.matmul %375, %9, %cst_56 {dimension_numbers = #tpu.dot_dimension_numbers<[1], [0], [0], [1], [0, 0, 1, 1], [], []>} : vector<2x32xf32>, vector<32x96xf32>, vector<2x96xf32> -> vector<2x96xf32>
    %377 = vector.extract_strided_slice %37 {offsets = [12, 0], sizes = [2, 96], strides = [1, 1]} : vector<16x96xf32> to vector<2x96xf32>
    %378 = vector.extract_strided_slice %377 {offsets = [0, 0], sizes = [2, 64], strides = [1, 1]} : vector<2x96xf32> to vector<2x64xf32>
    %379 = vector.extract_strided_slice %376 {offsets = [0, 0], sizes = [2, 64], strides = [1, 1]} : vector<2x96xf32> to vector<2x64xf32>
    %380 = arith.addf %378, %379 : vector<2x64xf32>
    %381 = arith.negf %380 : vector<2x64xf32>
    %382 = math.exp %381 : vector<2x64xf32>
    %cst_57 = arith.constant 1.000000e+00 : f32
    %383 = vector.broadcast %cst_57 : f32 to vector<2x64xf32>
    %384 = arith.addf %383, %382 : vector<2x64xf32>
    %385 = arith.divf %383, %384 : vector<2x64xf32>
    %386 = vector.extract_strided_slice %385 {offsets = [0, 0], sizes = [2, 32], strides = [1, 1]} : vector<2x64xf32> to vector<2x32xf32>
    %387 = vector.extract_strided_slice %385 {offsets = [0, 32], sizes = [2, 32], strides = [1, 1]} : vector<2x64xf32> to vector<2x32xf32>
    %388 = vector.extract_strided_slice %377 {offsets = [0, 64], sizes = [2, 32], strides = [1, 1]} : vector<2x96xf32> to vector<2x32xf32>
    %389 = vector.extract_strided_slice %376 {offsets = [0, 64], sizes = [2, 32], strides = [1, 1]} : vector<2x96xf32> to vector<2x32xf32>
    %390 = vector.broadcast %24 : vector<1x32xf32> to vector<2x32xf32>
    %391 = arith.addf %389, %390 : vector<2x32xf32>
    %392 = arith.mulf %386, %391 : vector<2x32xf32>
    %393 = arith.addf %388, %392 : vector<2x32xf32>
    %394 = math.tanh %393 : vector<2x32xf32>
    %cst_58 = arith.constant 1.000000e+00 : f32
    %395 = vector.broadcast %cst_58 : f32 to vector<2x32xf32>
    %396 = arith.subf %395, %387 : vector<2x32xf32>
    %397 = arith.mulf %396, %394 : vector<2x32xf32>
    %398 = arith.mulf %387, %375 : vector<2x32xf32>
    %399 = arith.addf %397, %398 : vector<2x32xf32>
    %cst_59 = arith.constant dense<0.000000e+00> : vector<2x96xf32>
    %400 = tpu.matmul %399, %9, %cst_59 {dimension_numbers = #tpu.dot_dimension_numbers<[1], [0], [0], [1], [0, 0, 1, 1], [], []>} : vector<2x32xf32>, vector<32x96xf32>, vector<2x96xf32> -> vector<2x96xf32>
    %401 = vector.extract_strided_slice %37 {offsets = [14, 0], sizes = [2, 96], strides = [1, 1]} : vector<16x96xf32> to vector<2x96xf32>
    %402 = vector.extract_strided_slice %401 {offsets = [0, 0], sizes = [2, 64], strides = [1, 1]} : vector<2x96xf32> to vector<2x64xf32>
    %403 = vector.extract_strided_slice %400 {offsets = [0, 0], sizes = [2, 64], strides = [1, 1]} : vector<2x96xf32> to vector<2x64xf32>
    %404 = arith.addf %402, %403 : vector<2x64xf32>
    %405 = arith.negf %404 : vector<2x64xf32>
    %406 = math.exp %405 : vector<2x64xf32>
    %cst_60 = arith.constant 1.000000e+00 : f32
    %407 = vector.broadcast %cst_60 : f32 to vector<2x64xf32>
    %408 = arith.addf %407, %406 : vector<2x64xf32>
    %409 = arith.divf %407, %408 : vector<2x64xf32>
    %410 = vector.extract_strided_slice %409 {offsets = [0, 0], sizes = [2, 32], strides = [1, 1]} : vector<2x64xf32> to vector<2x32xf32>
    %411 = vector.extract_strided_slice %409 {offsets = [0, 32], sizes = [2, 32], strides = [1, 1]} : vector<2x64xf32> to vector<2x32xf32>
    %412 = vector.extract_strided_slice %401 {offsets = [0, 64], sizes = [2, 32], strides = [1, 1]} : vector<2x96xf32> to vector<2x32xf32>
    %413 = vector.extract_strided_slice %400 {offsets = [0, 64], sizes = [2, 32], strides = [1, 1]} : vector<2x96xf32> to vector<2x32xf32>
    %414 = vector.broadcast %24 : vector<1x32xf32> to vector<2x32xf32>
    %415 = arith.addf %413, %414 : vector<2x32xf32>
    %416 = arith.mulf %410, %415 : vector<2x32xf32>
    %417 = arith.addf %412, %416 : vector<2x32xf32>
    %418 = math.tanh %417 : vector<2x32xf32>
    %cst_61 = arith.constant 1.000000e+00 : f32
    %419 = vector.broadcast %cst_61 : f32 to vector<2x32xf32>
    %420 = arith.subf %419, %411 : vector<2x32xf32>
    %421 = arith.mulf %420, %418 : vector<2x32xf32>
    %422 = arith.mulf %411, %399 : vector<2x32xf32>
    %423 = arith.addf %421, %422 : vector<2x32xf32>
    %424 = tpu.concatenate %255, %279, %303, %327, %351, %375, %399, %423 in 0 : vector<2x32xf32>, vector<2x32xf32>, vector<2x32xf32>, vector<2x32xf32>, vector<2x32xf32>, vector<2x32xf32>, vector<2x32xf32>, vector<2x32xf32> -> vector<16x32xf32>
    %cst_62 = arith.constant dense<0.000000e+00> : vector<16x16xf32>
    %425 = tpu.matmul %424, %231, %cst_62 {dimension_numbers = #tpu.dot_dimension_numbers<[1], [1], [0], [0], [0, 0, 1, 0], [], []>} : vector<16x32xf32>, vector<16x32xf32>, vector<16x16xf32> -> vector<16x16xf32>
    %426 = tpu.iota {dimensions = array<i32: 0>} : vector<16x16xi32>
    %c2_i32 = arith.constant 2 : i32
    %c0_i32 = arith.constant 0 : i32
    %427 = arith.cmpi eq, %c2_i32, %c0_i32 : i32
    %c1_i32 = arith.constant 1 : i32
    %428 = arith.select %427, %c1_i32, %c2_i32 : i32
    %429 = vector.broadcast %428 : i32 to vector<16x16xi32>
    %430 = arith.remsi %426, %429 : vector<16x16xi32>
    %c0_i32_63 = arith.constant 0 : i32
    %431 = vector.broadcast %c0_i32_63 : i32 to vector<16x16xi32>
    %432 = arith.cmpi ne, %430, %431 : vector<16x16xi32>
    %c0_i32_64 = arith.constant 0 : i32
    %433 = vector.broadcast %c0_i32_64 : i32 to vector<16x16xi32>
    %434 = arith.cmpi slt, %430, %433 : vector<16x16xi32>
    %c0_i32_65 = arith.constant 0 : i32
    %435 = arith.cmpi slt, %428, %c0_i32_65 : i32
    %436 = vector.broadcast %435 : i1 to vector<16x16xi1>
    %437 = vector.broadcast %436 : vector<16x16xi1> to vector<16x16xi1>
    %438 = arith.xori %434, %437 : vector<16x16xi1>
    %439 = arith.andi %438, %432 : vector<16x16xi1>
    %440 = vector.broadcast %428 : i32 to vector<16x16xi32>
    %441 = arith.addi %430, %440 : vector<16x16xi32>
    %442 = arith.select %439, %441, %430 : vector<16x16xi1>, vector<16x16xi32>
    %443 = tpu.iota {dimensions = array<i32: 1>} : vector<16x16xi32>
    %c2_i32_66 = arith.constant 2 : i32
    %c0_i32_67 = arith.constant 0 : i32
    %444 = arith.cmpi eq, %c2_i32_66, %c0_i32_67 : i32
    %c1_i32_68 = arith.constant 1 : i32
    %445 = arith.select %444, %c1_i32_68, %c2_i32_66 : i32
    %446 = vector.broadcast %445 : i32 to vector<16x16xi32>
    %447 = arith.remsi %443, %446 : vector<16x16xi32>
    %c0_i32_69 = arith.constant 0 : i32
    %448 = vector.broadcast %c0_i32_69 : i32 to vector<16x16xi32>
    %449 = arith.cmpi ne, %447, %448 : vector<16x16xi32>
    %c0_i32_70 = arith.constant 0 : i32
    %450 = vector.broadcast %c0_i32_70 : i32 to vector<16x16xi32>
    %451 = arith.cmpi slt, %447, %450 : vector<16x16xi32>
    %c0_i32_71 = arith.constant 0 : i32
    %452 = arith.cmpi slt, %445, %c0_i32_71 : i32
    %453 = vector.broadcast %452 : i1 to vector<16x16xi1>
    %454 = vector.broadcast %453 : vector<16x16xi1> to vector<16x16xi1>
    %455 = arith.xori %451, %454 : vector<16x16xi1>
    %456 = arith.andi %455, %449 : vector<16x16xi1>
    %457 = vector.broadcast %445 : i32 to vector<16x16xi32>
    %458 = arith.addi %447, %457 : vector<16x16xi32>
    %459 = arith.select %456, %458, %447 : vector<16x16xi1>, vector<16x16xi32>
    %460 = arith.cmpi eq, %442, %459 : vector<16x16xi32>
    %cst_72 = arith.constant -1.000000e+30 : f32
    %461 = vector.broadcast %cst_72 : f32 to vector<16x16xf32>
    %462 = arith.select %460, %425, %461 : vector<16x16xi1>, vector<16x16xf32>
    %cst_73 = arith.constant dense<0xFF800000> : vector<16xf32>
    %463 = vector.multi_reduction <maximumf>, %462, %cst_73 [1] : vector<16x16xf32> to vector<16xf32>
    %464 = vector.shape_cast %463 : vector<16xf32> to vector<16x1xf32>
    %465 = vector.broadcast %464 : vector<16x1xf32> to vector<16x16xf32>
    %466 = arith.subf %462, %465 : vector<16x16xf32>
    %467 = math.exp %466 : vector<16x16xf32>
    %cst_74 = arith.constant dense<0.000000e+00> : vector<16xf32>
    %468 = vector.multi_reduction <add>, %467, %cst_74 [1] : vector<16x16xf32> to vector<16xf32>
    %469 = vector.shape_cast %468 : vector<16xf32> to vector<16x1xf32>
    %470 = vector.broadcast %469 : vector<16x1xf32> to vector<16x16xf32>
    %471 = arith.divf %467, %470 : vector<16x16xf32>
    %cst_75 = arith.constant dense<0.000000e+00> : vector<16x32xf32>
    %472 = tpu.matmul %471, %231, %cst_75 {dimension_numbers = #tpu.dot_dimension_numbers<[1], [0], [0], [1], [0, 0, 1, 1], [], []>} : vector<16x16xf32>, vector<16x32xf32>, vector<16x32xf32> -> vector<16x32xf32>
    %c0_76 = arith.constant 0 : index
    %c0_77 = arith.constant 0 : index
    %473 = vector.load %arg4[%c0_76, %c0_77] : memref<65x128xf32, #tpu.memory_space<vmem>>, vector<65x128xf32>
    %474 = tpu.concatenate %424, %472 in 1 : vector<16x32xf32>, vector<16x32xf32> -> vector<16x64xf32>
    %475 = vector.extract_strided_slice %473 {offsets = [0, 0], sizes = [64, 128], strides = [1, 1]} : vector<65x128xf32> to vector<64x128xf32>
    %cst_78 = arith.constant dense<0.000000e+00> : vector<16x128xf32>
    %476 = tpu.matmul %474, %475, %cst_78 {dimension_numbers = #tpu.dot_dimension_numbers<[1], [0], [0], [1], [0, 0, 1, 1], [], []>} : vector<16x64xf32>, vector<64x128xf32>, vector<16x128xf32> -> vector<16x128xf32>
    %477 = vector.extract_strided_slice %473 {offsets = [64, 0], sizes = [1, 128], strides = [1, 1]} : vector<65x128xf32> to vector<1x128xf32>
    %478 = vector.broadcast %477 : vector<1x128xf32> to vector<16x128xf32>
    %479 = arith.addf %476, %478 : vector<16x128xf32>
    %cst_79 = arith.constant dense<0xFF800000> : vector<16xf32>
    %480 = vector.multi_reduction <maximumf>, %479, %cst_79 [1] : vector<16x128xf32> to vector<16xf32>
    %481 = vector.shape_cast %480 : vector<16xf32> to vector<16x1xf32>
    %482 = vector.broadcast %481 : vector<16x1xf32> to vector<16x128xf32>
    %483 = arith.subf %479, %482 : vector<16x128xf32>
    %484 = math.exp %483 : vector<16x128xf32>
    %cst_80 = arith.constant dense<0.000000e+00> : vector<16xf32>
    %485 = vector.multi_reduction <add>, %484, %cst_80 [1] : vector<16x128xf32> to vector<16xf32>
    %486 = vector.shape_cast %485 : vector<16xf32> to vector<16x1xf32>
    %487 = math.log %486 : vector<16x1xf32>
    %488 = vector.broadcast %487 : vector<16x1xf32> to vector<16x128xf32>
    %489 = arith.subf %483, %488 : vector<16x128xf32>
    %c0_81 = arith.constant 0 : index
    %c0_82 = arith.constant 0 : index
    %490 = vector.load %arg5[%c0_81, %c0_82] : memref<16x128xf32, #tpu.memory_space<vmem>>, vector<16x128xf32>
    tpu.vector_store %arg5[%c0_81, %c0_82], %489 {strides = array<i32>} : memref<16x128xf32, #tpu.memory_space<vmem>>, vector<16x128xf32>,
    return
  }
}

</mosaic_0001>

<llo_original>
// kernel: seq2seq_gnn_forward.1
$region0: #{seq2seq_gnn_forward.1}
  #allocation0 [shape = 'u32[]', space=smem, size = 0x4, offset = 0x4, fixed_abs, tag = 'smem constant byte address 0x4 - core index']
  #allocation1 [shape = 'u32[144,128]{1,0:T(1,128)}', space=vmem, size = 0x12000, scoped, tag = 'internal scratch']
  %s0 = inlined_call_operand.vmem [shape: f32[2,5,32], index: 0, kind: input, shape index: {}]
  %s1 = inlined_call_operand.vmem [shape: f32[32,32], index: 1, kind: input, shape index: {}]
  %s2 = inlined_call_operand.vmem [shape: f32[160,96], index: 2, kind: input, shape index: {}]
  %s3 = inlined_call_operand.vmem [shape: f32[4,96], index: 3, kind: input, shape index: {}]
  %s4 = inlined_call_operand.vmem [shape: f32[65,128], index: 4, kind: input, shape index: {}]
  %s5 = inlined_call_operand.vmem [shape: f32[16,128], index: 5, kind: output, shape index: {}]
  %s6 = sld [smem:[#allocation0]]
  $region30: #{seq2seq_gnn_forward.1} parent=0
    _
  %s8 = ssub.s32 1, %s6
  %s9 = scalar_select 0, %s8, %s6
  // Predicated region
  $region2: #{seq2seq_gnn_forward.1} parent=0 // pred_check
    _
  $region3: #{seq2seq_gnn_forward.1} parent=0 // pred_check_branch
    %11 = sbr.rel (0) target = $region5
  $region4: #{seq2seq_gnn_forward.1} parent=0 // pred_region
    _
  $region5: #{seq2seq_gnn_forward.1} parent=0 // pred_fallthru
    _
  // Predicated region
  $region6: #{seq2seq_gnn_forward.1} parent=0 // pred_check
    _
  $region7: #{seq2seq_gnn_forward.1} parent=0 // pred_check_branch
    %13 = sbr.rel (0) target = $region9
  $region8: #{seq2seq_gnn_forward.1} parent=0 // pred_region
    _
  $region9: #{seq2seq_gnn_forward.1} parent=0 // pred_fallthru
    _
  // Predicated region
  $region10: #{seq2seq_gnn_forward.1} parent=0 // pred_check
    _
  $region11: #{seq2seq_gnn_forward.1} parent=0 // pred_check_branch
    %15 = sbr.rel (0) target = $region13
  $region12: #{seq2seq_gnn_forward.1} parent=0 // pred_region
    _
  $region13: #{seq2seq_gnn_forward.1} parent=0 // pred_fallthru
    _
  // Predicated region
  $region14: #{seq2seq_gnn_forward.1} parent=0 // pred_check
    _
  $region15: #{seq2seq_gnn_forward.1} parent=0 // pred_check_branch
    %17 = sbr.rel (0) target = $region17
  $region16: #{seq2seq_gnn_forward.1} parent=0 // pred_region
    _
  $region17: #{seq2seq_gnn_forward.1} parent=0 // pred_fallthru
    _
  // Predicated region
  $region18: #{seq2seq_gnn_forward.1} parent=0 // pred_check
    _
  $region19: #{seq2seq_gnn_forward.1} parent=0 // pred_check_branch
    %19 = sbr.rel (0) target = $region21
  $region20: #{seq2seq_gnn_forward.1} parent=0 // pred_region
    _
  $region21: #{seq2seq_gnn_forward.1} parent=0 // pred_fallthru
    _
  %v20 = vld [vmem:[%s0] sm:$0x1f]
  %v21 = vld [vmem:[%s0 + $0x8] sm:$0x1f]
  %vm22 = vcmask 258048
  %v23 = vsel %vm22, %v20, 0.0
  %v24 = vrot.slane %v23, 4
  %v25 = vadd.f32 %v23, %v24
  %v26 = vrot.slane %v25, 2
  %v27 = vadd.f32 %v25, %v26
  %v28 = vrot.slane %v27, 1
  %v29 = vadd.f32 %v27, %v28
  %v30 = vsel %vm22, %v21, 0.0
  %v31 = vrot.slane %v30, 4
  %v32 = vadd.f32 %v30, %v31
  %v33 = vrot.slane %v32, 2
  %v34 = vadd.f32 %v32, %v33
  %v35 = vrot.slane %v34, 1
  %v36 = vadd.f32 %v34, %v35
  %v37 = vrcp.pop 5.0
  %v38 = vmul.f32 %v29, %v37
  %v39 = vmul.f32 %v36, %v37
  %v40 = vld [vmem:[%s2] sm:$0xff]
  %v41 = vld [vmem:[%s2 + $0x8] sm:$0xff]
  %v42 = vld [vmem:[%s2 + $0x10] sm:$0xff]
  %v43 = vld [vmem:[%s2 + $0x18] sm:$0xff]
  %v44 = vld [vmem:[%s2 + $0x20] sm:$0xff]
  %v45 = vld [vmem:[%s2 + $0x28] sm:$0xff]
  %v46 = vld [vmem:[%s2 + $0x30] sm:$0xff]
  %v47 = vld [vmem:[%s2 + $0x38] sm:$0xff]
  %v48 = vld [vmem:[%s2 + $0x40] sm:$0xff]
  %v49 = vld [vmem:[%s2 + $0x48] sm:$0xff]
  %v50 = vld [vmem:[%s2 + $0x50] sm:$0xff]
  %v51 = vld [vmem:[%s2 + $0x58] sm:$0xff]
  %v52 = vld [vmem:[%s2 + $0x60] sm:$0xff]
  %v53 = vld [vmem:[%s2 + $0x68] sm:$0xff]
  %v54 = vld [vmem:[%s2 + $0x70] sm:$0xff]
  %v55 = vld [vmem:[%s2 + $0x78] sm:$0xff]
  %v56 = vld [vmem:[%s2 + $0x80] sm:$0xff]
  %v57 = vld [vmem:[%s2 + $0x88] sm:$0xff]
  %v58 = vld [vmem:[%s2 + $0x90] sm:$0xff]
  %v59 = vld [vmem:[%s2 + $0x98] sm:$0xff]
  %v60 = vld [vmem:[%s3] sm:$0xf]
  %v61 = vld [vmem:[%s1] sm:$0xff]
  %v62 = vld [vmem:[%s1 + $0x8] sm:$0xff]
  %v63 = vld [vmem:[%s1 + $0x10] sm:$0xff]
  %v64 = vld [vmem:[%s1 + $0x18] sm:$0xff]
  %vm65 = vcmask 523264
  %v66 = vsel %vm65, %v60, 0.0
  %v67 = vlaneseq
  %v68 = vshrl.u32 %v67, 7
  %v69 = vsub.s32 0, %v68
  %v70 = vrot.slane %v60, %v69
  %vm73 = vcmask 1041409
  %v74 = vsel %vm73, %v39, %v38
  %vm75 = vcmask 261120
  %v76 = vsel %vm75, %v74, 0
  %78 = vmatprep.subr.mxu0 0.0
  %79 = vmatpush1.msra.mxu0 %v44
  %80 = vmatprep.subr.mxu0 0.0
  %81 = vmatpush1.msra.mxu0 %v45
  %82 = vmatprep.subr.mxu0 0.0
  %83 = vmatpush1.msra.mxu0 %v46
  %84 = vmatprep.subr.mxu0 0.0
  %85 = vmatpush1.msra.mxu0 %v47
  %86 = vmatprep.subr.mxu0 0.0
  %87 = vmatpush1.msra.mxu0 0.0
  %88 = vmatprep.subr.mxu0 0.0
  %89 = vmatpush1.msra.mxu0 0.0
  %90 = vmatprep.subr.mxu0 0.0
  %91 = vmatpush1.msra.mxu0 0.0
  %92 = vmatprep.subr.mxu0 0.0
  %93 = vmatpush1.msra.mxu0 0.0
  %94 = vmatprep.subr.mxu0 0.0
  %95 = vmatpush1.msra.mxu0 0.0
  %96 = vmatprep.subr.mxu0 0.0
  %97 = vmatpush1.msra.mxu0 0.0
  %98 = vmatprep.subr.mxu0 0.0
  %99 = vmatpush1.msra.mxu0 0.0
  %100 = vmatprep.subr.mxu0 0.0
  %101 = vmatpush1.msra.mxu0 0.0
  %102 = vmatprep.subr.mxu0 0.0
  %103 = vmatpush1.msra.mxu0 0.0
  %104 = vmatprep.subr.mxu0 0.0
  %105 = vmatpush1.msra.mxu0 0.0
  %106 = vmatprep.subr.mxu0 0.0
  %107 = vmatpush1.msra.mxu0 0.0
  %108 = vmatprep.subr.mxu0 0.0
  %109 = vmatpush1.msra.mxu0 0.0
  %110 = vmatprep.subr.mxu0 0.0
  %111 = vmatpush1.msra.mxu0 0.0
  %112 = vmatprep.subr.mxu0 0.0
  %113 = vmatpush1.msra.mxu0 0.0
  %114 = vmatprep.subr.mxu0 0.0
  %115 = vmatpush1.msra.mxu0 0.0
  %116 = vmatprep.subr.mxu0 0.0
  %117 = vmatpush1.msra.mxu0 0.0
  %118 = vmatprep.subr.mxu0 0.0
  %119 = vmatpush1.msra.mxu0 0.0
  %120 = vmatprep.subr.mxu0 0.0
  %121 = vmatpush1.msra.mxu0 0.0
  %122 = vmatprep.subr.mxu0 0.0
  %123 = vmatpush1.msra.mxu0 0.0
  %124 = vmatprep.subr.mxu0 0.0
  %125 = vmatpush1.msra.mxu0 0.0
  %126 = vmatprep.subr.mxu0 0.0
  %127 = vmatpush1.msra.mxu0 0.0
  %128 = vmatprep.subr.mxu0 0.0
  %129 = vmatpush1.msra.mxu0 0.0
  %130 = vmatprep.subr.mxu0 0.0
  %131 = vmatpush1.msra.mxu0 0.0
  %132 = vmatprep.subr.mxu0 0.0
  %133 = vmatpush1.msra.mxu0 0.0
  %134 = vmatprep.subr.mxu0 0.0
  %135 = vmatpush1.msra.mxu0 0.0
  %136 = vmatprep.subr.mxu0 0.0
  %137 = vmatpush1.msra.mxu0 0.0
  %138 = vmatprep.subr.mxu0 0.0
  %139 = vmatpush1.msra.mxu0 0.0
  %140 = vmatprep.subr.mxu0 0.0
  %141 = vmatpush1.msra.mxu0 0.0
  %142 = vmatprep.mubr.f32.mxu0 0.0
  %143 = vmatmul.mubr.f32.gmra.mrb[0].mxu0 %v76
  %v144 = vpop.f32.mrb[0].mxu0
  %v145 = vadd.f32 %v70, %v144
  %v146 = vpop.f32.mrb[0].mxu0
  %147 = vdwg.mxu0
  %v148 = vlaneseq
  %v149 = vshrl.u32 %v148, 7
  %v150 = vsub.s32 1, %v149
  %v151 = vrot.slane %v66, %v150
  %v152 = vadd.f32 %v145, %v151
  %v154 = vrot.slane %v152, 6
  %v156 = vrot.slane %v152, 4
  %v158 = vrot.slane %v152, 2
  %vm160 = vcmask 1041408
  %v161 = vsel %vm160, %v152, %v154
  %vm162 = vcmask 1043456
  %v163 = vsel %vm162, %v161, %v156
  %vm164 = vcmask 1045504
  %v165 = vsel %vm164, %v163, %v158
  %v167 = vsel %vm75, %v61, 0
  %v170 = vsel %vm75, %v62, 0
  %172 = vmatprep.subr.mxu0 0.0
  %173 = vmatpush1.msra.mxu0 %v40
  %174 = vmatprep.subr.mxu0 0.0
  %175 = vmatpush1.msra.mxu0 %v41
  %176 = vmatprep.subr.mxu0 0.0
  %177 = vmatpush1.msra.mxu0 %v42
  %178 = vmatprep.subr.mxu0 0.0
  %179 = vmatpush1.msra.mxu0 %v43
  %180 = vmatprep.subr.mxu0 0.0
  %181 = vmatpush1.msra.mxu0 0.0
  %182 = vmatprep.subr.mxu0 0.0
  %183 = vmatpush1.msra.mxu0 0.0
  %184 = vmatprep.subr.mxu0 0.0
  %185 = vmatpush1.msra.mxu0 0.0
  %186 = vmatprep.subr.mxu0 0.0
  %187 = vmatpush1.msra.mxu0 0.0
  %188 = vmatprep.subr.mxu0 0.0
  %189 = vmatpush1.msra.mxu0 0.0
  %190 = vmatprep.subr.mxu0 0.0
  %191 = vmatpush1.msra.mxu0 0.0
  %192 = vmatprep.subr.mxu0 0.0
  %193 = vmatpush1.msra.mxu0 0.0
  %194 = vmatprep.subr.mxu0 0.0
  %195 = vmatpush1.msra.mxu0 0.0
  %196 = vmatprep.subr.mxu0 0.0
  %197 = vmatpush1.msra.mxu0 0.0
  %198 = vmatprep.subr.mxu0 0.0
  %199 = vmatpush1.msra.mxu0 0.0
  %200 = vmatprep.subr.mxu0 0.0
  %201 = vmatpush1.msra.mxu0 0.0
  %202 = vmatprep.subr.mxu0 0.0
  %203 = vmatpush1.msra.mxu0 0.0
  %204 = vmatprep.subr.mxu0 0.0
  %205 = vmatpush1.msra.mxu0 0.0
  %206 = vmatprep.subr.mxu0 0.0
  %207 = vmatpush1.msra.mxu0 0.0
  %208 = vmatprep.subr.mxu0 0.0
  %209 = vmatpush1.msra.mxu0 0.0
  %210 = vmatprep.subr.mxu0 0.0
  %211 = vmatpush1.msra.mxu0 0.0
  %212 = vmatprep.subr.mxu0 0.0
  %213 = vmatpush1.msra.mxu0 0.0
  %214 = vmatprep.subr.mxu0 0.0
  %215 = vmatpush1.msra.mxu0 0.0
  %216 = vmatprep.subr.mxu0 0.0
  %217 = vmatpush1.msra.mxu0 0.0
  %218 = vmatprep.subr.mxu0 0.0
  %219 = vmatpush1.msra.mxu0 0.0
  %220 = vmatprep.subr.mxu0 0.0
  %221 = vmatpush1.msra.mxu0 0.0
  %222 = vmatprep.subr.mxu0 0.0
  %223 = vmatpush1.msra.mxu0 0.0
  %224 = vmatprep.subr.mxu0 0.0
  %225 = vmatpush1.msra.mxu0 0.0
  %226 = vmatprep.subr.mxu0 0.0
  %227 = vmatpush1.msra.mxu0 0.0
  %228 = vmatprep.subr.mxu0 0.0
  %229 = vmatpush1.msra.mxu0 0.0
  %230 = vmatprep.subr.mxu0 0.0
  %231 = vmatpush1.msra.mxu0 0.0
  %232 = vmatprep.subr.mxu0 0.0
  %233 = vmatpush1.msra.mxu0 0.0
  %234 = vmatprep.subr.mxu0 0.0
  %235 = vmatpush1.msra.mxu0 0.0
  %236 = vmatprep.mubr.f32.mxu0 0.0
  %237 = vmatmul.mubr.f32.gmra.mrb[0].mxu0 %v167
  %v238 = vpop.f32.mrb[0].mxu0
  %v239 = vadd.f32 %v165, %v238
  %v240 = vpop.f32.mrb[0].mxu0
  %241 = vmatprep.mubr.f32.mxu0 0.0
  %242 = vmatmul.mubr.f32.gmra.mrb[0].mxu0 %v170
  %v243 = vpop.f32.mrb[0].mxu0
  %v244 = vadd.f32 %v165, %v243
  %v245 = vpop.f32.mrb[0].mxu0
  %246 = vdwg.mxu0
  %v247 = vlaneseq
  %v248 = vshrl.u32 %v247, 7
  %v249 = vsub.s32 2, %v248
  %v250 = vrot.slane %v60, %v249
  %v252 = vsel %vm75, %v63, 0
  %v255 = vsel %vm75, %v64, 0
  %257 = vmatprep.subr.mxu0 0.0
  %258 = vmatpush1.msra.mxu0 %v52
  %259 = vmatprep.subr.mxu0 0.0
  %260 = vmatpush1.msra.mxu0 %v53
  %261 = vmatprep.subr.mxu0 0.0
  %262 = vmatpush1.msra.mxu0 %v54
  %263 = vmatprep.subr.mxu0 0.0
  %264 = vmatpush1.msra.mxu0 %v55
  %265 = vmatprep.subr.mxu0 0.0
  %266 = vmatpush1.msra.mxu0 0.0
  %267 = vmatprep.subr.mxu0 0.0
  %268 = vmatpush1.msra.mxu0 0.0
  %269 = vmatprep.subr.mxu0 0.0
  %270 = vmatpush1.msra.mxu0 0.0
  %271 = vmatprep.subr.mxu0 0.0
  %272 = vmatpush1.msra.mxu0 0.0
  %273 = vmatprep.subr.mxu0 0.0
  %274 = vmatpush1.msra.mxu0 0.0
  %275 = vmatprep.subr.mxu0 0.0
  %276 = vmatpush1.msra.mxu0 0.0
  %277 = vmatprep.subr.mxu0 0.0
  %278 = vmatpush1.msra.mxu0 0.0
  %279 = vmatprep.subr.mxu0 0.0
  %280 = vmatpush1.msra.mxu0 0.0
  %281 = vmatprep.subr.mxu0 0.0
  %282 = vmatpush1.msra.mxu0 0.0
  %283 = vmatprep.subr.mxu0 0.0
  %284 = vmatpush1.msra.mxu0 0.0
  %285 = vmatprep.subr.mxu0 0.0
  %286 = vmatpush1.msra.mxu0 0.0
  %287 = vmatprep.subr.mxu0 0.0
  %288 = vmatpush1.msra.mxu0 0.0
  %289 = vmatprep.subr.mxu0 0.0
  %290 = vmatpush1.msra.mxu0 0.0
  %291 = vmatprep.subr.mxu0 0.0
  %292 = vmatpush1.msra.mxu0 0.0
  %293 = vmatprep.subr.mxu0 0.0
  %294 = vmatpush1.msra.mxu0 0.0
  %295 = vmatprep.subr.mxu0 0.0
  %296 = vmatpush1.msra.mxu0 0.0
  %297 = vmatprep.subr.mxu0 0.0
  %298 = vmatpush1.msra.mxu0 0.0
  %299 = vmatprep.subr.mxu0 0.0
  %300 = vmatpush1.msra.mxu0 0.0
  %301 = vmatprep.subr.mxu0 0.0
  %302 = vmatpush1.msra.mxu0 0.0
  %303 = vmatprep.subr.mxu0 0.0
  %304 = vmatpush1.msra.mxu0 0.0
  %305 = vmatprep.subr.mxu0 0.0
  %306 = vmatpush1.msra.mxu0 0.0
  %307 = vmatprep.subr.mxu0 0.0
  %308 = vmatpush1.msra.mxu0 0.0
  %309 = vmatprep.subr.mxu0 0.0
  %310 = vmatpush1.msra.mxu0 0.0
  %311 = vmatprep.subr.mxu0 0.0
  %312 = vmatpush1.msra.mxu0 0.0
  %313 = vmatprep.subr.mxu0 0.0
  %314 = vmatpush1.msra.mxu0 0.0
  %315 = vmatprep.subr.mxu0 0.0
  %316 = vmatpush1.msra.mxu0 0.0
  %317 = vmatprep.subr.mxu0 0.0
  %318 = vmatpush1.msra.mxu0 0.0
  %319 = vmatprep.subr.mxu0 0.0
  %320 = vmatpush1.msra.mxu0 0.0
  %321 = vmatprep.mubr.f32.mxu0 0.0
  %322 = vmatmul.mubr.f32.gmra.mrb[0].mxu0 %v252
  %v323 = vpop.f32.mrb[0].mxu0
  %v324 = vadd.f32 %v250, %v323
  %v325 = vpop.f32.mrb[0].mxu0
  %326 = vmatprep.mubr.f32.mxu0 0.0
  %327 = vmatmul.mubr.f32.gmra.mrb[0].mxu0 %v255
  %v328 = vpop.f32.mrb[0].mxu0
  %v329 = vadd.f32 %v250, %v328
  %v330 = vpop.f32.mrb[0].mxu0
  %331 = vdwg.mxu0
  %v332 = vlaneseq
  %v333 = vshrl.u32 %v332, 7
  %v334 = vsub.s32 3, %v333
  %v335 = vrot.slane %v66, %v334
  %v336 = vadd.f32 %v324, %v335
  %v337 = vadd.f32 %v329, %v335
  %v339 = vsel %vm75, 0.0, 0
  %341 = vmatprep.subr.mxu0 0.0
  %342 = vmatpush1.msra.mxu0 %v48
  %343 = vmatprep.subr.mxu0 0.0
  %344 = vmatpush1.msra.mxu0 %v49
  %345 = vmatprep.subr.mxu0 0.0
  %346 = vmatpush1.msra.mxu0 %v50
  %347 = vmatprep.subr.mxu0 0.0
  %348 = vmatpush1.msra.mxu0 %v51
  %349 = vmatprep.subr.mxu0 0.0
  %350 = vmatpush1.msra.mxu0 0.0
  %351 = vmatprep.subr.mxu0 0.0
  %352 = vmatpush1.msra.mxu0 0.0
  %353 = vmatprep.subr.mxu0 0.0
  %354 = vmatpush1.msra.mxu0 0.0
  %355 = vmatprep.subr.mxu0 0.0
  %356 = vmatpush1.msra.mxu0 0.0
  %357 = vmatprep.subr.mxu0 0.0
  %358 = vmatpush1.msra.mxu0 0.0
  %359 = vmatprep.subr.mxu0 0.0
  %360 = vmatpush1.msra.mxu0 0.0
  %361 = vmatprep.subr.mxu0 0.0
  %362 = vmatpush1.msra.mxu0 0.0
  %363 = vmatprep.subr.mxu0 0.0
  %364 = vmatpush1.msra.mxu0 0.0
  %365 = vmatprep.subr.mxu0 0.0
  %366 = vmatpush1.msra.mxu0 0.0
  %367 = vmatprep.subr.mxu0 0.0
  %368 = vmatpush1.msra.mxu0 0.0
  %369 = vmatprep.subr.mxu0 0.0
  %370 = vmatpush1.msra.mxu0 0.0
  %371 = vmatprep.subr.mxu0 0.0
  %372 = vmatpush1.msra.mxu0 0.0
  %373 = vmatprep.subr.mxu0 0.0
  %374 = vmatpush1.msra.mxu0 0.0
  %375 = vmatprep.subr.mxu0 0.0
  %376 = vmatpush1.msra.mxu0 0.0
  %377 = vmatprep.subr.mxu0 0.0
  %378 = vmatpush1.msra.mxu0 0.0
  %379 = vmatprep.subr.mxu0 0.0
  %380 = vmatpush1.msra.mxu0 0.0
  %381 = vmatprep.subr.mxu0 0.0
  %382 = vmatpush1.msra.mxu0 0.0
  %383 = vmatprep.subr.mxu0 0.0
  %384 = vmatpush1.msra.mxu0 0.0
  %385 = vmatprep.subr.mxu0 0.0
  %386 = vmatpush1.msra.mxu0 0.0
  %387 = vmatprep.subr.mxu0 0.0
  %388 = vmatpush1.msra.mxu0 0.0
  %389 = vmatprep.subr.mxu0 0.0
  %390 = vmatpush1.msra.mxu0 0.0
  %391 = vmatprep.subr.mxu0 0.0
  %392 = vmatpush1.msra.mxu0 0.0
  %393 = vmatprep.subr.mxu0 0.0
  %394 = vmatpush1.msra.mxu0 0.0
  %395 = vmatprep.subr.mxu0 0.0
  %396 = vmatpush1.msra.mxu0 0.0
  %397 = vmatprep.subr.mxu0 0.0
  %398 = vmatpush1.msra.mxu0 0.0
  %399 = vmatprep.subr.mxu0 0.0
  %400 = vmatpush1.msra.mxu0 0.0
  %401 = vmatprep.subr.mxu0 0.0
  %402 = vmatpush1.msra.mxu0 0.0
  %403 = vmatprep.subr.mxu0 0.0
  %404 = vmatpush1.msra.mxu0 0.0
  %405 = vmatprep.mubr.f32.mxu0 0.0
  %406 = vmatmul.mubr.f32.gmra.mrb[0].mxu0 %v339
  %v407 = vpop.f32.mrb[0].mxu0
  %v408 = vadd.f32 0.0, %v407
  %v409 = vpop.f32.mrb[0].mxu0
  %410 = vdwg.mxu0
  %v411 = vadd.f32 %v239, %v408
  %v412 = vxor.u32 %v411, 2147483648
  %v413 = vmul.f32 %v412, 1.442695
  %v414 = vpow.pop %v413
  %v415 = vadd.f32 %v414, 1.0
  %v416 = vrcp.pop %v415
  %v417 = vmul.f32 1.0, %v416
  %v418 = vlaneseq
  %v419 = vshrl.u32 %v418, 7
  %v420 = vsub.s32 1, %v419
  %v421 = vrot.slane %v60, %v420
  %v422 = vadd.f32 %v408, %v421
  %424 = vrot.lane.b32.xlu0 %v422, 64
  %v425 = vpop.permute.xlu0 %424
  %v427 = vmul.f32 %v417, %v425
  %429 = vrot.lane.b32.xlu0 %v427, 64
  %v430 = vpop.permute.xlu0 %429
  %v432 = vadd.f32 %v239, %v430
  %v433 = vtanh.pop %v432
  %v434 = vsub.f32 1.0, %v417
  %436 = vrot.lane.b32.xlu0 %v433, 96
  %v437 = vpop.permute.xlu0 %436
  %v439 = vmul.f32 %v434, %v437
  %v440 = vmul.f32 %v417, 0.0
  %v441 = vadd.f32 %v439, %v440
  %443 = vrot.lane.b32.xlu0 %v441, 96
  %v444 = vpop.permute.xlu0 %443
  %v445 = vsel %vm75, %v444, 0
  %447 = vmatprep.subr.mxu0 0.0
  %448 = vmatpush1.msra.mxu0 %v48
  %449 = vmatprep.subr.mxu0 0.0
  %450 = vmatpush1.msra.mxu0 %v49
  %451 = vmatprep.subr.mxu0 0.0
  %452 = vmatpush1.msra.mxu0 %v50
  %453 = vmatprep.subr.mxu0 0.0
  %454 = vmatpush1.msra.mxu0 %v51
  %455 = vmatprep.subr.mxu0 0.0
  %456 = vmatpush1.msra.mxu0 0.0
  %457 = vmatprep.subr.mxu0 0.0
  %458 = vmatpush1.msra.mxu0 0.0
  %459 = vmatprep.subr.mxu0 0.0
  %460 = vmatpush1.msra.mxu0 0.0
  %461 = vmatprep.subr.mxu0 0.0
  %462 = vmatpush1.msra.mxu0 0.0
  %463 = vmatprep.subr.mxu0 0.0
  %464 = vmatpush1.msra.mxu0 0.0
  %465 = vmatprep.subr.mxu0 0.0
  %466 = vmatpush1.msra.mxu0 0.0
  %467 = vmatprep.subr.mxu0 0.0
  %468 = vmatpush1.msra.mxu0 0.0
  %469 = vmatprep.subr.mxu0 0.0
  %470 = vmatpush1.msra.mxu0 0.0
  %471 = vmatprep.subr.mxu0 0.0
  %472 = vmatpush1.msra.mxu0 0.0
  %473 = vmatprep.subr.mxu0 0.0
  %474 = vmatpush1.msra.mxu0 0.0
  %475 = vmatprep.subr.mxu0 0.0
  %476 = vmatpush1.msra.mxu0 0.0
  %477 = vmatprep.subr.mxu0 0.0
  %478 = vmatpush1.msra.mxu0 0.0
  %479 = vmatprep.subr.mxu0 0.0
  %480 = vmatpush1.msra.mxu0 0.0
  %481 = vmatprep.subr.mxu0 0.0
  %482 = vmatpush1.msra.mxu0 0.0
  %483 = vmatprep.subr.mxu0 0.0
  %484 = vmatpush1.msra.mxu0 0.0
  %485 = vmatprep.subr.mxu0 0.0
  %486 = vmatpush1.msra.mxu0 0.0
  %487 = vmatprep.subr.mxu0 0.0
  %488 = vmatpush1.msra.mxu0 0.0
  %489 = vmatprep.subr.mxu0 0.0
  %490 = vmatpush1.msra.mxu0 0.0
  %491 = vmatprep.subr.mxu0 0.0
  %492 = vmatpush1.msra.mxu0 0.0
  %493 = vmatprep.subr.mxu0 0.0
  %494 = vmatpush1.msra.mxu0 0.0
  %495 = vmatprep.subr.mxu0 0.0
  %496 = vmatpush1.msra.mxu0 0.0
  %497 = vmatprep.subr.mxu0 0.0
  %498 = vmatpush1.msra.mxu0 0.0
  %499 = vmatprep.subr.mxu0 0.0
  %500 = vmatpush1.msra.mxu0 0.0
  %501 = vmatprep.subr.mxu0 0.0
  %502 = vmatpush1.msra.mxu0 0.0
  %503 = vmatprep.subr.mxu0 0.0
  %504 = vmatpush1.msra.mxu0 0.0
  %505 = vmatprep.subr.mxu0 0.0
  %506 = vmatpush1.msra.mxu0 0.0
  %507 = vmatprep.subr.mxu0 0.0
  %508 = vmatpush1.msra.mxu0 0.0
  %509 = vmatprep.subr.mxu0 0.0
  %510 = vmatpush1.msra.mxu0 0.0
  %511 = vmatprep.mubr.f32.mxu0 0.0
  %512 = vmatmul.mubr.f32.gmra.mrb[0].mxu0 %v445
  %v513 = vpop.f32.mrb[0].mxu0
  %v514 = vadd.f32 0.0, %v513
  %v515 = vpop.f32.mrb[0].mxu0
  %516 = vdwg.mxu0
  %v518 = vrot.slane %v514, 6
  %v520 = vadd.f32 %v239, %v518
  %v521 = vxor.u32 %v520, 2147483648
  %v522 = vmul.f32 %v521, 1.442695
  %v523 = vpow.pop %v522
  %v524 = vadd.f32 %v523, 1.0
  %v525 = vrcp.pop %v524
  %v526 = vmul.f32 1.0, %v525
  %v527 = vadd.f32 %v514, %v421
  %v529 = vrot.slane %v527, 6
  %530 = vrot.lane.b32.xlu0 %v529, 64
  %v531 = vpop.permute.xlu0 %530
  %v533 = vmul.f32 %v526, %v531
  %535 = vrot.lane.b32.xlu0 %v533, 64
  %v536 = vpop.permute.xlu0 %535
  %v538 = vadd.f32 %v239, %v536
  %v539 = vtanh.pop %v538
  %v540 = vsub.f32 1.0, %v526
  %542 = vrot.lane.b32.xlu0 %v539, 96
  %v543 = vpop.permute.xlu0 %542
  %v545 = vmul.f32 %v540, %v543
  %v546 = vrot.slane %v441, 6
  %v548 = vmul.f32 %v526, %v546
  %v549 = vadd.f32 %v545, %v548
  %v551 = vrot.slane %v549, 2
  %552 = vrot.lane.b32.xlu0 %v551, 96
  %v553 = vpop.permute.xlu0 %552
  %v554 = vsel %vm75, %v553, 0
  %556 = vmatprep.subr.mxu0 0.0
  %557 = vmatpush1.msra.mxu0 %v48
  %558 = vmatprep.subr.mxu0 0.0
  %559 = vmatpush1.msra.mxu0 %v49
  %560 = vmatprep.subr.mxu0 0.0
  %561 = vmatpush1.msra.mxu0 %v50
  %562 = vmatprep.subr.mxu0 0.0
  %563 = vmatpush1.msra.mxu0 %v51
  %564 = vmatprep.subr.mxu0 0.0
  %565 = vmatpush1.msra.mxu0 0.0
  %566 = vmatprep.subr.mxu0 0.0
  %567 = vmatpush1.msra.mxu0 0.0
  %568 = vmatprep.subr.mxu0 0.0
  %569 = vmatpush1.msra.mxu0 0.0
  %570 = vmatprep.subr.mxu0 0.0
  %571 = vmatpush1.msra.mxu0 0.0
  %572 = vmatprep.subr.mxu0 0.0
  %573 = vmatpush1.msra.mxu0 0.0
  %574 = vmatprep.subr.mxu0 0.0
  %575 = vmatpush1.msra.mxu0 0.0
  %576 = vmatprep.subr.mxu0 0.0
  %577 = vmatpush1.msra.mxu0 0.0
  %578 = vmatprep.subr.mxu0 0.0
  %579 = vmatpush1.msra.mxu0 0.0
  %580 = vmatprep.subr.mxu0 0.0
  %581 = vmatpush1.msra.mxu0 0.0
  %582 = vmatprep.subr.mxu0 0.0
  %583 = vmatpush1.msra.mxu0 0.0
  %584 = vmatprep.subr.mxu0 0.0
  %585 = vmatpush1.msra.mxu0 0.0
  %586 = vmatprep.subr.mxu0 0.0
  %587 = vmatpush1.msra.mxu0 0.0
  %588 = vmatprep.subr.mxu0 0.0
  %589 = vmatpush1.msra.mxu0 0.0
  %590 = vmatprep.subr.mxu0 0.0
  %591 = vmatpush1.msra.mxu0 0.0
  %592 = vmatprep.subr.mxu0 0.0
  %593 = vmatpush1.msra.mxu0 0.0
  %594 = vmatprep.subr.mxu0 0.0
  %595 = vmatpush1.msra.mxu0 0.0
  %596 = vmatprep.subr.mxu0 0.0
  %597 = vmatpush1.msra.mxu0 0.0
  %598 = vmatprep.subr.mxu0 0.0
  %599 = vmatpush1.msra.mxu0 0.0
  %600 = vmatprep.subr.mxu0 0.0
  %601 = vmatpush1.msra.mxu0 0.0
  %602 = vmatprep.subr.mxu0 0.0
  %603 = vmatpush1.msra.mxu0 0.0
  %604 = vmatprep.subr.mxu0 0.0
  %605 = vmatpush1.msra.mxu0 0.0
  %606 = vmatprep.subr.mxu0 0.0
  %607 = vmatpush1.msra.mxu0 0.0
  %608 = vmatprep.subr.mxu0 0.0
  %609 = vmatpush1.msra.mxu0 0.0
  %610 = vmatprep.subr.mxu0 0.0
  %611 = vmatpush1.msra.mxu0 0.0
  %612 = vmatprep.subr.mxu0 0.0
  %613 = vmatpush1.msra.mxu0 0.0
  %614 = vmatprep.subr.mxu0 0.0
  %615 = vmatpush1.msra.mxu0 0.0
  %616 = vmatprep.subr.mxu0 0.0
  %617 = vmatpush1.msra.mxu0 0.0
  %618 = vmatprep.subr.mxu0 0.0
  %619 = vmatpush1.msra.mxu0 0.0
  %620 = vmatprep.mubr.f32.mxu0 0.0
  %621 = vmatmul.mubr.f32.gmra.mrb[0].mxu0 %v554
  %v622 = vpop.f32.mrb[0].mxu0
  %v623 = vadd.f32 0.0, %v622
  %v624 = vpop.f32.mrb[0].mxu0
  %625 = vdwg.mxu0
  %v627 = vrot.slane %v623, 4
  %v629 = vadd.f32 %v239, %v627
  %v630 = vxor.u32 %v629, 2147483648
  %v631 = vmul.f32 %v630, 1.442695
  %v632 = vpow.pop %v631
  %v633 = vadd.f32 %v632, 1.0
  %v634 = vrcp.pop %v633
  %v635 = vmul.f32 1.0, %v634
  %v636 = vadd.f32 %v623, %v421
  %v638 = vrot.slane %v636, 4
  %639 = vrot.lane.b32.xlu0 %v638, 64
  %v640 = vpop.permute.xlu0 %639
  %v642 = vmul.f32 %v635, %v640
  %644 = vrot.lane.b32.xlu0 %v642, 64
  %v645 = vpop.permute.xlu0 %644
  %v647 = vadd.f32 %v239, %v645
  %v648 = vtanh.pop %v647
  %v649 = vsub.f32 1.0, %v635
  %651 = vrot.lane.b32.xlu0 %v648, 96
  %v652 = vpop.permute.xlu0 %651
  %v654 = vmul.f32 %v649, %v652
  %v655 = vrot.slane %v549, 6
  %v657 = vmul.f32 %v635, %v655
  %v658 = vadd.f32 %v654, %v657
  %v660 = vrot.slane %v658, 4
  %661 = vrot.lane.b32.xlu0 %v660, 96
  %v662 = vpop.permute.xlu0 %661
  %v663 = vsel %vm75, %v662, 0
  %665 = vmatprep.subr.mxu0 0.0
  %666 = vmatpush1.msra.mxu0 %v48
  %667 = vmatprep.subr.mxu0 0.0
  %668 = vmatpush1.msra.mxu0 %v49
  %669 = vmatprep.subr.mxu0 0.0
  %670 = vmatpush1.msra.mxu0 %v50
  %671 = vmatprep.subr.mxu0 0.0
  %672 = vmatpush1.msra.mxu0 %v51
  %673 = vmatprep.subr.mxu0 0.0
  %674 = vmatpush1.msra.mxu0 0.0
  %675 = vmatprep.subr.mxu0 0.0
  %676 = vmatpush1.msra.mxu0 0.0
  %677 = vmatprep.subr.mxu0 0.0
  %678 = vmatpush1.msra.mxu0 0.0
  %679 = vmatprep.subr.mxu0 0.0
  %680 = vmatpush1.msra.mxu0 0.0
  %681 = vmatprep.subr.mxu0 0.0
  %682 = vmatpush1.msra.mxu0 0.0
  %683 = vmatprep.subr.mxu0 0.0
  %684 = vmatpush1.msra.mxu0 0.0
  %685 = vmatprep.subr.mxu0 0.0
  %686 = vmatpush1.msra.mxu0 0.0
  %687 = vmatprep.subr.mxu0 0.0
  %688 = vmatpush1.msra.mxu0 0.0
  %689 = vmatprep.subr.mxu0 0.0
  %690 = vmatpush1.msra.mxu0 0.0
  %691 = vmatprep.subr.mxu0 0.0
  %692 = vmatpush1.msra.mxu0 0.0
  %693 = vmatprep.subr.mxu0 0.0
  %694 = vmatpush1.msra.mxu0 0.0
  %695 = vmatprep.subr.mxu0 0.0
  %696 = vmatpush1.msra.mxu0 0.0
  %697 = vmatprep.subr.mxu0 0.0
  %698 = vmatpush1.msra.mxu0 0.0
  %699 = vmatprep.subr.mxu0 0.0
  %700 = vmatpush1.msra.mxu0 0.0
  %701 = vmatprep.subr.mxu0 0.0
  %702 = vmatpush1.msra.mxu0 0.0
  %703 = vmatprep.subr.mxu0 0.0
  %704 = vmatpush1.msra.mxu0 0.0
  %705 = vmatprep.subr.mxu0 0.0
  %706 = vmatpush1.msra.mxu0 0.0
  %707 = vmatprep.subr.mxu0 0.0
  %708 = vmatpush1.msra.mxu0 0.0
  %709 = vmatprep.subr.mxu0 0.0
  %710 = vmatpush1.msra.mxu0 0.0
  %711 = vmatprep.subr.mxu0 0.0
  %712 = vmatpush1.msra.mxu0 0.0
  %713 = vmatprep.subr.mxu0 0.0
  %714 = vmatpush1.msra.mxu0 0.0
  %715 = vmatprep.subr.mxu0 0.0
  %716 = vmatpush1.msra.mxu0 0.0
  %717 = vmatprep.subr.mxu0 0.0
  %718 = vmatpush1.msra.mxu0 0.0
  %719 = vmatprep.subr.mxu0 0.0
  %720 = vmatpush1.msra.mxu0 0.0
  %721 = vmatprep.subr.mxu0 0.0
  %722 = vmatpush1.msra.mxu0 0.0
  %723 = vmatprep.subr.mxu0 0.0
  %724 = vmatpush1.msra.mxu0 0.0
  %725 = vmatprep.subr.mxu0 0.0
  %726 = vmatpush1.msra.mxu0 0.0
  %727 = vmatprep.subr.mxu0 0.0
  %728 = vmatpush1.msra.mxu0 0.0
  %729 = vmatprep.mubr.f32.mxu0 0.0
  %730 = vmatmul.mubr.f32.gmra.mrb[0].mxu0 %v663
  %v731 = vpop.f32.mrb[0].mxu0
  %v732 = vadd.f32 0.0, %v731
  %v733 = vpop.f32.mrb[0].mxu0
  %734 = vdwg.mxu0
  %v736 = vrot.slane %v732, 2
  %v738 = vadd.f32 %v239, %v736
  %v739 = vxor.u32 %v738, 2147483648
  %v740 = vmul.f32 %v739, 1.442695
  %v741 = vpow.pop %v740
  %v742 = vadd.f32 %v741, 1.0
  %v743 = vrcp.pop %v742
  %v744 = vmul.f32 1.0, %v743
  %v745 = vadd.f32 %v732, %v421
  %v747 = vrot.slane %v745, 2
  %748 = vrot.lane.b32.xlu0 %v747, 64
  %v749 = vpop.permute.xlu0 %748
  %v751 = vmul.f32 %v744, %v749
  %753 = vrot.lane.b32.xlu0 %v751, 64
  %v754 = vpop.permute.xlu0 %753
  %v756 = vadd.f32 %v239, %v754
  %v757 = vtanh.pop %v756
  %v758 = vsub.f32 1.0, %v744
  %760 = vrot.lane.b32.xlu0 %v757, 96
  %v761 = vpop.permute.xlu0 %760
  %v763 = vmul.f32 %v758, %v761
  %v764 = vrot.slane %v658, 6
  %v766 = vmul.f32 %v744, %v764
  %v767 = vadd.f32 %v763, %v766
  %v769 = vrot.slane %v767, 6
  %770 = vrot.lane.b32.xlu0 %v769, 96
  %v771 = vpop.permute.xlu0 %770
  %v772 = vsel %vm75, %v771, 0
  %774 = vmatprep.subr.mxu0 0.0
  %775 = vmatpush1.msra.mxu0 %v48
  %776 = vmatprep.subr.mxu0 0.0
  %777 = vmatpush1.msra.mxu0 %v49
  %778 = vmatprep.subr.mxu0 0.0
  %779 = vmatpush1.msra.mxu0 %v50
  %780 = vmatprep.subr.mxu0 0.0
  %781 = vmatpush1.msra.mxu0 %v51
  %782 = vmatprep.subr.mxu0 0.0
  %783 = vmatpush1.msra.mxu0 0.0
  %784 = vmatprep.subr.mxu0 0.0
  %785 = vmatpush1.msra.mxu0 0.0
  %786 = vmatprep.subr.mxu0 0.0
  %787 = vmatpush1.msra.mxu0 0.0
  %788 = vmatprep.subr.mxu0 0.0
  %789 = vmatpush1.msra.mxu0 0.0
  %790 = vmatprep.subr.mxu0 0.0
  %791 = vmatpush1.msra.mxu0 0.0
  %792 = vmatprep.subr.mxu0 0.0
  %793 = vmatpush1.msra.mxu0 0.0
  %794 = vmatprep.subr.mxu0 0.0
  %795 = vmatpush1.msra.mxu0 0.0
  %796 = vmatprep.subr.mxu0 0.0
  %797 = vmatpush1.msra.mxu0 0.0
  %798 = vmatprep.subr.mxu0 0.0
  %799 = vmatpush1.msra.mxu0 0.0
  %800 = vmatprep.subr.mxu0 0.0
  %801 = vmatpush1.msra.mxu0 0.0
  %802 = vmatprep.subr.mxu0 0.0
  %803 = vmatpush1.msra.mxu0 0.0
  %804 = vmatprep.subr.mxu0 0.0
  %805 = vmatpush1.msra.mxu0 0.0
  %806 = vmatprep.subr.mxu0 0.0
  %807 = vmatpush1.msra.mxu0 0.0
  %808 = vmatprep.subr.mxu0 0.0
  %809 = vmatpush1.msra.mxu0 0.0
  %810 = vmatprep.subr.mxu0 0.0
  %811 = vmatpush1.msra.mxu0 0.0
  %812 = vmatprep.subr.mxu0 0.0
  %813 = vmatpush1.msra.mxu0 0.0
  %814 = vmatprep.subr.mxu0 0.0
  %815 = vmatpush1.msra.mxu0 0.0
  %816 = vmatprep.subr.mxu0 0.0
  %817 = vmatpush1.msra.mxu0 0.0
  %818 = vmatprep.subr.mxu0 0.0
  %819 = vmatpush1.msra.mxu0 0.0
  %820 = vmatprep.subr.mxu0 0.0
  %821 = vmatpush1.msra.mxu0 0.0
  %822 = vmatprep.subr.mxu0 0.0
  %823 = vmatpush1.msra.mxu0 0.0
  %824 = vmatprep.subr.mxu0 0.0
  %825 = vmatpush1.msra.mxu0 0.0
  %826 = vmatprep.subr.mxu0 0.0
  %827 = vmatpush1.msra.mxu0 0.0
  %828 = vmatprep.subr.mxu0 0.0
  %829 = vmatpush1.msra.mxu0 0.0
  %830 = vmatprep.subr.mxu0 0.0
  %831 = vmatpush1.msra.mxu0 0.0
  %832 = vmatprep.subr.mxu0 0.0
  %833 = vmatpush1.msra.mxu0 0.0
  %834 = vmatprep.subr.mxu0 0.0
  %835 = vmatpush1.msra.mxu0 0.0
  %836 = vmatprep.subr.mxu0 0.0
  %837 = vmatpush1.msra.mxu0 0.0
  %838 = vmatprep.mubr.f32.mxu0 0.0
  %839 = vmatmul.mubr.f32.gmra.mrb[0].mxu0 %v772
  %v840 = vpop.f32.mrb[0].mxu0
  %v841 = vadd.f32 0.0, %v840
  %v842 = vpop.f32.mrb[0].mxu0
  %843 = vdwg.mxu0
  %v844 = vadd.f32 %v244, %v841
  %v845 = vxor.u32 %v844, 2147483648
  %v846 = vmul.f32 %v845, 1.442695
  %v847 = vpow.pop %v846
  %v848 = vadd.f32 %v847, 1.0
  %v849 = vrcp.pop %v848
  %v850 = vmul.f32 1.0, %v849
  %v851 = vadd.f32 %v841, %v421
  %853 = vrot.lane.b32.xlu0 %v851, 64
  %v854 = vpop.permute.xlu0 %853
  %v856 = vmul.f32 %v850, %v854
  %858 = vrot.lane.b32.xlu0 %v856, 64
  %v859 = vpop.permute.xlu0 %858
  %v861 = vadd.f32 %v244, %v859
  %v862 = vtanh.pop %v861
  %v863 = vsub.f32 1.0, %v850
  %865 = vrot.lane.b32.xlu0 %v862, 96
  %v866 = vpop.permute.xlu0 %865
  %v868 = vmul.f32 %v863, %v866
  %v870 = vmul.f32 %v850, %v769
  %v871 = vadd.f32 %v868, %v870
  %873 = vrot.lane.b32.xlu0 %v871, 96
  %v874 = vpop.permute.xlu0 %873
  %v875 = vsel %vm75, %v874, 0
  %877 = vmatprep.subr.mxu0 0.0
  %878 = vmatpush1.msra.mxu0 %v48
  %879 = vmatprep.subr.mxu0 0.0
  %880 = vmatpush1.msra.mxu0 %v49
  %881 = vmatprep.subr.mxu0 0.0
  %882 = vmatpush1.msra.mxu0 %v50
  %883 = vmatprep.subr.mxu0 0.0
  %884 = vmatpush1.msra.mxu0 %v51
  %885 = vmatprep.subr.mxu0 0.0
  %886 = vmatpush1.msra.mxu0 0.0
  %887 = vmatprep.subr.mxu0 0.0
  %888 = vmatpush1.msra.mxu0 0.0
  %889 = vmatprep.subr.mxu0 0.0
  %890 = vmatpush1.msra.mxu0 0.0
  %891 = vmatprep.subr.mxu0 0.0
  %892 = vmatpush1.msra.mxu0 0.0
  %893 = vmatprep.subr.mxu0 0.0
  %894 = vmatpush1.msra.mxu0 0.0
  %895 = vmatprep.subr.mxu0 0.0
  %896 = vmatpush1.msra.mxu0 0.0
  %897 = vmatprep.subr.mxu0 0.0
  %898 = vmatpush1.msra.mxu0 0.0
  %899 = vmatprep.subr.mxu0 0.0
  %900 = vmatpush1.msra.mxu0 0.0
  %901 = vmatprep.subr.mxu0 0.0
  %902 = vmatpush1.msra.mxu0 0.0
  %903 = vmatprep.subr.mxu0 0.0
  %904 = vmatpush1.msra.mxu0 0.0
  %905 = vmatprep.subr.mxu0 0.0
  %906 = vmatpush1.msra.mxu0 0.0
  %907 = vmatprep.subr.mxu0 0.0
  %908 = vmatpush1.msra.mxu0 0.0
  %909 = vmatprep.subr.mxu0 0.0
  %910 = vmatpush1.msra.mxu0 0.0
  %911 = vmatprep.subr.mxu0 0.0
  %912 = vmatpush1.msra.mxu0 0.0
  %913 = vmatprep.subr.mxu0 0.0
  %914 = vmatpush1.msra.mxu0 0.0
  %915 = vmatprep.subr.mxu0 0.0
  %916 = vmatpush1.msra.mxu0 0.0
  %917 = vmatprep.subr.mxu0 0.0
  %918 = vmatpush1.msra.mxu0 0.0
  %919 = vmatprep.subr.mxu0 0.0
  %920 = vmatpush1.msra.mxu0 0.0
  %921 = vmatprep.subr.mxu0 0.0
  %922 = vmatpush1.msra.mxu0 0.0
  %923 = vmatprep.subr.mxu0 0.0
  %924 = vmatpush1.msra.mxu0 0.0
  %925 = vmatprep.subr.mxu0 0.0
  %926 = vmatpush1.msra.mxu0 0.0
  %927 = vmatprep.subr.mxu0 0.0
  %928 = vmatpush1.msra.mxu0 0.0
  %929 = vmatprep.subr.mxu0 0.0
  %930 = vmatpush1.msra.mxu0 0.0
  %931 = vmatprep.subr.mxu0 0.0
  %932 = vmatpush1.msra.mxu0 0.0
  %933 = vmatprep.subr.mxu0 0.0
  %934 = vmatpush1.msra.mxu0 0.0
  %935 = vmatprep.subr.mxu0 0.0
  %936 = vmatpush1.msra.mxu0 0.0
  %937 = vmatprep.subr.mxu0 0.0
  %938 = vmatpush1.msra.mxu0 0.0
  %939 = vmatprep.subr.mxu0 0.0
  %940 = vmatpush1.msra.mxu0 0.0
  %941 = vmatprep.mubr.f32.mxu0 0.0
  %942 = vmatmul.mubr.f32.gmra.mrb[0].mxu0 %v875
  %v943 = vpop.f32.mrb[0].mxu0
  %v944 = vadd.f32 0.0, %v943
  %v945 = vpop.f32.mrb[0].mxu0
  %946 = vdwg.mxu0
  %v948 = vrot.slane %v944, 6
  %v950 = vadd.f32 %v244, %v948
  %v951 = vxor.u32 %v950, 2147483648
  %v952 = vmul.f32 %v951, 1.442695
  %v953 = vpow.pop %v952
  %v954 = vadd.f32 %v953, 1.0
  %v955 = vrcp.pop %v954
  %v956 = vmul.f32 1.0, %v955
  %v957 = vadd.f32 %v944, %v421
  %v959 = vrot.slane %v957, 6
  %960 = vrot.lane.b32.xlu0 %v959, 64
  %v961 = vpop.permute.xlu0 %960
  %v963 = vmul.f32 %v956, %v961
  %965 = vrot.lane.b32.xlu0 %v963, 64
  %v966 = vpop.permute.xlu0 %965
  %v968 = vadd.f32 %v244, %v966
  %v969 = vtanh.pop %v968
  %v970 = vsub.f32 1.0, %v956
  %972 = vrot.lane.b32.xlu0 %v969, 96
  %v973 = vpop.permute.xlu0 %972
  %v975 = vmul.f32 %v970, %v973
  %v976 = vrot.slane %v871, 6
  %v978 = vmul.f32 %v956, %v976
  %v979 = vadd.f32 %v975, %v978
  %v981 = vrot.slane %v979, 2
  %982 = vrot.lane.b32.xlu0 %v981, 96
  %v983 = vpop.permute.xlu0 %982
  %v984 = vsel %vm75, %v983, 0
  %986 = vmatprep.subr.mxu0 0.0
  %987 = vmatpush1.msra.mxu0 %v48
  %988 = vmatprep.subr.mxu0 0.0
  %989 = vmatpush1.msra.mxu0 %v49
  %990 = vmatprep.subr.mxu0 0.0
  %991 = vmatpush1.msra.mxu0 %v50
  %992 = vmatprep.subr.mxu0 0.0
  %993 = vmatpush1.msra.mxu0 %v51
  %994 = vmatprep.subr.mxu0 0.0
  %995 = vmatpush1.msra.mxu0 0.0
  %996 = vmatprep.subr.mxu0 0.0
  %997 = vmatpush1.msra.mxu0 0.0
  %998 = vmatprep.subr.mxu0 0.0
  %999 = vmatpush1.msra.mxu0 0.0
  %1000 = vmatprep.subr.mxu0 0.0
  %1001 = vmatpush1.msra.mxu0 0.0
  %1002 = vmatprep.subr.mxu0 0.0
  %1003 = vmatpush1.msra.mxu0 0.0
  %1004 = vmatprep.subr.mxu0 0.0
  %1005 = vmatpush1.msra.mxu0 0.0
  %1006 = vmatprep.subr.mxu0 0.0
  %1007 = vmatpush1.msra.mxu0 0.0
  %1008 = vmatprep.subr.mxu0 0.0
  %1009 = vmatpush1.msra.mxu0 0.0
  %1010 = vmatprep.subr.mxu0 0.0
  %1011 = vmatpush1.msra.mxu0 0.0
  %1012 = vmatprep.subr.mxu0 0.0
  %1013 = vmatpush1.msra.mxu0 0.0
  %1014 = vmatprep.subr.mxu0 0.0
  %1015 = vmatpush1.msra.mxu0 0.0
  %1016 = vmatprep.subr.mxu0 0.0
  %1017 = vmatpush1.msra.mxu0 0.0
  %1018 = vmatprep.subr.mxu0 0.0
  %1019 = vmatpush1.msra.mxu0 0.0
  %1020 = vmatprep.subr.mxu0 0.0
  %1021 = vmatpush1.msra.mxu0 0.0
  %1022 = vmatprep.subr.mxu0 0.0
  %1023 = vmatpush1.msra.mxu0 0.0
  %1024 = vmatprep.subr.mxu0 0.0
  %1025 = vmatpush1.msra.mxu0 0.0
  %1026 = vmatprep.subr.mxu0 0.0
  %1027 = vmatpush1.msra.mxu0 0.0
  %1028 = vmatprep.subr.mxu0 0.0
  %1029 = vmatpush1.msra.mxu0 0.0
  %1030 = vmatprep.subr.mxu0 0.0
  %1031 = vmatpush1.msra.mxu0 0.0
  %1032 = vmatprep.subr.mxu0 0.0
  %1033 = vmatpush1.msra.mxu0 0.0
  %1034 = vmatprep.subr.mxu0 0.0
  %1035 = vmatpush1.msra.mxu0 0.0
  %1036 = vmatprep.subr.mxu0 0.0
  %1037 = vmatpush1.msra.mxu0 0.0
  %1038 = vmatprep.subr.mxu0 0.0
  %1039 = vmatpush1.msra.mxu0 0.0
  %1040 = vmatprep.subr.mxu0 0.0
  %1041 = vmatpush1.msra.mxu0 0.0
  %1042 = vmatprep.subr.mxu0 0.0
  %1043 = vmatpush1.msra.mxu0 0.0
  %1044 = vmatprep.subr.mxu0 0.0
  %1045 = vmatpush1.msra.mxu0 0.0
  %1046 = vmatprep.subr.mxu0 0.0
  %1047 = vmatpush1.msra.mxu0 0.0
  %1048 = vmatprep.subr.mxu0 0.0
  %1049 = vmatpush1.msra.mxu0 0.0
  %1050 = vmatprep.mubr.f32.mxu0 0.0
  %1051 = vmatmul.mubr.f32.gmra.mrb[0].mxu0 %v984
  %v1052 = vpop.f32.mrb[0].mxu0
  %v1053 = vadd.f32 0.0, %v1052
  %v1054 = vpop.f32.mrb[0].mxu0
  %1055 = vdwg.mxu0
  %v1057 = vrot.slane %v1053, 4
  %v1059 = vadd.f32 %v244, %v1057
  %v1060 = vxor.u32 %v1059, 2147483648
  %v1061 = vmul.f32 %v1060, 1.442695
  %v1062 = vpow.pop %v1061
  %v1063 = vadd.f32 %v1062, 1.0
  %v1064 = vrcp.pop %v1063
  %v1065 = vmul.f32 1.0, %v1064
  %v1066 = vadd.f32 %v1053, %v421
  %v1068 = vrot.slane %v1066, 4
  %1069 = vrot.lane.b32.xlu0 %v1068, 64
  %v1070 = vpop.permute.xlu0 %1069
  %v1072 = vmul.f32 %v1065, %v1070
  %1074 = vrot.lane.b32.xlu0 %v1072, 64
  %v1075 = vpop.permute.xlu0 %1074
  %v1077 = vadd.f32 %v244, %v1075
  %v1078 = vtanh.pop %v1077
  %v1079 = vsub.f32 1.0, %v1065
  %1081 = vrot.lane.b32.xlu0 %v1078, 96
  %v1082 = vpop.permute.xlu0 %1081
  %v1084 = vmul.f32 %v1079, %v1082
  %v1085 = vrot.slane %v979, 6
  %v1087 = vmul.f32 %v1065, %v1085
  %v1088 = vadd.f32 %v1084, %v1087
  %v1090 = vrot.slane %v1088, 4
  %1091 = vrot.lane.b32.xlu0 %v1090, 96
  %v1092 = vpop.permute.xlu0 %1091
  %v1093 = vsel %vm75, %v1092, 0
  %1095 = vmatprep.subr.mxu0 0.0
  %1096 = vmatpush1.msra.mxu0 %v48
  %1097 = vmatprep.subr.mxu0 0.0
  %1098 = vmatpush1.msra.mxu0 %v49
  %1099 = vmatprep.subr.mxu0 0.0
  %1100 = vmatpush1.msra.mxu0 %v50
  %1101 = vmatprep.subr.mxu0 0.0
  %1102 = vmatpush1.msra.mxu0 %v51
  %1103 = vmatprep.subr.mxu0 0.0
  %1104 = vmatpush1.msra.mxu0 0.0
  %1105 = vmatprep.subr.mxu0 0.0
  %1106 = vmatpush1.msra.mxu0 0.0
  %1107 = vmatprep.subr.mxu0 0.0
  %1108 = vmatpush1.msra.mxu0 0.0
  %1109 = vmatprep.subr.mxu0 0.0
  %1110 = vmatpush1.msra.mxu0 0.0
  %1111 = vmatprep.subr.mxu0 0.0
  %1112 = vmatpush1.msra.mxu0 0.0
  %1113 = vmatprep.subr.mxu0 0.0
  %1114 = vmatpush1.msra.mxu0 0.0
  %1115 = vmatprep.subr.mxu0 0.0
  %1116 = vmatpush1.msra.mxu0 0.0
  %1117 = vmatprep.subr.mxu0 0.0
  %1118 = vmatpush1.msra.mxu0 0.0
  %1119 = vmatprep.subr.mxu0 0.0
  %1120 = vmatpush1.msra.mxu0 0.0
  %1121 = vmatprep.subr.mxu0 0.0
  %1122 = vmatpush1.msra.mxu0 0.0
  %1123 = vmatprep.subr.mxu0 0.0
  %1124 = vmatpush1.msra.mxu0 0.0
  %1125 = vmatprep.subr.mxu0 0.0
  %1126 = vmatpush1.msra.mxu0 0.0
  %1127 = vmatprep.subr.mxu0 0.0
  %1128 = vmatpush1.msra.mxu0 0.0
  %1129 = vmatprep.subr.mxu0 0.0
  %1130 = vmatpush1.msra.mxu0 0.0
  %1131 = vmatprep.subr.mxu0 0.0
  %1132 = vmatpush1.msra.mxu0 0.0
  %1133 = vmatprep.subr.mxu0 0.0
  %1134 = vmatpush1.msra.mxu0 0.0
  %1135 = vmatprep.subr.mxu0 0.0
  %1136 = vmatpush1.msra.mxu0 0.0
  %1137 = vmatprep.subr.mxu0 0.0
  %1138 = vmatpush1.msra.mxu0 0.0
  %1139 = vmatprep.subr.mxu0 0.0
  %1140 = vmatpush1.msra.mxu0 0.0
  %1141 = vmatprep.subr.mxu0 0.0
  %1142 = vmatpush1.msra.mxu0 0.0
  %1143 = vmatprep.subr.mxu0 0.0
  %1144 = vmatpush1.msra.mxu0 0.0
  %1145 = vmatprep.subr.mxu0 0.0
  %1146 = vmatpush1.msra.mxu0 0.0
  %1147 = vmatprep.subr.mxu0 0.0
  %1148 = vmatpush1.msra.mxu0 0.0
  %1149 = vmatprep.subr.mxu0 0.0
  %1150 = vmatpush1.msra.mxu0 0.0
  %1151 = vmatprep.subr.mxu0 0.0
  %1152 = vmatpush1.msra.mxu0 0.0
  %1153 = vmatprep.subr.mxu0 0.0
  %1154 = vmatpush1.msra.mxu0 0.0
  %1155 = vmatprep.subr.mxu0 0.0
  %1156 = vmatpush1.msra.mxu0 0.0
  %1157 = vmatprep.subr.mxu0 0.0
  %1158 = vmatpush1.msra.mxu0 0.0
  %1159 = vmatprep.mubr.f32.mxu0 0.0
  %1160 = vmatmul.mubr.f32.gmra.mrb[0].mxu0 %v1093
  %v1161 = vpop.f32.mrb[0].mxu0
  %v1162 = vadd.f32 0.0, %v1161
  %v1163 = vpop.f32.mrb[0].mxu0
  %1164 = vdwg.mxu0
  %v1166 = vrot.slane %v1162, 2
  %v1168 = vadd.f32 %v244, %v1166
  %v1169 = vxor.u32 %v1168, 2147483648
  %v1170 = vmul.f32 %v1169, 1.442695
  %v1171 = vpow.pop %v1170
  %v1172 = vadd.f32 %v1171, 1.0
  %v1173 = vrcp.pop %v1172
  %v1174 = vmul.f32 1.0, %v1173
  %v1175 = vadd.f32 %v1162, %v421
  %v1177 = vrot.slane %v1175, 2
  %1178 = vrot.lane.b32.xlu0 %v1177, 64
  %v1179 = vpop.permute.xlu0 %1178
  %v1181 = vmul.f32 %v1174, %v1179
  %1183 = vrot.lane.b32.xlu0 %v1181, 64
  %v1184 = vpop.permute.xlu0 %1183
  %v1186 = vadd.f32 %v244, %v1184
  %v1187 = vtanh.pop %v1186
  %v1188 = vsub.f32 1.0, %v1174
  %1190 = vrot.lane.b32.xlu0 %v1187, 96
  %v1191 = vpop.permute.xlu0 %1190
  %v1193 = vmul.f32 %v1188, %v1191
  %v1194 = vrot.slane %v1088, 6
  %v1196 = vmul.f32 %v1174, %v1194
  %v1197 = vadd.f32 %v1193, %v1196
  %v1198 = vsel %vm160, %v441, %v549
  %v1199 = vsel %vm162, %v1198, %v658
  %v1200 = vsel %vm164, %v1199, %v767
  %v1201 = vsel %vm160, %v871, %v979
  %v1202 = vsel %vm162, %v1201, %v1088
  %v1203 = vsel %vm164, %v1202, %v1197
  %v1205 = vrot.slane %v1197, 6
  %1206 = vrot.lane.b32.xlu0 %v1205, 96
  %v1207 = vpop.permute.xlu0 %1206
  %v1208 = vsel %vm75, %v1207, 0
  %1210 = vmatprep.subr.mxu0 0.0
  %1211 = vmatpush1.msra.mxu0 %v56
  %1212 = vmatprep.subr.mxu0 0.0
  %1213 = vmatpush1.msra.mxu0 %v57
  %1214 = vmatprep.subr.mxu0 0.0
  %1215 = vmatpush1.msra.mxu0 %v58
  %1216 = vmatprep.subr.mxu0 0.0
  %1217 = vmatpush1.msra.mxu0 %v59
  %1218 = vmatprep.subr.mxu0 0.0
  %1219 = vmatpush1.msra.mxu0 0.0
  %1220 = vmatprep.subr.mxu0 0.0
  %1221 = vmatpush1.msra.mxu0 0.0
  %1222 = vmatprep.subr.mxu0 0.0
  %1223 = vmatpush1.msra.mxu0 0.0
  %1224 = vmatprep.subr.mxu0 0.0
  %1225 = vmatpush1.msra.mxu0 0.0
  %1226 = vmatprep.subr.mxu0 0.0
  %1227 = vmatpush1.msra.mxu0 0.0
  %1228 = vmatprep.subr.mxu0 0.0
  %1229 = vmatpush1.msra.mxu0 0.0
  %1230 = vmatprep.subr.mxu0 0.0
  %1231 = vmatpush1.msra.mxu0 0.0
  %1232 = vmatprep.subr.mxu0 0.0
  %1233 = vmatpush1.msra.mxu0 0.0
  %1234 = vmatprep.subr.mxu0 0.0
  %1235 = vmatpush1.msra.mxu0 0.0
  %1236 = vmatprep.subr.mxu0 0.0
  %1237 = vmatpush1.msra.mxu0 0.0
  %1238 = vmatprep.subr.mxu0 0.0
  %1239 = vmatpush1.msra.mxu0 0.0
  %1240 = vmatprep.subr.mxu0 0.0
  %1241 = vmatpush1.msra.mxu0 0.0
  %1242 = vmatprep.subr.mxu0 0.0
  %1243 = vmatpush1.msra.mxu0 0.0
  %1244 = vmatprep.subr.mxu0 0.0
  %1245 = vmatpush1.msra.mxu0 0.0
  %1246 = vmatprep.subr.mxu0 0.0
  %1247 = vmatpush1.msra.mxu0 0.0
  %1248 = vmatprep.subr.mxu0 0.0
  %1249 = vmatpush1.msra.mxu0 0.0
  %1250 = vmatprep.subr.mxu0 0.0
  %1251 = vmatpush1.msra.mxu0 0.0
  %1252 = vmatprep.subr.mxu0 0.0
  %1253 = vmatpush1.msra.mxu0 0.0
  %1254 = vmatprep.subr.mxu0 0.0
  %1255 = vmatpush1.msra.mxu0 0.0
  %1256 = vmatprep.subr.mxu0 0.0
  %1257 = vmatpush1.msra.mxu0 0.0
  %1258 = vmatprep.subr.mxu0 0.0
  %1259 = vmatpush1.msra.mxu0 0.0
  %1260 = vmatprep.subr.mxu0 0.0
  %1261 = vmatpush1.msra.mxu0 0.0
  %1262 = vmatprep.subr.mxu0 0.0
  %1263 = vmatpush1.msra.mxu0 0.0
  %1264 = vmatprep.subr.mxu0 0.0
  %1265 = vmatpush1.msra.mxu0 0.0
  %1266 = vmatprep.subr.mxu0 0.0
  %1267 = vmatpush1.msra.mxu0 0.0
  %1268 = vmatprep.subr.mxu0 0.0
  %1269 = vmatpush1.msra.mxu0 0.0
  %1270 = vmatprep.subr.mxu0 0.0
  %1271 = vmatpush1.msra.mxu0 0.0
  %1272 = vmatprep.subr.mxu0 0.0
  %1273 = vmatpush1.msra.mxu0 0.0
  %1274 = vmatprep.mubr.f32.mxu0 0.0
  %1275 = vmatmul.mubr.f32.gmra.mrb[0].mxu0 %v1208
  %v1276 = vpop.f32.mrb[0].mxu0
  %v1277 = vadd.f32 0.0, %v1276
  %v1278 = vpop.f32.mrb[0].mxu0
  %1279 = vdwg.mxu0
  %v1280 = vadd.f32 %v336, %v1277
  %v1281 = vxor.u32 %v1280, 2147483648
  %v1282 = vmul.f32 %v1281, 1.442695
  %v1283 = vpow.pop %v1282
  %v1284 = vadd.f32 %v1283, 1.0
  %v1285 = vrcp.pop %v1284
  %v1286 = vmul.f32 1.0, %v1285
  %v1287 = vlaneseq
  %v1288 = vshrl.u32 %v1287, 7
  %v1289 = vsub.s32 3, %v1288
  %v1290 = vrot.slane %v60, %v1289
  %v1291 = vadd.f32 %v1277, %v1290
  %1293 = vrot.lane.b32.xlu0 %v1291, 64
  %v1294 = vpop.permute.xlu0 %1293
  %v1296 = vmul.f32 %v1286, %v1294
  %1298 = vrot.lane.b32.xlu0 %v1296, 64
  %v1299 = vpop.permute.xlu0 %1298
  %v1301 = vadd.f32 %v336, %v1299
  %v1302 = vtanh.pop %v1301
  %v1303 = vsub.f32 1.0, %v1286
  %1305 = vrot.lane.b32.xlu0 %v1302, 96
  %v1306 = vpop.permute.xlu0 %1305
  %v1308 = vmul.f32 %v1303, %v1306
  %v1310 = vmul.f32 %v1286, %v1205
  %v1311 = vadd.f32 %v1308, %v1310
  %1313 = vrot.lane.b32.xlu0 %v1311, 96
  %v1314 = vpop.permute.xlu0 %1313
  %v1315 = vsel %vm75, %v1314, 0
  %1317 = vmatprep.subr.mxu0 0.0
  %1318 = vmatpush1.msra.mxu0 %v56
  %1319 = vmatprep.subr.mxu0 0.0
  %1320 = vmatpush1.msra.mxu0 %v57
  %1321 = vmatprep.subr.mxu0 0.0
  %1322 = vmatpush1.msra.mxu0 %v58
  %1323 = vmatprep.subr.mxu0 0.0
  %1324 = vmatpush1.msra.mxu0 %v59
  %1325 = vmatprep.subr.mxu0 0.0
  %1326 = vmatpush1.msra.mxu0 0.0
  %1327 = vmatprep.subr.mxu0 0.0
  %1328 = vmatpush1.msra.mxu0 0.0
  %1329 = vmatprep.subr.mxu0 0.0
  %1330 = vmatpush1.msra.mxu0 0.0
  %1331 = vmatprep.subr.mxu0 0.0
  %1332 = vmatpush1.msra.mxu0 0.0
  %1333 = vmatprep.subr.mxu0 0.0
  %1334 = vmatpush1.msra.mxu0 0.0
  %1335 = vmatprep.subr.mxu0 0.0
  %1336 = vmatpush1.msra.mxu0 0.0
  %1337 = vmatprep.subr.mxu0 0.0
  %1338 = vmatpush1.msra.mxu0 0.0
  %1339 = vmatprep.subr.mxu0 0.0
  %1340 = vmatpush1.msra.mxu0 0.0
  %1341 = vmatprep.subr.mxu0 0.0
  %1342 = vmatpush1.msra.mxu0 0.0
  %1343 = vmatprep.subr.mxu0 0.0
  %1344 = vmatpush1.msra.mxu0 0.0
  %1345 = vmatprep.subr.mxu0 0.0
  %1346 = vmatpush1.msra.mxu0 0.0
  %1347 = vmatprep.subr.mxu0 0.0
  %1348 = vmatpush1.msra.mxu0 0.0
  %1349 = vmatprep.subr.mxu0 0.0
  %1350 = vmatpush1.msra.mxu0 0.0
  %1351 = vmatprep.subr.mxu0 0.0
  %1352 = vmatpush1.msra.mxu0 0.0
  %1353 = vmatprep.subr.mxu0 0.0
  %1354 = vmatpush1.msra.mxu0 0.0
  %1355 = vmatprep.subr.mxu0 0.0
  %1356 = vmatpush1.msra.mxu0 0.0
  %1357 = vmatprep.subr.mxu0 0.0
  %1358 = vmatpush1.msra.mxu0 0.0
  %1359 = vmatprep.subr.mxu0 0.0
  %1360 = vmatpush1.msra.mxu0 0.0
  %1361 = vmatprep.subr.mxu0 0.0
  %1362 = vmatpush1.msra.mxu0 0.0
  %1363 = vmatprep.subr.mxu0 0.0
  %1364 = vmatpush1.msra.mxu0 0.0
  %1365 = vmatprep.subr.mxu0 0.0
  %1366 = vmatpush1.msra.mxu0 0.0
  %1367 = vmatprep.subr.mxu0 0.0
  %1368 = vmatpush1.msra.mxu0 0.0
  %1369 = vmatprep.subr.mxu0 0.0
  %1370 = vmatpush1.msra.mxu0 0.0
  %1371 = vmatprep.subr.mxu0 0.0
  %1372 = vmatpush1.msra.mxu0 0.0
  %1373 = vmatprep.subr.mxu0 0.0
  %1374 = vmatpush1.msra.mxu0 0.0
  %1375 = vmatprep.subr.mxu0 0.0
  %1376 = vmatpush1.msra.mxu0 0.0
  %1377 = vmatprep.subr.mxu0 0.0
  %1378 = vmatpush1.msra.mxu0 0.0
  %1379 = vmatprep.subr.mxu0 0.0
  %1380 = vmatpush1.msra.mxu0 0.0
  %1381 = vmatprep.mubr.f32.mxu0 0.0
  %1382 = vmatmul.mubr.f32.gmra.mrb[0].mxu0 %v1315
  %v1383 = vpop.f32.mrb[0].mxu0
  %v1384 = vadd.f32 0.0, %v1383
  %v1385 = vpop.f32.mrb[0].mxu0
  %1386 = vdwg.mxu0
  %v1388 = vrot.slane %v1384, 6
  %v1390 = vadd.f32 %v336, %v1388
  %v1391 = vxor.u32 %v1390, 2147483648
  %v1392 = vmul.f32 %v1391, 1.442695
  %v1393 = vpow.pop %v1392
  %v1394 = vadd.f32 %v1393, 1.0
  %v1395 = vrcp.pop %v1394
  %v1396 = vmul.f32 1.0, %v1395
  %v1397 = vadd.f32 %v1384, %v1290
  %v1399 = vrot.slane %v1397, 6
  %1400 = vrot.lane.b32.xlu0 %v1399, 64
  %v1401 = vpop.permute.xlu0 %1400
  %v1403 = vmul.f32 %v1396, %v1401
  %1405 = vrot.lane.b32.xlu0 %v1403, 64
  %v1406 = vpop.permute.xlu0 %1405
  %v1408 = vadd.f32 %v336, %v1406
  %v1409 = vtanh.pop %v1408
  %v1410 = vsub.f32 1.0, %v1396
  %1412 = vrot.lane.b32.xlu0 %v1409, 96
  %v1413 = vpop.permute.xlu0 %1412
  %v1415 = vmul.f32 %v1410, %v1413
  %v1416 = vrot.slane %v1311, 6
  %v1418 = vmul.f32 %v1396, %v1416
  %v1419 = vadd.f32 %v1415, %v1418
  %v1421 = vrot.slane %v1419, 2
  %1422 = vrot.lane.b32.xlu0 %v1421, 96
  %v1423 = vpop.permute.xlu0 %1422
  %v1424 = vsel %vm75, %v1423, 0
  %1426 = vmatprep.subr.mxu0 0.0
  %1427 = vmatpush1.msra.mxu0 %v56
  %1428 = vmatprep.subr.mxu0 0.0
  %1429 = vmatpush1.msra.mxu0 %v57
  %1430 = vmatprep.subr.mxu0 0.0
  %1431 = vmatpush1.msra.mxu0 %v58
  %1432 = vmatprep.subr.mxu0 0.0
  %1433 = vmatpush1.msra.mxu0 %v59
  %1434 = vmatprep.subr.mxu0 0.0
  %1435 = vmatpush1.msra.mxu0 0.0
  %1436 = vmatprep.subr.mxu0 0.0
  %1437 = vmatpush1.msra.mxu0 0.0
  %1438 = vmatprep.subr.mxu0 0.0
  %1439 = vmatpush1.msra.mxu0 0.0
  %1440 = vmatprep.subr.mxu0 0.0
  %1441 = vmatpush1.msra.mxu0 0.0
  %1442 = vmatprep.subr.mxu0 0.0
  %1443 = vmatpush1.msra.mxu0 0.0
  %1444 = vmatprep.subr.mxu0 0.0
  %1445 = vmatpush1.msra.mxu0 0.0
  %1446 = vmatprep.subr.mxu0 0.0
  %1447 = vmatpush1.msra.mxu0 0.0
  %1448 = vmatprep.subr.mxu0 0.0
  %1449 = vmatpush1.msra.mxu0 0.0
  %1450 = vmatprep.subr.mxu0 0.0
  %1451 = vmatpush1.msra.mxu0 0.0
  %1452 = vmatprep.subr.mxu0 0.0
  %1453 = vmatpush1.msra.mxu0 0.0
  %1454 = vmatprep.subr.mxu0 0.0
  %1455 = vmatpush1.msra.mxu0 0.0
  %1456 = vmatprep.subr.mxu0 0.0
  %1457 = vmatpush1.msra.mxu0 0.0
  %1458 = vmatprep.subr.mxu0 0.0
  %1459 = vmatpush1.msra.mxu0 0.0
  %1460 = vmatprep.subr.mxu0 0.0
  %1461 = vmatpush1.msra.mxu0 0.0
  %1462 = vmatprep.subr.mxu0 0.0
  %1463 = vmatpush1.msra.mxu0 0.0
  %1464 = vmatprep.subr.mxu0 0.0
  %1465 = vmatpush1.msra.mxu0 0.0
  %1466 = vmatprep.subr.mxu0 0.0
  %1467 = vmatpush1.msra.mxu0 0.0
  %1468 = vmatprep.subr.mxu0 0.0
  %1469 = vmatpush1.msra.mxu0 0.0
  %1470 = vmatprep.subr.mxu0 0.0
  %1471 = vmatpush1.msra.mxu0 0.0
  %1472 = vmatprep.subr.mxu0 0.0
  %1473 = vmatpush1.msra.mxu0 0.0
  %1474 = vmatprep.subr.mxu0 0.0
  %1475 = vmatpush1.msra.mxu0 0.0
  %1476 = vmatprep.subr.mxu0 0.0
  %1477 = vmatpush1.msra.mxu0 0.0
  %1478 = vmatprep.subr.mxu0 0.0
  %1479 = vmatpush1.msra.mxu0 0.0
  %1480 = vmatprep.subr.mxu0 0.0
  %1481 = vmatpush1.msra.mxu0 0.0
  %1482 = vmatprep.subr.mxu0 0.0
  %1483 = vmatpush1.msra.mxu0 0.0
  %1484 = vmatprep.subr.mxu0 0.0
  %1485 = vmatpush1.msra.mxu0 0.0
  %1486 = vmatprep.subr.mxu0 0.0
  %1487 = vmatpush1.msra.mxu0 0.0
  %1488 = vmatprep.subr.mxu0 0.0
  %1489 = vmatpush1.msra.mxu0 0.0
  %1490 = vmatprep.mubr.f32.mxu0 0.0
  %1491 = vmatmul.mubr.f32.gmra.mrb[0].mxu0 %v1424
  %v1492 = vpop.f32.mrb[0].mxu0
  %v1493 = vadd.f32 0.0, %v1492
  %v1494 = vpop.f32.mrb[0].mxu0
  %1495 = vdwg.mxu0
  %v1497 = vrot.slane %v1493, 4
  %v1499 = vadd.f32 %v336, %v1497
  %v1500 = vxor.u32 %v1499, 2147483648
  %v1501 = vmul.f32 %v1500, 1.442695
  %v1502 = vpow.pop %v1501
  %v1503 = vadd.f32 %v1502, 1.0
  %v1504 = vrcp.pop %v1503
  %v1505 = vmul.f32 1.0, %v1504
  %v1506 = vadd.f32 %v1493, %v1290
  %v1508 = vrot.slane %v1506, 4
  %1509 = vrot.lane.b32.xlu0 %v1508, 64
  %v1510 = vpop.permute.xlu0 %1509
  %v1512 = vmul.f32 %v1505, %v1510
  %1514 = vrot.lane.b32.xlu0 %v1512, 64
  %v1515 = vpop.permute.xlu0 %1514
  %v1517 = vadd.f32 %v336, %v1515
  %v1518 = vtanh.pop %v1517
  %v1519 = vsub.f32 1.0, %v1505
  %1521 = vrot.lane.b32.xlu0 %v1518, 96
  %v1522 = vpop.permute.xlu0 %1521
  %v1524 = vmul.f32 %v1519, %v1522
  %v1525 = vrot.slane %v1419, 6
  %v1527 = vmul.f32 %v1505, %v1525
  %v1528 = vadd.f32 %v1524, %v1527
  %v1530 = vrot.slane %v1528, 4
  %1531 = vrot.lane.b32.xlu0 %v1530, 96
  %v1532 = vpop.permute.xlu0 %1531
  %v1533 = vsel %vm75, %v1532, 0
  %1535 = vmatprep.subr.mxu0 0.0
  %1536 = vmatpush1.msra.mxu0 %v56
  %1537 = vmatprep.subr.mxu0 0.0
  %1538 = vmatpush1.msra.mxu0 %v57
  %1539 = vmatprep.subr.mxu0 0.0
  %1540 = vmatpush1.msra.mxu0 %v58
  %1541 = vmatprep.subr.mxu0 0.0
  %1542 = vmatpush1.msra.mxu0 %v59
  %1543 = vmatprep.subr.mxu0 0.0
  %1544 = vmatpush1.msra.mxu0 0.0
  %1545 = vmatprep.subr.mxu0 0.0
  %1546 = vmatpush1.msra.mxu0 0.0
  %1547 = vmatprep.subr.mxu0 0.0
  %1548 = vmatpush1.msra.mxu0 0.0
  %1549 = vmatprep.subr.mxu0 0.0
  %1550 = vmatpush1.msra.mxu0 0.0
  %1551 = vmatprep.subr.mxu0 0.0
  %1552 = vmatpush1.msra.mxu0 0.0
  %1553 = vmatprep.subr.mxu0 0.0
  %1554 = vmatpush1.msra.mxu0 0.0
  %1555 = vmatprep.subr.mxu0 0.0
  %1556 = vmatpush1.msra.mxu0 0.0
  %1557 = vmatprep.subr.mxu0 0.0
  %1558 = vmatpush1.msra.mxu0 0.0
  %1559 = vmatprep.subr.mxu0 0.0
  %1560 = vmatpush1.msra.mxu0 0.0
  %1561 = vmatprep.subr.mxu0 0.0
  %1562 = vmatpush1.msra.mxu0 0.0
  %1563 = vmatprep.subr.mxu0 0.0
  %1564 = vmatpush1.msra.mxu0 0.0
  %1565 = vmatprep.subr.mxu0 0.0
  %1566 = vmatpush1.msra.mxu0 0.0
  %1567 = vmatprep.subr.mxu0 0.0
  %1568 = vmatpush1.msra.mxu0 0.0
  %1569 = vmatprep.subr.mxu0 0.0
  %1570 = vmatpush1.msra.mxu0 0.0
  %1571 = vmatprep.subr.mxu0 0.0
  %1572 = vmatpush1.msra.mxu0 0.0
  %1573 = vmatprep.subr.mxu0 0.0
  %1574 = vmatpush1.msra.mxu0 0.0
  %1575 = vmatprep.subr.mxu0 0.0
  %1576 = vmatpush1.msra.mxu0 0.0
  %1577 = vmatprep.subr.mxu0 0.0
  %1578 = vmatpush1.msra.mxu0 0.0
  %1579 = vmatprep.subr.mxu0 0.0
  %1580 = vmatpush1.msra.mxu0 0.0
  %1581 = vmatprep.subr.mxu0 0.0
  %1582 = vmatpush1.msra.mxu0 0.0
  %1583 = vmatprep.subr.mxu0 0.0
  %1584 = vmatpush1.msra.mxu0 0.0
  %1585 = vmatprep.subr.mxu0 0.0
  %1586 = vmatpush1.msra.mxu0 0.0
  %1587 = vmatprep.subr.mxu0 0.0
  %1588 = vmatpush1.msra.mxu0 0.0
  %1589 = vmatprep.subr.mxu0 0.0
  %1590 = vmatpush1.msra.mxu0 0.0
  %1591 = vmatprep.subr.mxu0 0.0
  %1592 = vmatpush1.msra.mxu0 0.0
  %1593 = vmatprep.subr.mxu0 0.0
  %1594 = vmatpush1.msra.mxu0 0.0
  %1595 = vmatprep.subr.mxu0 0.0
  %1596 = vmatpush1.msra.mxu0 0.0
  %1597 = vmatprep.subr.mxu0 0.0
  %1598 = vmatpush1.msra.mxu0 0.0
  %1599 = vmatprep.mubr.f32.mxu0 0.0
  %1600 = vmatmul.mubr.f32.gmra.mrb[0].mxu0 %v1533
  %v1601 = vpop.f32.mrb[0].mxu0
  %v1602 = vadd.f32 0.0, %v1601
  %v1603 = vpop.f32.mrb[0].mxu0
  %1604 = vdwg.mxu0
  %v1606 = vrot.slane %v1602, 2
  %v1608 = vadd.f32 %v336, %v1606
  %v1609 = vxor.u32 %v1608, 2147483648
  %v1610 = vmul.f32 %v1609, 1.442695
  %v1611 = vpow.pop %v1610
  %v1612 = vadd.f32 %v1611, 1.0
  %v1613 = vrcp.pop %v1612
  %v1614 = vmul.f32 1.0, %v1613
  %v1615 = vadd.f32 %v1602, %v1290
  %v1617 = vrot.slane %v1615, 2
  %1618 = vrot.lane.b32.xlu0 %v1617, 64
  %v1619 = vpop.permute.xlu0 %1618
  %v1621 = vmul.f32 %v1614, %v1619
  %1623 = vrot.lane.b32.xlu0 %v1621, 64
  %v1624 = vpop.permute.xlu0 %1623
  %v1626 = vadd.f32 %v336, %v1624
  %v1627 = vtanh.pop %v1626
  %v1628 = vsub.f32 1.0, %v1614
  %1630 = vrot.lane.b32.xlu0 %v1627, 96
  %v1631 = vpop.permute.xlu0 %1630
  %v1633 = vmul.f32 %v1628, %v1631
  %v1634 = vrot.slane %v1528, 6
  %v1636 = vmul.f32 %v1614, %v1634
  %v1637 = vadd.f32 %v1633, %v1636
  %v1639 = vrot.slane %v1637, 6
  %1640 = vrot.lane.b32.xlu0 %v1639, 96
  %v1641 = vpop.permute.xlu0 %1640
  %v1642 = vsel %vm75, %v1641, 0
  %1644 = vmatprep.subr.mxu0 0.0
  %1645 = vmatpush1.msra.mxu0 %v56
  %1646 = vmatprep.subr.mxu0 0.0
  %1647 = vmatpush1.msra.mxu0 %v57
  %1648 = vmatprep.subr.mxu0 0.0
  %1649 = vmatpush1.msra.mxu0 %v58
  %1650 = vmatprep.subr.mxu0 0.0
  %1651 = vmatpush1.msra.mxu0 %v59
  %1652 = vmatprep.subr.mxu0 0.0
  %1653 = vmatpush1.msra.mxu0 0.0
  %1654 = vmatprep.subr.mxu0 0.0
  %1655 = vmatpush1.msra.mxu0 0.0
  %1656 = vmatprep.subr.mxu0 0.0
  %1657 = vmatpush1.msra.mxu0 0.0
  %1658 = vmatprep.subr.mxu0 0.0
  %1659 = vmatpush1.msra.mxu0 0.0
  %1660 = vmatprep.subr.mxu0 0.0
  %1661 = vmatpush1.msra.mxu0 0.0
  %1662 = vmatprep.subr.mxu0 0.0
  %1663 = vmatpush1.msra.mxu0 0.0
  %1664 = vmatprep.subr.mxu0 0.0
  %1665 = vmatpush1.msra.mxu0 0.0
  %1666 = vmatprep.subr.mxu0 0.0
  %1667 = vmatpush1.msra.mxu0 0.0
  %1668 = vmatprep.subr.mxu0 0.0
  %1669 = vmatpush1.msra.mxu0 0.0
  %1670 = vmatprep.subr.mxu0 0.0
  %1671 = vmatpush1.msra.mxu0 0.0
  %1672 = vmatprep.subr.mxu0 0.0
  %1673 = vmatpush1.msra.mxu0 0.0
  %1674 = vmatprep.subr.mxu0 0.0
  %1675 = vmatpush1.msra.mxu0 0.0
  %1676 = vmatprep.subr.mxu0 0.0
  %1677 = vmatpush1.msra.mxu0 0.0
  %1678 = vmatprep.subr.mxu0 0.0
  %1679 = vmatpush1.msra.mxu0 0.0
  %1680 = vmatprep.subr.mxu0 0.0
  %1681 = vmatpush1.msra.mxu0 0.0
  %1682 = vmatprep.subr.mxu0 0.0
  %1683 = vmatpush1.msra.mxu0 0.0
  %1684 = vmatprep.subr.mxu0 0.0
  %1685 = vmatpush1.msra.mxu0 0.0
  %1686 = vmatprep.subr.mxu0 0.0
  %1687 = vmatpush1.msra.mxu0 0.0
  %1688 = vmatprep.subr.mxu0 0.0
  %1689 = vmatpush1.msra.mxu0 0.0
  %1690 = vmatprep.subr.mxu0 0.0
  %1691 = vmatpush1.msra.mxu0 0.0
  %1692 = vmatprep.subr.mxu0 0.0
  %1693 = vmatpush1.msra.mxu0 0.0
  %1694 = vmatprep.subr.mxu0 0.0
  %1695 = vmatpush1.msra.mxu0 0.0
  %1696 = vmatprep.subr.mxu0 0.0
  %1697 = vmatpush1.msra.mxu0 0.0
  %1698 = vmatprep.subr.mxu0 0.0
  %1699 = vmatpush1.msra.mxu0 0.0
  %1700 = vmatprep.subr.mxu0 0.0
  %1701 = vmatpush1.msra.mxu0 0.0
  %1702 = vmatprep.subr.mxu0 0.0
  %1703 = vmatpush1.msra.mxu0 0.0
  %1704 = vmatprep.subr.mxu0 0.0
  %1705 = vmatpush1.msra.mxu0 0.0
  %1706 = vmatprep.subr.mxu0 0.0
  %1707 = vmatpush1.msra.mxu0 0.0
  %1708 = vmatprep.mubr.f32.mxu0 0.0
  %1709 = vmatmul.mubr.f32.gmra.mrb[0].mxu0 %v1642
  %v1710 = vpop.f32.mrb[0].mxu0
  %v1711 = vadd.f32 0.0, %v1710
  %v1712 = vpop.f32.mrb[0].mxu0
  %1713 = vdwg.mxu0
  %v1714 = vadd.f32 %v337, %v1711
  %v1715 = vxor.u32 %v1714, 2147483648
  %v1716 = vmul.f32 %v1715, 1.442695
  %v1717 = vpow.pop %v1716
  %v1718 = vadd.f32 %v1717, 1.0
  %v1719 = vrcp.pop %v1718
  %v1720 = vmul.f32 1.0, %v1719
  %v1721 = vadd.f32 %v1711, %v1290
  %1723 = vrot.lane.b32.xlu0 %v1721, 64
  %v1724 = vpop.permute.xlu0 %1723
  %v1726 = vmul.f32 %v1720, %v1724
  %1728 = vrot.lane.b32.xlu0 %v1726, 64
  %v1729 = vpop.permute.xlu0 %1728
  %v1731 = vadd.f32 %v337, %v1729
  %v1732 = vtanh.pop %v1731
  %v1733 = vsub.f32 1.0, %v1720
  %1735 = vrot.lane.b32.xlu0 %v1732, 96
  %v1736 = vpop.permute.xlu0 %1735
  %v1738 = vmul.f32 %v1733, %v1736
  %v1740 = vmul.f32 %v1720, %v1639
  %v1741 = vadd.f32 %v1738, %v1740
  %1743 = vrot.lane.b32.xlu0 %v1741, 96
  %v1744 = vpop.permute.xlu0 %1743
  %v1745 = vsel %vm75, %v1744, 0
  %1747 = vmatprep.subr.mxu0 0.0
  %1748 = vmatpush1.msra.mxu0 %v56
  %1749 = vmatprep.subr.mxu0 0.0
  %1750 = vmatpush1.msra.mxu0 %v57
  %1751 = vmatprep.subr.mxu0 0.0
  %1752 = vmatpush1.msra.mxu0 %v58
  %1753 = vmatprep.subr.mxu0 0.0
  %1754 = vmatpush1.msra.mxu0 %v59
  %1755 = vmatprep.subr.mxu0 0.0
  %1756 = vmatpush1.msra.mxu0 0.0
  %1757 = vmatprep.subr.mxu0 0.0
  %1758 = vmatpush1.msra.mxu0 0.0
  %1759 = vmatprep.subr.mxu0 0.0
  %1760 = vmatpush1.msra.mxu0 0.0
  %1761 = vmatprep.subr.mxu0 0.0
  %1762 = vmatpush1.msra.mxu0 0.0
  %1763 = vmatprep.subr.mxu0 0.0
  %1764 = vmatpush1.msra.mxu0 0.0
  %1765 = vmatprep.subr.mxu0 0.0
  %1766 = vmatpush1.msra.mxu0 0.0
  %1767 = vmatprep.subr.mxu0 0.0
  %1768 = vmatpush1.msra.mxu0 0.0
  %1769 = vmatprep.subr.mxu0 0.0
  %1770 = vmatpush1.msra.mxu0 0.0
  %1771 = vmatprep.subr.mxu0 0.0
  %1772 = vmatpush1.msra.mxu0 0.0
  %1773 = vmatprep.subr.mxu0 0.0
  %1774 = vmatpush1.msra.mxu0 0.0
  %1775 = vmatprep.subr.mxu0 0.0
  %1776 = vmatpush1.msra.mxu0 0.0
  %1777 = vmatprep.subr.mxu0 0.0
  %1778 = vmatpush1.msra.mxu0 0.0
  %1779 = vmatprep.subr.mxu0 0.0
  %1780 = vmatpush1.msra.mxu0 0.0
  %1781 = vmatprep.subr.mxu0 0.0
  %1782 = vmatpush1.msra.mxu0 0.0
  %1783 = vmatprep.subr.mxu0 0.0
  %1784 = vmatpush1.msra.mxu0 0.0
  %1785 = vmatprep.subr.mxu0 0.0
  %1786 = vmatpush1.msra.mxu0 0.0
  %1787 = vmatprep.subr.mxu0 0.0
  %1788 = vmatpush1.msra.mxu0 0.0
  %1789 = vmatprep.subr.mxu0 0.0
  %1790 = vmatpush1.msra.mxu0 0.0
  %1791 = vmatprep.subr.mxu0 0.0
  %1792 = vmatpush1.msra.mxu0 0.0
  %1793 = vmatprep.subr.mxu0 0.0
  %1794 = vmatpush1.msra.mxu0 0.0
  %1795 = vmatprep.subr.mxu0 0.0
  %1796 = vmatpush1.msra.mxu0 0.0
  %1797 = vmatprep.subr.mxu0 0.0
  %1798 = vmatpush1.msra.mxu0 0.0
  %1799 = vmatprep.subr.mxu0 0.0
  %1800 = vmatpush1.msra.mxu0 0.0
  %1801 = vmatprep.subr.mxu0 0.0
  %1802 = vmatpush1.msra.mxu0 0.0
  %1803 = vmatprep.subr.mxu0 0.0
  %1804 = vmatpush1.msra.mxu0 0.0
  %1805 = vmatprep.subr.mxu0 0.0
  %1806 = vmatpush1.msra.mxu0 0.0
  %1807 = vmatprep.subr.mxu0 0.0
  %1808 = vmatpush1.msra.mxu0 0.0
  %1809 = vmatprep.subr.mxu0 0.0
  %1810 = vmatpush1.msra.mxu0 0.0
  %1811 = vmatprep.mubr.f32.mxu0 0.0
  %1812 = vmatmul.mubr.f32.gmra.mrb[0].mxu0 %v1745
  %v1813 = vpop.f32.mrb[0].mxu0
  %v1814 = vadd.f32 0.0, %v1813
  %v1815 = vpop.f32.mrb[0].mxu0
  %1816 = vdwg.mxu0
  %v1818 = vrot.slane %v1814, 6
  %v1820 = vadd.f32 %v337, %v1818
  %v1821 = vxor.u32 %v1820, 2147483648
  %v1822 = vmul.f32 %v1821, 1.442695
  %v1823 = vpow.pop %v1822
  %v1824 = vadd.f32 %v1823, 1.0
  %v1825 = vrcp.pop %v1824
  %v1826 = vmul.f32 1.0, %v1825
  %v1827 = vadd.f32 %v1814, %v1290
  %v1829 = vrot.slane %v1827, 6
  %1830 = vrot.lane.b32.xlu0 %v1829, 64
  %v1831 = vpop.permute.xlu0 %1830
  %v1833 = vmul.f32 %v1826, %v1831
  %1835 = vrot.lane.b32.xlu0 %v1833, 64
  %v1836 = vpop.permute.xlu0 %1835
  %v1838 = vadd.f32 %v337, %v1836
  %v1839 = vtanh.pop %v1838
  %v1840 = vsub.f32 1.0, %v1826
  %1842 = vrot.lane.b32.xlu0 %v1839, 96
  %v1843 = vpop.permute.xlu0 %1842
  %v1845 = vmul.f32 %v1840, %v1843
  %v1846 = vrot.slane %v1741, 6
  %v1848 = vmul.f32 %v1826, %v1846
  %v1849 = vadd.f32 %v1845, %v1848
  %v1851 = vrot.slane %v1849, 2
  %1852 = vrot.lane.b32.xlu0 %v1851, 96
  %v1853 = vpop.permute.xlu0 %1852
  %v1854 = vsel %vm75, %v1853, 0
  %1856 = vmatprep.subr.mxu0 0.0
  %1857 = vmatpush1.msra.mxu0 %v56
  %1858 = vmatprep.subr.mxu0 0.0
  %1859 = vmatpush1.msra.mxu0 %v57
  %1860 = vmatprep.subr.mxu0 0.0
  %1861 = vmatpush1.msra.mxu0 %v58
  %1862 = vmatprep.subr.mxu0 0.0
  %1863 = vmatpush1.msra.mxu0 %v59
  %1864 = vmatprep.subr.mxu0 0.0
  %1865 = vmatpush1.msra.mxu0 0.0
  %1866 = vmatprep.subr.mxu0 0.0
  %1867 = vmatpush1.msra.mxu0 0.0
  %1868 = vmatprep.subr.mxu0 0.0
  %1869 = vmatpush1.msra.mxu0 0.0
  %1870 = vmatprep.subr.mxu0 0.0
  %1871 = vmatpush1.msra.mxu0 0.0
  %1872 = vmatprep.subr.mxu0 0.0
  %1873 = vmatpush1.msra.mxu0 0.0
  %1874 = vmatprep.subr.mxu0 0.0
  %1875 = vmatpush1.msra.mxu0 0.0
  %1876 = vmatprep.subr.mxu0 0.0
  %1877 = vmatpush1.msra.mxu0 0.0
  %1878 = vmatprep.subr.mxu0 0.0
  %1879 = vmatpush1.msra.mxu0 0.0
  %1880 = vmatprep.subr.mxu0 0.0
  %1881 = vmatpush1.msra.mxu0 0.0
  %1882 = vmatprep.subr.mxu0 0.0
  %1883 = vmatpush1.msra.mxu0 0.0
  %1884 = vmatprep.subr.mxu0 0.0
  %1885 = vmatpush1.msra.mxu0 0.0
  %1886 = vmatprep.subr.mxu0 0.0
  %1887 = vmatpush1.msra.mxu0 0.0
  %1888 = vmatprep.subr.mxu0 0.0
  %1889 = vmatpush1.msra.mxu0 0.0
  %1890 = vmatprep.subr.mxu0 0.0
  %1891 = vmatpush1.msra.mxu0 0.0
  %1892 = vmatprep.subr.mxu0 0.0
  %1893 = vmatpush1.msra.mxu0 0.0
  %1894 = vmatprep.subr.mxu0 0.0
  %1895 = vmatpush1.msra.mxu0 0.0
  %1896 = vmatprep.subr.mxu0 0.0
  %1897 = vmatpush1.msra.mxu0 0.0
  %1898 = vmatprep.subr.mxu0 0.0
  %1899 = vmatpush1.msra.mxu0 0.0
  %1900 = vmatprep.subr.mxu0 0.0
  %1901 = vmatpush1.msra.mxu0 0.0
  %1902 = vmatprep.subr.mxu0 0.0
  %1903 = vmatpush1.msra.mxu0 0.0
  %1904 = vmatprep.subr.mxu0 0.0
  %1905 = vmatpush1.msra.mxu0 0.0
  %1906 = vmatprep.subr.mxu0 0.0
  %1907 = vmatpush1.msra.mxu0 0.0
  %1908 = vmatprep.subr.mxu0 0.0
  %1909 = vmatpush1.msra.mxu0 0.0
  %1910 = vmatprep.subr.mxu0 0.0
  %1911 = vmatpush1.msra.mxu0 0.0
  %1912 = vmatprep.subr.mxu0 0.0
  %1913 = vmatpush1.msra.mxu0 0.0
  %1914 = vmatprep.subr.mxu0 0.0
  %1915 = vmatpush1.msra.mxu0 0.0
  %1916 = vmatprep.subr.mxu0 0.0
  %1917 = vmatpush1.msra.mxu0 0.0
  %1918 = vmatprep.subr.mxu0 0.0
  %1919 = vmatpush1.msra.mxu0 0.0
  %1920 = vmatprep.mubr.f32.mxu0 0.0
  %1921 = vmatmul.mubr.f32.gmra.mrb[0].mxu0 %v1854
  %v1922 = vpop.f32.mrb[0].mxu0
  %v1923 = vadd.f32 0.0, %v1922
  %v1924 = vpop.f32.mrb[0].mxu0
  %1925 = vdwg.mxu0
  %v1927 = vrot.slane %v1923, 4
  %v1929 = vadd.f32 %v337, %v1927
  %v1930 = vxor.u32 %v1929, 2147483648
  %v1931 = vmul.f32 %v1930, 1.442695
  %v1932 = vpow.pop %v1931
  %v1933 = vadd.f32 %v1932, 1.0
  %v1934 = vrcp.pop %v1933
  %v1935 = vmul.f32 1.0, %v1934
  %v1936 = vadd.f32 %v1923, %v1290
  %v1938 = vrot.slane %v1936, 4
  %1939 = vrot.lane.b32.xlu0 %v1938, 64
  %v1940 = vpop.permute.xlu0 %1939
  %v1942 = vmul.f32 %v1935, %v1940
  %1944 = vrot.lane.b32.xlu0 %v1942, 64
  %v1945 = vpop.permute.xlu0 %1944
  %v1947 = vadd.f32 %v337, %v1945
  %v1948 = vtanh.pop %v1947
  %v1949 = vsub.f32 1.0, %v1935
  %1951 = vrot.lane.b32.xlu0 %v1948, 96
  %v1952 = vpop.permute.xlu0 %1951
  %v1954 = vmul.f32 %v1949, %v1952
  %v1955 = vrot.slane %v1849, 6
  %v1957 = vmul.f32 %v1935, %v1955
  %v1958 = vadd.f32 %v1954, %v1957
  %v1960 = vrot.slane %v1958, 4
  %1961 = vrot.lane.b32.xlu0 %v1960, 96
  %v1962 = vpop.permute.xlu0 %1961
  %v1963 = vsel %vm75, %v1962, 0
  %1965 = vmatprep.subr.mxu0 0.0
  %1966 = vmatpush1.msra.mxu0 %v56
  %1967 = vmatprep.subr.mxu0 0.0
  %1968 = vmatpush1.msra.mxu0 %v57
  %1969 = vmatprep.subr.mxu0 0.0
  %1970 = vmatpush1.msra.mxu0 %v58
  %1971 = vmatprep.subr.mxu0 0.0
  %1972 = vmatpush1.msra.mxu0 %v59
  %1973 = vmatprep.subr.mxu0 0.0
  %1974 = vmatpush1.msra.mxu0 0.0
  %1975 = vmatprep.subr.mxu0 0.0
  %1976 = vmatpush1.msra.mxu0 0.0
  %1977 = vmatprep.subr.mxu0 0.0
  %1978 = vmatpush1.msra.mxu0 0.0
  %1979 = vmatprep.subr.mxu0 0.0
  %1980 = vmatpush1.msra.mxu0 0.0
  %1981 = vmatprep.subr.mxu0 0.0
  %1982 = vmatpush1.msra.mxu0 0.0
  %1983 = vmatprep.subr.mxu0 0.0
  %1984 = vmatpush1.msra.mxu0 0.0
  %1985 = vmatprep.subr.mxu0 0.0
  %1986 = vmatpush1.msra.mxu0 0.0
  %1987 = vmatprep.subr.mxu0 0.0
  %1988 = vmatpush1.msra.mxu0 0.0
  %1989 = vmatprep.subr.mxu0 0.0
  %1990 = vmatpush1.msra.mxu0 0.0
  %1991 = vmatprep.subr.mxu0 0.0
  %1992 = vmatpush1.msra.mxu0 0.0
  %1993 = vmatprep.subr.mxu0 0.0
  %1994 = vmatpush1.msra.mxu0 0.0
  %1995 = vmatprep.subr.mxu0 0.0
  %1996 = vmatpush1.msra.mxu0 0.0
  %1997 = vmatprep.subr.mxu0 0.0
  %1998 = vmatpush1.msra.mxu0 0.0
  %1999 = vmatprep.subr.mxu0 0.0
  %2000 = vmatpush1.msra.mxu0 0.0
  %2001 = vmatprep.subr.mxu0 0.0
  %2002 = vmatpush1.msra.mxu0 0.0
  %2003 = vmatprep.subr.mxu0 0.0
  %2004 = vmatpush1.msra.mxu0 0.0
  %2005 = vmatprep.subr.mxu0 0.0
  %2006 = vmatpush1.msra.mxu0 0.0
  %2007 = vmatprep.subr.mxu0 0.0
  %2008 = vmatpush1.msra.mxu0 0.0
  %2009 = vmatprep.subr.mxu0 0.0
  %2010 = vmatpush1.msra.mxu0 0.0
  %2011 = vmatprep.subr.mxu0 0.0
  %2012 = vmatpush1.msra.mxu0 0.0
  %2013 = vmatprep.subr.mxu0 0.0
  %2014 = vmatpush1.msra.mxu0 0.0
  %2015 = vmatprep.subr.mxu0 0.0
  %2016 = vmatpush1.msra.mxu0 0.0
  %2017 = vmatprep.subr.mxu0 0.0
  %2018 = vmatpush1.msra.mxu0 0.0
  %2019 = vmatprep.subr.mxu0 0.0
  %2020 = vmatpush1.msra.mxu0 0.0
  %2021 = vmatprep.subr.mxu0 0.0
  %2022 = vmatpush1.msra.mxu0 0.0
  %2023 = vmatprep.subr.mxu0 0.0
  %2024 = vmatpush1.msra.mxu0 0.0
  %2025 = vmatprep.subr.mxu0 0.0
  %2026 = vmatpush1.msra.mxu0 0.0
  %2027 = vmatprep.subr.mxu0 0.0
  %2028 = vmatpush1.msra.mxu0 0.0
  %2029 = vmatprep.mubr.f32.mxu0 0.0
  %2030 = vmatmul.mubr.f32.gmra.mrb[0].mxu0 %v1963
  %v2031 = vpop.f32.mrb[0].mxu0
  %v2032 = vadd.f32 0.0, %v2031
  %v2033 = vpop.f32.mrb[0].mxu0
  %2034 = vdwg.mxu0
  %v2036 = vrot.slane %v2032, 2
  %v2038 = vadd.f32 %v337, %v2036
  %v2039 = vxor.u32 %v2038, 2147483648
  %v2040 = vmul.f32 %v2039, 1.442695
  %v2041 = vpow.pop %v2040
  %v2042 = vadd.f32 %v2041, 1.0
  %v2043 = vrcp.pop %v2042
  %v2044 = vmul.f32 1.0, %v2043
  %v2045 = vadd.f32 %v2032, %v1290
  %v2047 = vrot.slane %v2045, 2
  %2048 = vrot.lane.b32.xlu0 %v2047, 64
  %v2049 = vpop.permute.xlu0 %2048
  %v2051 = vmul.f32 %v2044, %v2049
  %2053 = vrot.lane.b32.xlu0 %v2051, 64
  %v2054 = vpop.permute.xlu0 %2053
  %v2056 = vadd.f32 %v337, %v2054
  %v2057 = vtanh.pop %v2056
  %v2058 = vsub.f32 1.0, %v2044
  %2060 = vrot.lane.b32.xlu0 %v2057, 96
  %v2061 = vpop.permute.xlu0 %2060
  %v2063 = vmul.f32 %v2058, %v2061
  %v2064 = vrot.slane %v1958, 6
  %v2066 = vmul.f32 %v2044, %v2064
  %v2067 = vadd.f32 %v2063, %v2066
  %v2068 = vsel %vm160, %v1311, %v1419
  %v2069 = vsel %vm162, %v2068, %v1528
  %v2070 = vsel %vm164, %v2069, %v1637
  %v2071 = vsel %vm160, %v1741, %v1849
  %v2072 = vsel %vm162, %v2071, %v1958
  %v2073 = vsel %vm164, %v2072, %v2067
  %2076 = vrot.lane.b32.xlu0 %v2070, 96
  %v2077 = vpop.permute.xlu0 %2076
  %2078 = vrot.lane.b32.xlu0 %v2073, 96
  %v2079 = vpop.permute.xlu0 %2078
  %2082 = vrot.lane.b32.xlu0 %v1200, 96
  %v2083 = vpop.permute.xlu0 %2082
  %2084 = vrot.lane.b32.xlu0 %v1203, 96
  %v2085 = vpop.permute.xlu0 %2084
  %v2086 = vsel %vm75, %v2077, 0
  %v2088 = vsel %vm75, %v2079, 0
  %v2090 = vsel %vm75, %v2083, 0
  %v2092 = vsel %vm75, %v2085, 0
  %2094 = vmatprep.subr.mxu0 0.0
  %2095 = vmatpush1.xpose.msra.mxu0 %v2090
  %2096 = vmatprep.subr.mxu0 0.0
  %2097 = vmatpush1.xpose.msra.mxu0 %v2092
  %2098 = vmatprep.subr.mxu0 0.0
  %2099 = vmatpush1.xpose.msra.mxu0 0.0
  %2100 = vmatprep.subr.mxu0 0.0
  %2101 = vmatpush1.xpose.msra.mxu0 0.0
  %2102 = vmatprep.subr.mxu0 0.0
  %2103 = vmatpush1.xpose.msra.mxu0 0.0
  %2104 = vmatprep.subr.mxu0 0.0
  %2105 = vmatpush1.xpose.msra.mxu0 0.0
  %2106 = vmatprep.subr.mxu0 0.0
  %2107 = vmatpush1.xpose.msra.mxu0 0.0
  %2108 = vmatprep.subr.mxu0 0.0
  %2109 = vmatpush1.xpose.msra.mxu0 0.0
  %2110 = vmatprep.subr.mxu0 0.0
  %2111 = vmatpush1.xpose.msra.mxu0 0.0
  %2112 = vmatprep.subr.mxu0 0.0
  %2113 = vmatpush1.xpose.msra.mxu0 0.0
  %2114 = vmatprep.subr.mxu0 0.0
  %2115 = vmatpush1.xpose.msra.mxu0 0.0
  %2116 = vmatprep.subr.mxu0 0.0
  %2117 = vmatpush1.xpose.msra.mxu0 0.0
  %2118 = vmatprep.subr.mxu0 0.0
  %2119 = vmatpush1.xpose.msra.mxu0 0.0
  %2120 = vmatprep.subr.mxu0 0.0
  %2121 = vmatpush1.xpose.msra.mxu0 0.0
  %2122 = vmatprep.subr.mxu0 0.0
  %2123 = vmatpush1.xpose.msra.mxu0 0.0
  %2124 = vmatprep.subr.mxu0 0.0
  %2125 = vmatpush1.xpose.msra.mxu0 0.0
  %2126 = vmatprep.subr.mxu0 0.0
  %2127 = vmatpush1.xpose.msra.mxu0 0.0
  %2128 = vmatprep.subr.mxu0 0.0
  %2129 = vmatpush1.xpose.msra.mxu0 0.0
  %2130 = vmatprep.subr.mxu0 0.0
  %2131 = vmatpush1.xpose.msra.mxu0 0.0
  %2132 = vmatprep.subr.mxu0 0.0
  %2133 = vmatpush1.xpose.msra.mxu0 0.0
  %2134 = vmatprep.subr.mxu0 0.0
  %2135 = vmatpush1.xpose.msra.mxu0 0.0
  %2136 = vmatprep.subr.mxu0 0.0
  %2137 = vmatpush1.xpose.msra.mxu0 0.0
  %2138 = vmatprep.subr.mxu0 0.0
  %2139 = vmatpush1.xpose.msra.mxu0 0.0
  %2140 = vmatprep.subr.mxu0 0.0
  %2141 = vmatpush1.xpose.msra.mxu0 0.0
  %2142 = vmatprep.subr.mxu0 0.0
  %2143 = vmatpush1.xpose.msra.mxu0 0.0
  %2144 = vmatprep.subr.mxu0 0.0
  %2145 = vmatpush1.xpose.msra.mxu0 0.0
  %2146 = vmatprep.subr.mxu0 0.0
  %2147 = vmatpush1.xpose.msra.mxu0 0.0
  %2148 = vmatprep.subr.mxu0 0.0
  %2149 = vmatpush1.xpose.msra.mxu0 0.0
  %2150 = vmatprep.subr.mxu0 0.0
  %2151 = vmatpush1.xpose.msra.mxu0 0.0
  %2152 = vmatprep.subr.mxu0 0.0
  %2153 = vmatpush1.xpose.msra.mxu0 0.0
  %2154 = vmatprep.subr.mxu0 0.0
  %2155 = vmatpush1.xpose.msra.mxu0 0.0
  %2156 = vmatprep.subr.mxu0 0.0
  %2157 = vmatpush1.xpose.msra.mxu0 0.0
  %2158 = vmatprep.mubr.f32.mxu0 0.0
  %2159 = vmatmul.mubr.f32.gmra.mrb[0].mxu0 %v2086
  %v2160 = vpop.f32.mrb[0].mxu0
  %v2161 = vadd.f32 0.0, %v2160
  %v2162 = vpop.f32.mrb[0].mxu0
  %2163 = vmatprep.mubr.f32.mxu0 0.0
  %2164 = vmatmul.mubr.f32.gmra.mrb[0].mxu0 %v2088
  %v2165 = vpop.f32.mrb[0].mxu0
  %v2166 = vadd.f32 0.0, %v2165
  %v2167 = vpop.f32.mrb[0].mxu0
  %2168 = vdwg.mxu0
  %v2169 = vlaneseq
  %v2170 = vshrl.u32 %v2169, 7
  %v2171 = vadd.s32 %v2170, 8
  %vm2172 = vcmp.lt.s32.totalorder %v2170, 0
  %v2173 = vsub.s32 0, %v2170
  %v2174 = vsel %vm2172, %v2173, %v2170
  %v2175 = vshrl.u32 %v2174, 1
  %v2176 = vand.u32 %v2174, 1
  %v2177 = vsub.s32 0, %v2176
  %v2178 = vsel %vm2172, %v2177, %v2176
  %vm2179 = vcmp.lt.s32.totalorder %v2171, 0
  %v2180 = vsub.s32 0, %v2171
  %v2181 = vsel %vm2179, %v2180, %v2171
  %v2182 = vshrl.u32 %v2181, 1
  %v2183 = vand.u32 %v2181, 1
  %v2184 = vsub.s32 0, %v2183
  %v2185 = vsel %vm2179, %v2184, %v2183
  %vm2186 = vcmp.ne.s32.totalorder %v2178, 0
  %vm2187 = vcmp.ne.s32.totalorder %v2185, 0
  %vm2188 = vcmp.lt.s32.totalorder %v2178, 0
  %vm2189 = vcmp.lt.s32.totalorder %v2185, 0
  %vm2190 = vmand %vm2188, %vm2186
  %vm2191 = vmand %vm2189, %vm2187
  %v2192 = vadd.s32 %v2178, 2
  %v2193 = vadd.s32 %v2185, 2
  %v2194 = vsel %vm2190, %v2192, %v2178
  %v2195 = vsel %vm2191, %v2193, %v2185
  %v2196 = vlaneseq
  %v2197 = vand.u32 %v2196, 127
  %vm2198 = vcmp.lt.s32.totalorder %v2197, 0
  %v2199 = vsub.s32 0, %v2197
  %v2200 = vsel %vm2198, %v2199, %v2197
  %v2201 = vshrl.u32 %v2200, 1
  %v2202 = vand.u32 %v2200, 1
  %v2203 = vsub.s32 0, %v2202
  %v2204 = vsel %vm2198, %v2203, %v2202
  %vm2205 = vcmp.ne.s32.totalorder %v2204, 0
  %vm2206 = vcmp.lt.s32.totalorder %v2204, 0
  %vm2207 = vmand %vm2206, %vm2205
  %v2208 = vadd.s32 %v2204, 2
  %v2209 = vsel %vm2207, %v2208, %v2204
  %vm2210 = vcmp.eq.s32.totalorder %v2194, %v2209
  %vm2211 = vcmp.eq.s32.totalorder %v2195, %v2209
  %v2212 = vsel %vm2210, %v2161, -1e+30
  %v2213 = vsel %vm2211, %v2166, -1e+30
  %vm2214 = vcmask 130048
  %v2215 = vsel %vm2214, %v2212, -inf
  %2216 = vmax.xlane.f32.xlu0 %v2215
  %v2217 = vpop.xlane.xlu0 %2216
  %v2218 = vsel %vm2214, %v2213, -inf
  %2219 = vmax.xlane.f32.xlu0 %v2218
  %v2220 = vpop.xlane.xlu0 %2219
  %v2221 = vsub.f32 %v2212, %v2217
  %v2222 = vsub.f32 %v2213, %v2220
  %v2223 = vmul.f32 %v2221, 1.442695
  %v2224 = vpow.pop %v2223
  %v2225 = vmul.f32 %v2222, 1.442695
  %v2226 = vpow.pop %v2225
  %v2227 = vsel %vm2214, %v2224, 0.0
  %2228 = vadd.xlane.f32.xlu0 %v2227
  %v2229 = vpop.xlane.xlu0 %2228
  %v2230 = vsel %vm2214, %v2226, 0.0
  %2231 = vadd.xlane.f32.xlu0 %v2230
  %v2232 = vpop.xlane.xlu0 %2231
  %v2233 = vrcp.pop %v2229
  %v2234 = vmul.f32 %v2224, %v2233
  %v2235 = vrcp.pop %v2232
  %v2236 = vmul.f32 %v2226, %v2235
  %v2240 = vsel %vm2214, %v2234, 0
  %v2243 = vsel %vm2214, %v2236, 0
  %2245 = vmatprep.subr.mxu0 0.0
  %2246 = vmatpush1.msra.mxu0 %v2083
  %2247 = vmatprep.subr.mxu0 0.0
  %2248 = vmatpush1.msra.mxu0 %v2085
  %2249 = vmatprep.subr.mxu0 0.0
  %2250 = vmatpush1.msra.mxu0 0.0
  %2251 = vmatprep.subr.mxu0 0.0
  %2252 = vmatpush1.msra.mxu0 0.0
  %2253 = vmatprep.subr.mxu0 0.0
  %2254 = vmatpush1.msra.mxu0 0.0
  %2255 = vmatprep.subr.mxu0 0.0
  %2256 = vmatpush1.msra.mxu0 0.0
  %2257 = vmatprep.subr.mxu0 0.0
  %2258 = vmatpush1.msra.mxu0 0.0
  %2259 = vmatprep.subr.mxu0 0.0
  %2260 = vmatpush1.msra.mxu0 0.0
  %2261 = vmatprep.subr.mxu0 0.0
  %2262 = vmatpush1.msra.mxu0 0.0
  %2263 = vmatprep.subr.mxu0 0.0
  %2264 = vmatpush1.msra.mxu0 0.0
  %2265 = vmatprep.subr.mxu0 0.0
  %2266 = vmatpush1.msra.mxu0 0.0
  %2267 = vmatprep.subr.mxu0 0.0
  %2268 = vmatpush1.msra.mxu0 0.0
  %2269 = vmatprep.subr.mxu0 0.0
  %2270 = vmatpush1.msra.mxu0 0.0
  %2271 = vmatprep.subr.mxu0 0.0
  %2272 = vmatpush1.msra.mxu0 0.0
  %2273 = vmatprep.subr.mxu0 0.0
  %2274 = vmatpush1.msra.mxu0 0.0
  %2275 = vmatprep.subr.mxu0 0.0
  %2276 = vmatpush1.msra.mxu0 0.0
  %2277 = vmatprep.subr.mxu0 0.0
  %2278 = vmatpush1.msra.mxu0 0.0
  %2279 = vmatprep.subr.mxu0 0.0
  %2280 = vmatpush1.msra.mxu0 0.0
  %2281 = vmatprep.subr.mxu0 0.0
  %2282 = vmatpush1.msra.mxu0 0.0
  %2283 = vmatprep.subr.mxu0 0.0
  %2284 = vmatpush1.msra.mxu0 0.0
  %2285 = vmatprep.subr.mxu0 0.0
  %2286 = vmatpush1.msra.mxu0 0.0
  %2287 = vmatprep.subr.mxu0 0.0
  %2288 = vmatpush1.msra.mxu0 0.0
  %2289 = vmatprep.subr.mxu0 0.0
  %2290 = vmatpush1.msra.mxu0 0.0
  %2291 = vmatprep.subr.mxu0 0.0
  %2292 = vmatpush1.msra.mxu0 0.0
  %2293 = vmatprep.subr.mxu0 0.0
  %2294 = vmatpush1.msra.mxu0 0.0
  %2295 = vmatprep.subr.mxu0 0.0
  %2296 = vmatpush1.msra.mxu0 0.0
  %2297 = vmatprep.subr.mxu0 0.0
  %2298 = vmatpush1.msra.mxu0 0.0
  %2299 = vmatprep.subr.mxu0 0.0
  %2300 = vmatpush1.msra.mxu0 0.0
  %2301 = vmatprep.subr.mxu0 0.0
  %2302 = vmatpush1.msra.mxu0 0.0
  %2303 = vmatprep.subr.mxu0 0.0
  %2304 = vmatpush1.msra.mxu0 0.0
  %2305 = vmatprep.subr.mxu0 0.0
  %2306 = vmatpush1.msra.mxu0 0.0
  %2307 = vmatprep.subr.mxu0 0.0
  %2308 = vmatpush1.msra.mxu0 0.0
  %2309 = vmatprep.mubr.f32.mxu0 0.0
  %2310 = vmatmul.mubr.f32.gmra.mrb[0].mxu0 %v2240
  %v2311 = vpop.f32.mrb[0].mxu0
  %v2312 = vadd.f32 0.0, %v2311
  %v2313 = vpop.f32.mrb[0].mxu0
  %2314 = vmatprep.mubr.f32.mxu0 0.0
  %2315 = vmatmul.mubr.f32.gmra.mrb[0].mxu0 %v2243
  %v2316 = vpop.f32.mrb[0].mxu0
  %v2317 = vadd.f32 0.0, %v2316
  %v2318 = vpop.f32.mrb[0].mxu0
  %2319 = vdwg.mxu0
  %v2320 = vld [vmem:[%s4] sm:$0xff]
  %v2321 = vld [vmem:[%s4 + $0x8] sm:$0xff]
  %v2322 = vld [vmem:[%s4 + $0x10] sm:$0xff]
  %v2323 = vld [vmem:[%s4 + $0x18] sm:$0xff]
  %v2324 = vld [vmem:[%s4 + $0x20] sm:$0xff]
  %v2325 = vld [vmem:[%s4 + $0x28] sm:$0xff]
  %v2326 = vld [vmem:[%s4 + $0x30] sm:$0xff]
  %v2327 = vld [vmem:[%s4 + $0x38] sm:$0xff]
  %v2328 = vld [vmem:[%s4 + $0x40] sm:$0x1]
  %2333 = vrot.lane.b32.xlu0 %v2312, 32
  %v2334 = vpop.permute.xlu0 %2333
  %2335 = vrot.lane.b32.xlu0 %v2317, 32
  %v2336 = vpop.permute.xlu0 %2335
  %v2339 = vsel %vm75, %v2077, %v2334
  %v2340 = vsel %vm75, %v2079, %v2336
  %v2341 = vlaneseq
  %v2342 = vshrl.u32 %v2341, 7
  %v2343 = vsub.s32 0, %v2342
  %v2344 = vrot.slane %v2328, %v2343
  %v2346 = vsel %vm65, %v2339, 0
  %v2349 = vsel %vm65, %v2340, 0
  %2351 = vmatprep.subr.mxu0 0.0
  %2352 = vmatpush1.msra.mxu0 %v2320
  %2353 = vmatprep.subr.mxu0 0.0
  %2354 = vmatpush1.msra.mxu0 %v2321
  %2355 = vmatprep.subr.mxu0 0.0
  %2356 = vmatpush1.msra.mxu0 %v2322
  %2357 = vmatprep.subr.mxu0 0.0
  %2358 = vmatpush1.msra.mxu0 %v2323
  %2359 = vmatprep.subr.mxu0 0.0
  %2360 = vmatpush1.msra.mxu0 %v2324
  %2361 = vmatprep.subr.mxu0 0.0
  %2362 = vmatpush1.msra.mxu0 %v2325
  %2363 = vmatprep.subr.mxu0 0.0
  %2364 = vmatpush1.msra.mxu0 %v2326
  %2365 = vmatprep.subr.mxu0 0.0
  %2366 = vmatpush1.msra.mxu0 %v2327
  %2367 = vmatprep.subr.mxu0 0.0
  %2368 = vmatpush1.msra.mxu0 0.0
  %2369 = vmatprep.subr.mxu0 0.0
  %2370 = vmatpush1.msra.mxu0 0.0
  %2371 = vmatprep.subr.mxu0 0.0
  %2372 = vmatpush1.msra.mxu0 0.0
  %2373 = vmatprep.subr.mxu0 0.0
  %2374 = vmatpush1.msra.mxu0 0.0
  %2375 = vmatprep.subr.mxu0 0.0
  %2376 = vmatpush1.msra.mxu0 0.0
  %2377 = vmatprep.subr.mxu0 0.0
  %2378 = vmatpush1.msra.mxu0 0.0
  %2379 = vmatprep.subr.mxu0 0.0
  %2380 = vmatpush1.msra.mxu0 0.0
  %2381 = vmatprep.subr.mxu0 0.0
  %2382 = vmatpush1.msra.mxu0 0.0
  %2383 = vmatprep.subr.mxu0 0.0
  %2384 = vmatpush1.msra.mxu0 0.0
  %2385 = vmatprep.subr.mxu0 0.0
  %2386 = vmatpush1.msra.mxu0 0.0
  %2387 = vmatprep.subr.mxu0 0.0
  %2388 = vmatpush1.msra.mxu0 0.0
  %2389 = vmatprep.subr.mxu0 0.0
  %2390 = vmatpush1.msra.mxu0 0.0
  %2391 = vmatprep.subr.mxu0 0.0
  %2392 = vmatpush1.msra.mxu0 0.0
  %2393 = vmatprep.subr.mxu0 0.0
  %2394 = vmatpush1.msra.mxu0 0.0
  %2395 = vmatprep.subr.mxu0 0.0
  %2396 = vmatpush1.msra.mxu0 0.0
  %2397 = vmatprep.subr.mxu0 0.0
  %2398 = vmatpush1.msra.mxu0 0.0
  %2399 = vmatprep.subr.mxu0 0.0
  %2400 = vmatpush1.msra.mxu0 0.0
  %2401 = vmatprep.subr.mxu0 0.0
  %2402 = vmatpush1.msra.mxu0 0.0
  %2403 = vmatprep.subr.mxu0 0.0
  %2404 = vmatpush1.msra.mxu0 0.0
  %2405 = vmatprep.subr.mxu0 0.0
  %2406 = vmatpush1.msra.mxu0 0.0
  %2407 = vmatprep.subr.mxu0 0.0
  %2408 = vmatpush1.msra.mxu0 0.0
  %2409 = vmatprep.subr.mxu0 0.0
  %2410 = vmatpush1.msra.mxu0 0.0
  %2411 = vmatprep.subr.mxu0 0.0
  %2412 = vmatpush1.msra.mxu0 0.0
  %2413 = vmatprep.subr.mxu0 0.0
  %2414 = vmatpush1.msra.mxu0 0.0
  %2415 = vmatprep.mubr.f32.mxu0 0.0
  %2416 = vmatmul.mubr.f32.gmra.mrb[0].mxu0 %v2346
  %v2417 = vpop.f32.mrb[0].mxu0
  %v2418 = vadd.f32 %v2344, %v2417
  %v2419 = vpop.f32.mrb[0].mxu0
  %2420 = vmatprep.mubr.f32.mxu0 0.0
  %2421 = vmatmul.mubr.f32.gmra.mrb[0].mxu0 %v2349
  %v2422 = vpop.f32.mrb[0].mxu0
  %v2423 = vadd.f32 %v2344, %v2422
  %v2424 = vpop.f32.mrb[0].mxu0
  %2425 = vdwg.mxu0
  %2426 = vmax.xlane.f32.xlu0 %v2418
  %v2427 = vpop.xlane.xlu0 %2426
  %2428 = vmax.xlane.f32.xlu0 %v2423
  %v2429 = vpop.xlane.xlu0 %2428
  %v2430 = vsub.f32 %v2418, %v2427
  %v2431 = vsub.f32 %v2423, %v2429
  %v2432 = vmul.f32 %v2430, 1.442695
  %v2433 = vpow.pop %v2432
  %v2434 = vmul.f32 %v2431, 1.442695
  %v2435 = vpow.pop %v2434
  %2436 = vadd.xlane.f32.xlu0 %v2433
  %v2437 = vpop.xlane.xlu0 %2436
  %2438 = vadd.xlane.f32.xlu0 %v2435
  %v2439 = vpop.xlane.xlu0 %2438
  %v2440 = vlog2.pop %v2437
  %v2441 = vmul.f32 %v2440, 0.6931472
  %v2442 = vlog2.pop %v2439
  %v2443 = vmul.f32 %v2442, 0.6931472
  %v2444 = vsub.f32 %v2430, %v2441
  %v2445 = vsub.f32 %v2431, %v2443
  %2446 = vst [vmem:[%s5] sm:$0xff] %v2444
  %2447 = vst [vmem:[%s5 + $0x8] sm:$0xff] %v2445
  // Predicated region
  $region22: #{seq2seq_gnn_forward.1} parent=0 // pred_check
    _
  $region23: #{seq2seq_gnn_forward.1} parent=0 // pred_check_branch
    %2449 = sbr.rel (0) target = $region25
  $region24: #{seq2seq_gnn_forward.1} parent=0 // pred_region
    _
  $region25: #{seq2seq_gnn_forward.1} parent=0 // pred_fallthru
    _
  // Predicated region
  $region26: #{seq2seq_gnn_forward.1} parent=0 // pred_check
    _
  $region27: #{seq2seq_gnn_forward.1} parent=0 // pred_check_branch
    %2451 = sbr.rel (0) target = $region29
  $region28: #{seq2seq_gnn_forward.1} parent=0 // pred_region
    _
  $region29: #{seq2seq_gnn_forward.1} parent=0 // pred_fallthru
    _

</llo_original>
